<compile_context>
chip_gen: v7x
topology: tpu7x:2x2x1
jax: 0.10.0
libtpu: 0.0.40
codegen_flags: <defaults>
</compile_context>

<pallas_src>
import functools
import math

import jax
import jax.numpy as jnp
from jax.experimental import pallas as pl
from jax.experimental.pallas import tpu as pltpu

LN_EPS = 1e-5  # torch.nn.LayerNorm default
NEG_INF = -1e30


def _round_up(x, m):
    return ((x + m - 1) // m) * m


def _vocab_pad_and_tile(vocab_size):
    """Pick the lm_head vocab tile and the padded vocab it divides."""
    tv = 4096 if vocab_size >= 4096 else _round_up(vocab_size, 128)
    return _round_up(vocab_size, tv), tv


def _vmem_limit_bytes():
    try:
        cap = int(pltpu.get_tpu_info().vmem_capacity_bytes)
        return min(int(cap * 0.8), 110 * 1024 * 1024)
    except Exception:
        return 48 * 1024 * 1024


def _layernorm(x, w, b):
    mu = jnp.mean(x, axis=-1, keepdims=True)
    var = jnp.mean(jnp.square(x - mu), axis=-1, keepdims=True)  # biased, as torch
    return (x - mu) * jax.lax.rsqrt(var + LN_EPS) * w + b


# ---------------------------------------------------------------------------
# Fused transformer block stack: grid = (n_layer,)
# ---------------------------------------------------------------------------
def gpt_blocks_kernel(x_ref, mask_ref, lnfw_ref, lnfb_ref, sp_ref, bfc_ref,
                      wq_ref, wk_ref, wv_ref, wo_ref, wfc_ref, wpr_ref,
                      out_ref, res_ref, *, n_head, batch):
    layer = pl.program_id(0)
    BT, C = res_ref.shape
    B = batch
    T = BT // B
    H = n_head
    hd = C // H

    @pl.when(layer == 0)
    def _():  # load embedding activations into the resident f32 residual
        res_ref[...] = x_ref[...].astype(jnp.float32)

    x = res_ref[...]                                    # (B*T, C) f32 residual

    # packed per-layer small params: ln1w, ln1b, ln2w, ln2b, bq, bk, bv, bo, bpr
    ln1w, ln1b = sp_ref[0:1, :], sp_ref[1:2, :]
    ln2w, ln2b = sp_ref[2:3, :], sp_ref[3:4, :]
    bq, bk = sp_ref[4:5, :], sp_ref[5:6, :]
    bv, bo, bpr = sp_ref[6:7, :], sp_ref[7:8, :], sp_ref[8:9, :]

    # ---- ln_1 + causal multi-head self-attention --------------------------
    xn = _layernorm(x, ln1w, ln1b).astype(jnp.bfloat16)
    scale = 1.0 / math.sqrt(hd)
    q = (jnp.dot(xn, wq_ref[...], preferred_element_type=jnp.float32) + bq) * scale
    k = jnp.dot(xn, wk_ref[...], preferred_element_type=jnp.float32) + bk
    v = jnp.dot(xn, wv_ref[...], preferred_element_type=jnp.float32) + bv

    mask = mask_ref[...]                                # (T, T) additive, 0 / -1e30

    # Per-sequence attention core (B is a small static constant).  Heads are
    # handled with head-leading batched contractions: one reshape + transpose
    # instead of 3*n_head lane slices and an n_head-way concat per layer.
    y_parts = []
    for b in range(B):
        r0 = b * T
        qh = jnp.transpose(q[r0:r0 + T, :].reshape(T, H, hd), (1, 0, 2)).astype(jnp.bfloat16)
        kh = jnp.transpose(k[r0:r0 + T, :].reshape(T, H, hd), (1, 0, 2)).astype(jnp.bfloat16)
        vh = jnp.transpose(v[r0:r0 + T, :].reshape(T, H, hd), (1, 0, 2)).astype(jnp.bfloat16)
        att = jnp.einsum("hqd,hkd->hqk", qh, kh, preferred_element_type=jnp.float32)
        att = att + mask[None, :, :]
        att = att - jnp.max(att, axis=-1, keepdims=True)
        p = jnp.exp(att)
        p = p * pl.reciprocal(jnp.sum(p, axis=-1, keepdims=True), approx=True)
        yh = jnp.einsum("hqk,hkd->hqd", p.astype(jnp.bfloat16), vh,
                        preferred_element_type=jnp.float32)       # (H, T, hd)
        y_parts.append(jnp.transpose(yh, (1, 0, 2)).reshape(T, C))
    y = y_parts[0] if B == 1 else jnp.concatenate(y_parts, axis=0)
    # TODO(synk): for long T, replace the materialized (H, T, T) scores with a
    # flash-style KV-tiled online softmax so the kernel fits v7x's 64 MiB VMEM.

    y = jnp.dot(y.astype(jnp.bfloat16), wo_ref[...],
                preferred_element_type=jnp.float32) + bo
    x = x + y

    # ---- ln_2 + MLP (exact erf GELU, matching nn.GELU() default) ----------
    xn2 = _layernorm(x, ln2w, ln2b).astype(jnp.bfloat16)
    h1 = jnp.dot(xn2, wfc_ref[...], preferred_element_type=jnp.float32) + bfc_ref[...]
    h1 = 0.5 * h1 * (1.0 + jax.lax.erf(h1 * (1.0 / math.sqrt(2.0))))
    # TODO(synk): at large T/C, tile the 4C axis (extra "arbitrary" grid axis) so
    # the (B*T, 4C) hidden and wfc/wpr need not be fully VMEM-resident at once.
    h2 = jnp.dot(h1.astype(jnp.bfloat16), wpr_ref[...],
                 preferred_element_type=jnp.float32) + bpr
    x = x + h2

    res_ref[...] = x

    @pl.when(layer == pl.num_programs(0) - 1)
    def _():
        # ln_f applied only to the last token of each sequence (B, C); this is
        # all the lm_head needs, so nothing else is written back to HBM.
        last = jnp.concatenate(
            [x[(b + 1) * T - 1:(b + 1) * T, :] for b in range(B)], axis=0)
        out_ref[...] = _layernorm(last, lnfw_ref[...], lnfb_ref[...])


def transformer_blocks_last_token(x, params, n_head):
    """All n_layer Blocks + ln_f on the last token, one pallas_call, grid=(L,)."""
    B, T, C = x.shape
    blocks = params["blocks"]
    L = blocks["wq"].shape[0]

    x2 = x.reshape(B * T, C)
    causal = jnp.tril(jnp.ones((T, T), dtype=jnp.bool_))
    mask = jnp.where(causal, 0.0, NEG_INF).astype(jnp.float32)

    const = lambda *_: (0, 0)
    per_layer = lambda shape: pl.BlockSpec((None,) + shape, lambda l: (l, 0, 0))

    return pl.pallas_call(
        functools.partial(gpt_blocks_kernel, n_head=n_head, batch=B),
        out_shape=jax.ShapeDtypeStruct((B, C), jnp.float32),
        grid=(L,),
        in_specs=[
            pl.BlockSpec((B * T, C), const),     # embedding activations
            pl.BlockSpec((T, T), const),         # additive causal mask
            pl.BlockSpec((1, C), const),         # ln_f weight
            pl.BlockSpec((1, C), const),         # ln_f bias
            per_layer((9, C)),                   # packed LN weights/biases + biases
            per_layer((1, 4 * C)),               # c_fc bias
            per_layer((C, C)),                   # wq
            per_layer((C, C)),                   # wk
            per_layer((C, C)),                   # wv
            per_layer((C, C)),                   # wo (attn c_proj)
            per_layer((C, 4 * C)),               # wfc
            per_layer((4 * C, C)),               # wpr (mlp c_proj)
        ],
        out_specs=pl.BlockSpec((B, C), const),
        scratch_shapes=[pltpu.VMEM((B * T, C), jnp.float32)],  # resident residual
        compiler_params=pltpu.CompilerParams(
            dimension_semantics=("arbitrary",),
            vmem_limit_bytes=_vmem_limit_bytes()),
    )(x2, mask, params["ln_f_w"], params["ln_f_b"],
      blocks["small"], blocks["bfc"],
      blocks["wq"], blocks["wk"], blocks["wv"], blocks["wo"],
      blocks["wfc"], blocks["wpr"])
    # TODO(synk): v7x megacore — add a core-parallel split (heads or the 4C MLP
    # axis) for B==1 prefill; the lm_head vocab grid below is already parallel.


# ---------------------------------------------------------------------------
# Tied lm_head on the (already ln_f-normalized) last-token activations.
# ---------------------------------------------------------------------------
def lm_head_kernel(xn_ref, wte_ref, out_ref):
    out_ref[...] = jnp.einsum("bc,vc->bv", xn_ref[...].astype(jnp.bfloat16),
                              wte_ref[...], preferred_element_type=jnp.float32)


def lm_head_last_token(x_last_norm, wte, vocab_size):
    B, C = x_last_norm.shape
    Vp = wte.shape[0]                       # padded at init to a multiple of tv
    tv = min(Vp, 4096)
    assert Vp % tv == 0
    logits = pl.pallas_call(
        lm_head_kernel,
        out_shape=jax.ShapeDtypeStruct((B, Vp), jnp.float32),
        grid=(Vp // tv,),
        in_specs=[pl.BlockSpec((B, C), lambda v: (0, 0)),
                  pl.BlockSpec((tv, C), lambda v: (v, 0))],   # untransposed wte
        out_specs=pl.BlockSpec((B, tv), lambda v: (0, v)),
        compiler_params=pltpu.CompilerParams(
            dimension_semantics=("parallel",),
            vmem_limit_bytes=_vmem_limit_bytes()),
    )(x_last_norm, wte)
    return logits[:, :vocab_size]


# ---------------------------------------------------------------------------
# Full forward (inference path of Transformer.forward).
# ---------------------------------------------------------------------------
def transformer_forward(idx, params, n_head):
    """Equivalent of Transformer.forward(idx, targets=None, padding_mask=None)."""
    wte, wpe = params["wte"], params["wpe"]
    B, T = idx.shape
    tok_emb = wte[idx]                                   # (B, T, C) gather (XLA glue)
    x = (tok_emb + wpe[None, :T, :]).astype(jnp.bfloat16)   # drop() identity in eval
    x_last_norm = transformer_blocks_last_token(x, params, n_head)   # (B, C) f32
    logits = lm_head_last_token(x_last_norm, wte, params["vocab_size"])
    logits = logits[:, None, :]                          # logits = lm_head(x[:, [-1], :])
    loss = None
    # TODO(synk): training branch (targets + cross-entropy with ignore_index=-1)
    # and the optional padding_mask are not exercised by this inference kernel.
    return logits, loss


def init_params(key, vocab_size, block_size, n_layer, n_head, n_embd):
    """Deterministic init mirroring Transformer._init_weights, stacked per layer."""
    C = n_embd
    std = 0.02
    proj_std = 0.02 / math.sqrt(2 * n_layer)             # c_proj.weight special init
    Vp, _ = _vocab_pad_and_tile(vocab_size)              # pad vocab for lm_head tiling
    keys = jax.random.split(key, 8)

    def nrm(k, shape, s):
        return (s * jax.random.normal(k, shape, dtype=jnp.float32)).astype(jnp.bfloat16)

    L = n_layer
    # packed small f32 params, rows: ln1w, ln1b, ln2w, ln2b, bq, bk, bv, bo, bpr
    small = jnp.zeros((L, 9, C), jnp.float32)
    small = small.at[:, 0, :].set(1.0).at[:, 2, :].set(1.0)

    return {
        "vocab_size": vocab_size,
        "wte": nrm(keys[0], (Vp, C), std),                # tied embedding / lm_head
        "wpe": nrm(keys[1], (block_size, C), std),
        "ln_f_w": jnp.ones((1, C), jnp.float32),
        "ln_f_b": jnp.zeros((1, C), jnp.float32),
        "blocks": {
            "small": small,
            "bfc": jnp.zeros((L, 1, 4 * C), jnp.float32),
            "wq": nrm(keys[2], (L, C, C), std),           # c_attn split into q/k/v
            "wk": nrm(keys[3], (L, C, C), std),
            "wv": nrm(keys[4], (L, C, C), std),
            "wo": nrm(keys[5], (L, C, C), proj_std),      # attn c_proj
            "wfc": nrm(keys[6], (L, C, 4 * C), std),      # mlp c_fc
            "wpr": nrm(keys[7], (L, 4 * C, C), proj_std), # mlp c_proj
        },
    }


if __name__ == "__main__":
    # Small ModelConfig-consistent shapes.
    vocab_size, block_size = 64, 16
    n_layer, n_head, n_embd = 2, 4, 32
    B, T = 2, 8

    key = jax.random.PRNGKey(0)
    pkey, ikey = jax.random.split(key)
    params = init_params(pkey, vocab_size, block_size, n_layer, n_head, n_embd)
    idx = jax.random.randint(ikey, (B, T), 0, vocab_size, dtype=jnp.int32)

    logits, loss = transformer_forward(idx, params, n_head)
    jax.block_until_ready(logits)
    assert logits.shape == (B, 1, vocab_size) and loss is None
    assert bool(jnp.all(jnp.isfinite(logits)))
    print("KERNEL_OK")
</pallas_src>

<mosaic_0001>
module attributes {stable_mosaic.version = 11 : i64} {
  func.func @gpt_blocks_kernel(%arg0: i32, %arg1: memref<16x32xbf16, #tpu.memory_space<vmem>>, %arg2: memref<8x8xf32, #tpu.memory_space<vmem>>, %arg3: memref<1x32xf32, #tpu.memory_space<vmem>>, %arg4: memref<1x32xf32, #tpu.memory_space<vmem>>, %arg5: memref<1x9x32xf32, #tpu.memory_space<vmem>>, %arg6: memref<1x1x128xf32, #tpu.memory_space<vmem>>, %arg7: memref<1x32x32xbf16, #tpu.memory_space<vmem>>, %arg8: memref<1x32x32xbf16, #tpu.memory_space<vmem>>, %arg9: memref<1x32x32xbf16, #tpu.memory_space<vmem>>, %arg10: memref<1x32x32xbf16, #tpu.memory_space<vmem>>, %arg11: memref<1x32x128xbf16, #tpu.memory_space<vmem>>, %arg12: memref<1x128x32xbf16, #tpu.memory_space<vmem>>, %arg13: memref<2x32xf32, #tpu.memory_space<vmem>>, %arg14: memref<16x32xf32, #tpu.memory_space<vmem>>) attributes {dimension_semantics = [#tpu.dimension_semantics<arbitrary>], iteration_bounds = array<i64: 2>, scalar_prefetch = 0 : i64, scratch_operands = 1 : i64, tpu.core_type = #tpu.core_type<tc>, window_params = [{pipeline_mode = #tpu.pipeline_mode<synchronous>, transform_indices = @transform_0, window_bounds = array<i64: 16, 32>}, {pipeline_mode = #tpu.pipeline_mode<synchronous>, transform_indices = @transform_1, window_bounds = array<i64: 8, 8>}, {pipeline_mode = #tpu.pipeline_mode<synchronous>, transform_indices = @transform_2, window_bounds = array<i64: 1, 32>}, {pipeline_mode = #tpu.pipeline_mode<synchronous>, transform_indices = @transform_3, window_bounds = array<i64: 1, 32>}, {transform_indices = @transform_4, window_bounds = array<i64: 1, 9, 32>}, {transform_indices = @transform_5, window_bounds = array<i64: 1, 1, 128>}, {transform_indices = @transform_6, window_bounds = array<i64: 1, 32, 32>}, {transform_indices = @transform_7, window_bounds = array<i64: 1, 32, 32>}, {transform_indices = @transform_8, window_bounds = array<i64: 1, 32, 32>}, {transform_indices = @transform_9, window_bounds = array<i64: 1, 32, 32>}, {transform_indices = @transform_10, window_bounds = array<i64: 1, 32, 128>}, {transform_indices = @transform_11, window_bounds = array<i64: 1, 128, 32>}, {pipeline_mode = #tpu.pipeline_mode<synchronous>, transform_indices = @transform_12, window_bounds = array<i64: 2, 32>}]} {
    %c0_i32 = arith.constant 0 : i32
    %0 = arith.cmpi eq, %arg0, %c0_i32 : i32
    %1 = arith.extui %0 : i1 to i32
    %c0_i32_0 = arith.constant 0 : i32
    %2 = arith.cmpi ne, %1, %c0_i32_0 : i32
    scf.if %2 {
      %c0_74 = arith.constant 0 : index
      %c0_75 = arith.constant 0 : index
      %180 = vector.load %arg1[%c0_74, %c0_75] : memref<16x32xbf16, #tpu.memory_space<vmem>>, vector<16x32xbf16>
      %181 = arith.extf %180 : vector<16x32xbf16> to vector<16x32xf32>
      %c0_76 = arith.constant 0 : index
      %c0_77 = arith.constant 0 : index
      %182 = vector.load %arg14[%c0_76, %c0_77] : memref<16x32xf32, #tpu.memory_space<vmem>>, vector<16x32xf32>
      tpu.vector_store %arg14[%c0_76, %c0_77], %181 {strides = array<i32>} : memref<16x32xf32, #tpu.memory_space<vmem>>, vector<16x32xf32>,
    } else {
    }
    %c0 = arith.constant 0 : index
    %c0_1 = arith.constant 0 : index
    %3 = vector.load %arg14[%c0, %c0_1] : memref<16x32xf32, #tpu.memory_space<vmem>>, vector<16x32xf32>
    %c0_2 = arith.constant 0 : index
    %c0_3 = arith.constant 0 : index
    %c0_4 = arith.constant 0 : index
    %4 = vector.load %arg5[%c0_2, %c0_3, %c0_4] : memref<1x9x32xf32, #tpu.memory_space<vmem>>, vector<1x1x32xf32>
    %5 = vector.shape_cast %4 : vector<1x1x32xf32> to vector<1x32xf32>
    %c0_5 = arith.constant 0 : index
    %c1 = arith.constant 1 : index
    %c0_6 = arith.constant 0 : index
    %6 = vector.load %arg5[%c0_5, %c1, %c0_6] : memref<1x9x32xf32, #tpu.memory_space<vmem>>, vector<1x1x32xf32>
    %7 = vector.shape_cast %6 : vector<1x1x32xf32> to vector<1x32xf32>
    %c0_7 = arith.constant 0 : index
    %c2 = arith.constant 2 : index
    %c0_8 = arith.constant 0 : index
    %8 = vector.load %arg5[%c0_7, %c2, %c0_8] : memref<1x9x32xf32, #tpu.memory_space<vmem>>, vector<1x1x32xf32>
    %9 = vector.shape_cast %8 : vector<1x1x32xf32> to vector<1x32xf32>
    %c0_9 = arith.constant 0 : index
    %c3 = arith.constant 3 : index
    %c0_10 = arith.constant 0 : index
    %10 = vector.load %arg5[%c0_9, %c3, %c0_10] : memref<1x9x32xf32, #tpu.memory_space<vmem>>, vector<1x1x32xf32>
    %11 = vector.shape_cast %10 : vector<1x1x32xf32> to vector<1x32xf32>
    %c0_11 = arith.constant 0 : index
    %c4 = arith.constant 4 : index
    %c0_12 = arith.constant 0 : index
    %12 = vector.load %arg5[%c0_11, %c4, %c0_12] : memref<1x9x32xf32, #tpu.memory_space<vmem>>, vector<1x1x32xf32>
    %13 = vector.shape_cast %12 : vector<1x1x32xf32> to vector<1x32xf32>
    %c0_13 = arith.constant 0 : index
    %c5 = arith.constant 5 : index
    %c0_14 = arith.constant 0 : index
    %14 = vector.load %arg5[%c0_13, %c5, %c0_14] : memref<1x9x32xf32, #tpu.memory_space<vmem>>, vector<1x1x32xf32>
    %15 = vector.shape_cast %14 : vector<1x1x32xf32> to vector<1x32xf32>
    %c0_15 = arith.constant 0 : index
    %c6 = arith.constant 6 : index
    %c0_16 = arith.constant 0 : index
    %16 = vector.load %arg5[%c0_15, %c6, %c0_16] : memref<1x9x32xf32, #tpu.memory_space<vmem>>, vector<1x1x32xf32>
    %17 = vector.shape_cast %16 : vector<1x1x32xf32> to vector<1x32xf32>
    %c0_17 = arith.constant 0 : index
    %c7 = arith.constant 7 : index
    %c0_18 = arith.constant 0 : index
    %18 = vector.load %arg5[%c0_17, %c7, %c0_18] : memref<1x9x32xf32, #tpu.memory_space<vmem>>, vector<1x1x32xf32>
    %19 = vector.shape_cast %18 : vector<1x1x32xf32> to vector<1x32xf32>
    %c0_19 = arith.constant 0 : index
    %c8 = arith.constant 8 : index
    %c0_20 = arith.constant 0 : index
    %20 = vector.load %arg5[%c0_19, %c8, %c0_20] : memref<1x9x32xf32, #tpu.memory_space<vmem>>, vector<1x1x32xf32>
    %21 = vector.shape_cast %20 : vector<1x1x32xf32> to vector<1x32xf32>
    %cst = arith.constant dense<0.000000e+00> : vector<16xf32>
    %22 = vector.multi_reduction <add>, %3, %cst [1] : vector<16x32xf32> to vector<16xf32>
    %23 = vector.shape_cast %22 : vector<16xf32> to vector<16x1xf32>
    %cst_21 = arith.constant 3.200000e+01 : f32
    %24 = vector.broadcast %cst_21 : f32 to vector<16x1xf32>
    %25 = arith.divf %23, %24 : vector<16x1xf32>
    %26 = vector.broadcast %25 : vector<16x1xf32> to vector<16x32xf32>
    %27 = arith.subf %3, %26 : vector<16x32xf32>
    %28 = arith.mulf %27, %27 : vector<16x32xf32>
    %cst_22 = arith.constant dense<0.000000e+00> : vector<16xf32>
    %29 = vector.multi_reduction <add>, %28, %cst_22 [1] : vector<16x32xf32> to vector<16xf32>
    %30 = vector.shape_cast %29 : vector<16xf32> to vector<16x1xf32>
    %cst_23 = arith.constant 3.200000e+01 : f32
    %31 = vector.broadcast %cst_23 : f32 to vector<16x1xf32>
    %32 = arith.divf %30, %31 : vector<16x1xf32>
    %33 = vector.broadcast %25 : vector<16x1xf32> to vector<16x32xf32>
    %34 = arith.subf %3, %33 : vector<16x32xf32>
    %cst_24 = arith.constant 9.99999974E-6 : f32
    %35 = vector.broadcast %cst_24 : f32 to vector<16x1xf32>
    %36 = arith.addf %32, %35 : vector<16x1xf32>
    %37 = math.rsqrt %36 : vector<16x1xf32>
    %38 = vector.broadcast %37 : vector<16x1xf32> to vector<16x32xf32>
    %39 = arith.mulf %34, %38 : vector<16x32xf32>
    %40 = vector.broadcast %5 : vector<1x32xf32> to vector<16x32xf32>
    %41 = arith.mulf %39, %40 : vector<16x32xf32>
    %42 = vector.broadcast %7 : vector<1x32xf32> to vector<16x32xf32>
    %43 = arith.addf %41, %42 : vector<16x32xf32>
    %44 = arith.truncf %43 : vector<16x32xf32> to vector<16x32xbf16>
    %c0_25 = arith.constant 0 : index
    %c0_26 = arith.constant 0 : index
    %c0_27 = arith.constant 0 : index
    %45 = vector.load %arg7[%c0_25, %c0_26, %c0_27] : memref<1x32x32xbf16, #tpu.memory_space<vmem>>, vector<1x32x32xbf16>
    %46 = vector.shape_cast %45 : vector<1x32x32xbf16> to vector<32x32xbf16>
    %cst_28 = arith.constant dense<0.000000e+00> : vector<16x32xf32>
    %47 = tpu.matmul %44, %46, %cst_28 {dimension_numbers = #tpu.dot_dimension_numbers<[1], [0], [0], [1], [0, 0, 1, 1], [], []>} : vector<16x32xbf16>, vector<32x32xbf16>, vector<16x32xf32> -> vector<16x32xf32>
    %48 = vector.broadcast %13 : vector<1x32xf32> to vector<16x32xf32>
    %49 = arith.addf %47, %48 : vector<16x32xf32>
    %cst_29 = arith.constant 0.353553385 : f32
    %50 = vector.broadcast %cst_29 : f32 to vector<16x32xf32>
    %51 = arith.mulf %49, %50 : vector<16x32xf32>
    %c0_30 = arith.constant 0 : index
    %c0_31 = arith.constant 0 : index
    %c0_32 = arith.constant 0 : index
    %52 = vector.load %arg8[%c0_30, %c0_31, %c0_32] : memref<1x32x32xbf16, #tpu.memory_space<vmem>>, vector<1x32x32xbf16>
    %53 = vector.shape_cast %52 : vector<1x32x32xbf16> to vector<32x32xbf16>
    %cst_33 = arith.constant dense<0.000000e+00> : vector<16x32xf32>
    %54 = tpu.matmul %44, %53, %cst_33 {dimension_numbers = #tpu.dot_dimension_numbers<[1], [0], [0], [1], [0, 0, 1, 1], [], []>} : vector<16x32xbf16>, vector<32x32xbf16>, vector<16x32xf32> -> vector<16x32xf32>
    %55 = vector.broadcast %15 : vector<1x32xf32> to vector<16x32xf32>
    %56 = arith.addf %54, %55 : vector<16x32xf32>
    %c0_34 = arith.constant 0 : index
    %c0_35 = arith.constant 0 : index
    %c0_36 = arith.constant 0 : index
    %57 = vector.load %arg9[%c0_34, %c0_35, %c0_36] : memref<1x32x32xbf16, #tpu.memory_space<vmem>>, vector<1x32x32xbf16>
    %58 = vector.shape_cast %57 : vector<1x32x32xbf16> to vector<32x32xbf16>
    %cst_37 = arith.constant dense<0.000000e+00> : vector<16x32xf32>
    %59 = tpu.matmul %44, %58, %cst_37 {dimension_numbers = #tpu.dot_dimension_numbers<[1], [0], [0], [1], [0, 0, 1, 1], [], []>} : vector<16x32xbf16>, vector<32x32xbf16>, vector<16x32xf32> -> vector<16x32xf32>
    %60 = vector.broadcast %17 : vector<1x32xf32> to vector<16x32xf32>
    %61 = arith.addf %59, %60 : vector<16x32xf32>
    %c0_38 = arith.constant 0 : index
    %c0_39 = arith.constant 0 : index
    %62 = vector.load %arg2[%c0_38, %c0_39] : memref<8x8xf32, #tpu.memory_space<vmem>>, vector<8x8xf32>
    %63 = vector.extract_strided_slice %51 {offsets = [0, 0], sizes = [8, 32], strides = [1, 1]} : vector<16x32xf32> to vector<8x32xf32>
    %64 = vector.shape_cast %63 : vector<8x32xf32> to vector<8x4x8xf32>
    %65 = tpu.transpose %64, [1, 0, 2] : vector<8x4x8xf32> -> vector<4x8x8xf32>
    %66 = arith.truncf %65 : vector<4x8x8xf32> to vector<4x8x8xbf16>
    %67 = vector.extract_strided_slice %56 {offsets = [0, 0], sizes = [8, 32], strides = [1, 1]} : vector<16x32xf32> to vector<8x32xf32>
    %68 = vector.shape_cast %67 : vector<8x32xf32> to vector<8x4x8xf32>
    %69 = tpu.transpose %68, [1, 0, 2] : vector<8x4x8xf32> -> vector<4x8x8xf32>
    %70 = arith.truncf %69 : vector<4x8x8xf32> to vector<4x8x8xbf16>
    %71 = vector.extract_strided_slice %61 {offsets = [0, 0], sizes = [8, 32], strides = [1, 1]} : vector<16x32xf32> to vector<8x32xf32>
    %72 = vector.shape_cast %71 : vector<8x32xf32> to vector<8x4x8xf32>
    %73 = tpu.transpose %72, [1, 0, 2] : vector<8x4x8xf32> -> vector<4x8x8xf32>
    %74 = arith.truncf %73 : vector<4x8x8xf32> to vector<4x8x8xbf16>
    "tpu.trace_start"() <{level = 10 : i32, message = "hqd,hkd->hqk"}> : () -> ()
    %cst_40 = arith.constant dense<0.000000e+00> : vector<4x8x8xf32>
    %75 = tpu.matmul %66, %70, %cst_40 {dimension_numbers = #tpu.dot_dimension_numbers<[2], [2], [1], [1], [0, 0, 0, 1, 1, 1], [0], [0]>} : vector<4x8x8xbf16>, vector<4x8x8xbf16>, vector<4x8x8xf32> -> vector<4x8x8xf32>
    "tpu.trace_stop"() : () -> ()
    %76 = vector.shape_cast %62 : vector<8x8xf32> to vector<1x8x8xf32>
    %77 = vector.broadcast %76 : vector<1x8x8xf32> to vector<4x8x8xf32>
    %78 = arith.addf %75, %77 : vector<4x8x8xf32>
    %cst_41 = arith.constant dense<0xFF800000> : vector<4x8xf32>
    %79 = vector.multi_reduction <maximumf>, %78, %cst_41 [2] : vector<4x8x8xf32> to vector<4x8xf32>
    %80 = vector.shape_cast %79 : vector<4x8xf32> to vector<4x8x1xf32>
    %81 = vector.broadcast %80 : vector<4x8x1xf32> to vector<4x8x8xf32>
    %82 = arith.subf %78, %81 : vector<4x8x8xf32>
    %83 = math.exp %82 : vector<4x8x8xf32>
    %cst_42 = arith.constant dense<0.000000e+00> : vector<4x8xf32>
    %84 = vector.multi_reduction <add>, %83, %cst_42 [2] : vector<4x8x8xf32> to vector<4x8xf32>
    %85 = vector.shape_cast %84 : vector<4x8xf32> to vector<4x8x1xf32>
    %86 = tpu.reciprocal %85 {approx = true} : vector<4x8x1xf32> -> vector<4x8x1xf32>
    %87 = vector.broadcast %86 : vector<4x8x1xf32> to vector<4x8x8xf32>
    %88 = arith.mulf %83, %87 : vector<4x8x8xf32>
    %89 = arith.truncf %88 : vector<4x8x8xf32> to vector<4x8x8xbf16>
    "tpu.trace_start"() <{level = 10 : i32, message = "hqk,hkd->hqd"}> : () -> ()
    %cst_43 = arith.constant dense<0.000000e+00> : vector<4x8x8xf32>
    %90 = tpu.matmul %89, %74, %cst_43 {dimension_numbers = #tpu.dot_dimension_numbers<[2], [1], [1], [2], [0, 0, 0, 1, 1, 2], [0], [0]>} : vector<4x8x8xbf16>, vector<4x8x8xbf16>, vector<4x8x8xf32> -> vector<4x8x8xf32>
    "tpu.trace_stop"() : () -> ()
    %91 = tpu.transpose %90, [1, 0, 2] : vector<4x8x8xf32> -> vector<8x4x8xf32>
    %92 = vector.shape_cast %91 : vector<8x4x8xf32> to vector<8x32xf32>
    %93 = vector.extract_strided_slice %51 {offsets = [8, 0], sizes = [8, 32], strides = [1, 1]} : vector<16x32xf32> to vector<8x32xf32>
    %94 = vector.shape_cast %93 : vector<8x32xf32> to vector<8x4x8xf32>
    %95 = tpu.transpose %94, [1, 0, 2] : vector<8x4x8xf32> -> vector<4x8x8xf32>
    %96 = arith.truncf %95 : vector<4x8x8xf32> to vector<4x8x8xbf16>
    %97 = vector.extract_strided_slice %56 {offsets = [8, 0], sizes = [8, 32], strides = [1, 1]} : vector<16x32xf32> to vector<8x32xf32>
    %98 = vector.shape_cast %97 : vector<8x32xf32> to vector<8x4x8xf32>
    %99 = tpu.transpose %98, [1, 0, 2] : vector<8x4x8xf32> -> vector<4x8x8xf32>
    %100 = arith.truncf %99 : vector<4x8x8xf32> to vector<4x8x8xbf16>
    %101 = vector.extract_strided_slice %61 {offsets = [8, 0], sizes = [8, 32], strides = [1, 1]} : vector<16x32xf32> to vector<8x32xf32>
    %102 = vector.shape_cast %101 : vector<8x32xf32> to vector<8x4x8xf32>
    %103 = tpu.transpose %102, [1, 0, 2] : vector<8x4x8xf32> -> vector<4x8x8xf32>
    %104 = arith.truncf %103 : vector<4x8x8xf32> to vector<4x8x8xbf16>
    "tpu.trace_start"() <{level = 10 : i32, message = "hqd,hkd->hqk"}> : () -> ()
    %cst_44 = arith.constant dense<0.000000e+00> : vector<4x8x8xf32>
    %105 = tpu.matmul %96, %100, %cst_44 {dimension_numbers = #tpu.dot_dimension_numbers<[2], [2], [1], [1], [0, 0, 0, 1, 1, 1], [0], [0]>} : vector<4x8x8xbf16>, vector<4x8x8xbf16>, vector<4x8x8xf32> -> vector<4x8x8xf32>
    "tpu.trace_stop"() : () -> ()
    %106 = vector.shape_cast %62 : vector<8x8xf32> to vector<1x8x8xf32>
    %107 = vector.broadcast %106 : vector<1x8x8xf32> to vector<4x8x8xf32>
    %108 = arith.addf %105, %107 : vector<4x8x8xf32>
    %cst_45 = arith.constant dense<0xFF800000> : vector<4x8xf32>
    %109 = vector.multi_reduction <maximumf>, %108, %cst_45 [2] : vector<4x8x8xf32> to vector<4x8xf32>
    %110 = vector.shape_cast %109 : vector<4x8xf32> to vector<4x8x1xf32>
    %111 = vector.broadcast %110 : vector<4x8x1xf32> to vector<4x8x8xf32>
    %112 = arith.subf %108, %111 : vector<4x8x8xf32>
    %113 = math.exp %112 : vector<4x8x8xf32>
    %cst_46 = arith.constant dense<0.000000e+00> : vector<4x8xf32>
    %114 = vector.multi_reduction <add>, %113, %cst_46 [2] : vector<4x8x8xf32> to vector<4x8xf32>
    %115 = vector.shape_cast %114 : vector<4x8xf32> to vector<4x8x1xf32>
    %116 = tpu.reciprocal %115 {approx = true} : vector<4x8x1xf32> -> vector<4x8x1xf32>
    %117 = vector.broadcast %116 : vector<4x8x1xf32> to vector<4x8x8xf32>
    %118 = arith.mulf %113, %117 : vector<4x8x8xf32>
    %119 = arith.truncf %118 : vector<4x8x8xf32> to vector<4x8x8xbf16>
    "tpu.trace_start"() <{level = 10 : i32, message = "hqk,hkd->hqd"}> : () -> ()
    %cst_47 = arith.constant dense<0.000000e+00> : vector<4x8x8xf32>
    %120 = tpu.matmul %119, %104, %cst_47 {dimension_numbers = #tpu.dot_dimension_numbers<[2], [1], [1], [2], [0, 0, 0, 1, 1, 2], [0], [0]>} : vector<4x8x8xbf16>, vector<4x8x8xbf16>, vector<4x8x8xf32> -> vector<4x8x8xf32>
    "tpu.trace_stop"() : () -> ()
    %121 = tpu.transpose %120, [1, 0, 2] : vector<4x8x8xf32> -> vector<8x4x8xf32>
    %122 = vector.shape_cast %121 : vector<8x4x8xf32> to vector<8x32xf32>
    %123 = tpu.concatenate %92, %122 in 0 : vector<8x32xf32>, vector<8x32xf32> -> vector<16x32xf32>
    %124 = arith.truncf %123 : vector<16x32xf32> to vector<16x32xbf16>
    %c0_48 = arith.constant 0 : index
    %c0_49 = arith.constant 0 : index
    %c0_50 = arith.constant 0 : index
    %125 = vector.load %arg10[%c0_48, %c0_49, %c0_50] : memref<1x32x32xbf16, #tpu.memory_space<vmem>>, vector<1x32x32xbf16>
    %126 = vector.shape_cast %125 : vector<1x32x32xbf16> to vector<32x32xbf16>
    %cst_51 = arith.constant dense<0.000000e+00> : vector<16x32xf32>
    %127 = tpu.matmul %124, %126, %cst_51 {dimension_numbers = #tpu.dot_dimension_numbers<[1], [0], [0], [1], [0, 0, 1, 1], [], []>} : vector<16x32xbf16>, vector<32x32xbf16>, vector<16x32xf32> -> vector<16x32xf32>
    %128 = vector.broadcast %19 : vector<1x32xf32> to vector<16x32xf32>
    %129 = arith.addf %127, %128 : vector<16x32xf32>
    %130 = arith.addf %3, %129 : vector<16x32xf32>
    %cst_52 = arith.constant dense<0.000000e+00> : vector<16xf32>
    %131 = vector.multi_reduction <add>, %130, %cst_52 [1] : vector<16x32xf32> to vector<16xf32>
    %132 = vector.shape_cast %131 : vector<16xf32> to vector<16x1xf32>
    %cst_53 = arith.constant 3.200000e+01 : f32
    %133 = vector.broadcast %cst_53 : f32 to vector<16x1xf32>
    %134 = arith.divf %132, %133 : vector<16x1xf32>
    %135 = vector.broadcast %134 : vector<16x1xf32> to vector<16x32xf32>
    %136 = arith.subf %130, %135 : vector<16x32xf32>
    %137 = arith.mulf %136, %136 : vector<16x32xf32>
    %cst_54 = arith.constant dense<0.000000e+00> : vector<16xf32>
    %138 = vector.multi_reduction <add>, %137, %cst_54 [1] : vector<16x32xf32> to vector<16xf32>
    %139 = vector.shape_cast %138 : vector<16xf32> to vector<16x1xf32>
    %cst_55 = arith.constant 3.200000e+01 : f32
    %140 = vector.broadcast %cst_55 : f32 to vector<16x1xf32>
    %141 = arith.divf %139, %140 : vector<16x1xf32>
    %142 = vector.broadcast %134 : vector<16x1xf32> to vector<16x32xf32>
    %143 = arith.subf %130, %142 : vector<16x32xf32>
    %cst_56 = arith.constant 9.99999974E-6 : f32
    %144 = vector.broadcast %cst_56 : f32 to vector<16x1xf32>
    %145 = arith.addf %141, %144 : vector<16x1xf32>
    %146 = math.rsqrt %145 : vector<16x1xf32>
    %147 = vector.broadcast %146 : vector<16x1xf32> to vector<16x32xf32>
    %148 = arith.mulf %143, %147 : vector<16x32xf32>
    %149 = vector.broadcast %9 : vector<1x32xf32> to vector<16x32xf32>
    %150 = arith.mulf %148, %149 : vector<16x32xf32>
    %151 = vector.broadcast %11 : vector<1x32xf32> to vector<16x32xf32>
    %152 = arith.addf %150, %151 : vector<16x32xf32>
    %153 = arith.truncf %152 : vector<16x32xf32> to vector<16x32xbf16>
    %c0_57 = arith.constant 0 : index
    %c0_58 = arith.constant 0 : index
    %c0_59 = arith.constant 0 : index
    %154 = vector.load %arg11[%c0_57, %c0_58, %c0_59] : memref<1x32x128xbf16, #tpu.memory_space<vmem>>, vector<1x32x128xbf16>
    %155 = vector.shape_cast %154 : vector<1x32x128xbf16> to vector<32x128xbf16>
    %cst_60 = arith.constant dense<0.000000e+00> : vector<16x128xf32>
    %156 = tpu.matmul %153, %155, %cst_60 {dimension_numbers = #tpu.dot_dimension_numbers<[1], [0], [0], [1], [0, 0, 1, 1], [], []>} : vector<16x32xbf16>, vector<32x128xbf16>, vector<16x128xf32> -> vector<16x128xf32>
    %c0_61 = arith.constant 0 : index
    %c0_62 = arith.constant 0 : index
    %c0_63 = arith.constant 0 : index
    %157 = vector.load %arg6[%c0_61, %c0_62, %c0_63] : memref<1x1x128xf32, #tpu.memory_space<vmem>>, vector<1x1x128xf32>
    %158 = vector.shape_cast %157 : vector<1x1x128xf32> to vector<1x128xf32>
    %159 = vector.broadcast %158 : vector<1x128xf32> to vector<16x128xf32>
    %160 = arith.addf %156, %159 : vector<16x128xf32>
    %cst_64 = arith.constant 5.000000e-01 : f32
    %161 = vector.broadcast %cst_64 : f32 to vector<16x128xf32>
    %162 = arith.mulf %161, %160 : vector<16x128xf32>
    %cst_65 = arith.constant 0.707106769 : f32
    %163 = vector.broadcast %cst_65 : f32 to vector<16x128xf32>
    %164 = arith.mulf %160, %163 : vector<16x128xf32>
    %165 = math.erf %164 : vector<16x128xf32>
    %cst_66 = arith.constant 1.000000e+00 : f32
    %166 = vector.broadcast %cst_66 : f32 to vector<16x128xf32>
    %167 = arith.addf %166, %165 : vector<16x128xf32>
    %168 = arith.mulf %162, %167 : vector<16x128xf32>
    %169 = arith.truncf %168 : vector<16x128xf32> to vector<16x128xbf16>
    %c0_67 = arith.constant 0 : index
    %c0_68 = arith.constant 0 : index
    %c0_69 = arith.constant 0 : index
    %170 = vector.load %arg12[%c0_67, %c0_68, %c0_69] : memref<1x128x32xbf16, #tpu.memory_space<vmem>>, vector<1x128x32xbf16>
    %171 = vector.shape_cast %170 : vector<1x128x32xbf16> to vector<128x32xbf16>
    %cst_70 = arith.constant dense<0.000000e+00> : vector<16x32xf32>
    %172 = tpu.matmul %169, %171, %cst_70 {dimension_numbers = #tpu.dot_dimension_numbers<[1], [0], [0], [1], [0, 0, 1, 1], [], []>} : vector<16x128xbf16>, vector<128x32xbf16>, vector<16x32xf32> -> vector<16x32xf32>
    %173 = vector.broadcast %21 : vector<1x32xf32> to vector<16x32xf32>
    %174 = arith.addf %172, %173 : vector<16x32xf32>
    %175 = arith.addf %130, %174 : vector<16x32xf32>
    %c0_71 = arith.constant 0 : index
    %c0_72 = arith.constant 0 : index
    %176 = vector.load %arg14[%c0_71, %c0_72] : memref<16x32xf32, #tpu.memory_space<vmem>>, vector<16x32xf32>
    tpu.vector_store %arg14[%c0_71, %c0_72], %175 {strides = array<i32>} : memref<16x32xf32, #tpu.memory_space<vmem>>, vector<16x32xf32>,
    %c1_i32 = arith.constant 1 : i32
    %177 = arith.cmpi eq, %arg0, %c1_i32 : i32
    %178 = arith.extui %177 : i1 to i32
    %c0_i32_73 = arith.constant 0 : i32
    %179 = arith.cmpi ne, %178, %c0_i32_73 : i32
    scf.if %179 {
      %180 = vector.extract_strided_slice %175 {offsets = [7, 0], sizes = [1, 32], strides = [1, 1]} : vector<16x32xf32> to vector<1x32xf32>
      %181 = vector.extract_strided_slice %175 {offsets = [15, 0], sizes = [1, 32], strides = [1, 1]} : vector<16x32xf32> to vector<1x32xf32>
      %182 = tpu.concatenate %180, %181 in 0 : vector<1x32xf32>, vector<1x32xf32> -> vector<2x32xf32>
      %c0_74 = arith.constant 0 : index
      %c0_75 = arith.constant 0 : index
      %183 = vector.load %arg3[%c0_74, %c0_75] : memref<1x32xf32, #tpu.memory_space<vmem>>, vector<1x32xf32>
      %c0_76 = arith.constant 0 : index
      %c0_77 = arith.constant 0 : index
      %184 = vector.load %arg4[%c0_76, %c0_77] : memref<1x32xf32, #tpu.memory_space<vmem>>, vector<1x32xf32>
      %cst_78 = arith.constant dense<0.000000e+00> : vector<2xf32>
      %185 = vector.multi_reduction <add>, %182, %cst_78 [1] : vector<2x32xf32> to vector<2xf32>
      %186 = vector.shape_cast %185 : vector<2xf32> to vector<2x1xf32>
      %cst_79 = arith.constant 3.200000e+01 : f32
      %187 = vector.broadcast %cst_79 : f32 to vector<2x1xf32>
      %188 = arith.divf %186, %187 : vector<2x1xf32>
      %189 = vector.broadcast %188 : vector<2x1xf32> to vector<2x32xf32>
      %190 = arith.subf %182, %189 : vector<2x32xf32>
      %191 = arith.mulf %190, %190 : vector<2x32xf32>
      %cst_80 = arith.constant dense<0.000000e+00> : vector<2xf32>
      %192 = vector.multi_reduction <add>, %191, %cst_80 [1] : vector<2x32xf32> to vector<2xf32>
      %193 = vector.shape_cast %192 : vector<2xf32> to vector<2x1xf32>
      %cst_81 = arith.constant 3.200000e+01 : f32
      %194 = vector.broadcast %cst_81 : f32 to vector<2x1xf32>
      %195 = arith.divf %193, %194 : vector<2x1xf32>
      %196 = vector.broadcast %188 : vector<2x1xf32> to vector<2x32xf32>
      %197 = arith.subf %182, %196 : vector<2x32xf32>
      %cst_82 = arith.constant 9.99999974E-6 : f32
      %198 = vector.broadcast %cst_82 : f32 to vector<2x1xf32>
      %199 = arith.addf %195, %198 : vector<2x1xf32>
      %200 = math.rsqrt %199 : vector<2x1xf32>
      %201 = vector.broadcast %200 : vector<2x1xf32> to vector<2x32xf32>
      %202 = arith.mulf %197, %201 : vector<2x32xf32>
      %203 = vector.broadcast %183 : vector<1x32xf32> to vector<2x32xf32>
      %204 = arith.mulf %202, %203 : vector<2x32xf32>
      %205 = vector.broadcast %184 : vector<1x32xf32> to vector<2x32xf32>
      %206 = arith.addf %204, %205 : vector<2x32xf32>
      %c0_83 = arith.constant 0 : index
      %c0_84 = arith.constant 0 : index
      %207 = vector.load %arg13[%c0_83, %c0_84] : memref<2x32xf32, #tpu.memory_space<vmem>>, vector<2x32xf32>
      tpu.vector_store %arg13[%c0_83, %c0_84], %206 {strides = array<i32>} : memref<2x32xf32, #tpu.memory_space<vmem>>, vector<2x32xf32>,
    } else {
    }
    return
  }
  func.func @transform_0(%arg0: i32) -> (i32, i32) {
    %c0_i32 = arith.constant 0 : i32
    %c0_i32_0 = arith.constant 0 : i32
    %c0_i32_1 = arith.constant 0 : i32
    return %c0_i32, %c0_i32_0 : i32, i32
  }
  func.func @transform_1(%arg0: i32) -> (i32, i32) {
    %c0_i32 = arith.constant 0 : i32
    %c0_i32_0 = arith.constant 0 : i32
    %c0_i32_1 = arith.constant 0 : i32
    return %c0_i32, %c0_i32_0 : i32, i32
  }
  func.func @transform_2(%arg0: i32) -> (i32, i32) {
    %c0_i32 = arith.constant 0 : i32
    %c0_i32_0 = arith.constant 0 : i32
    %c0_i32_1 = arith.constant 0 : i32
    return %c0_i32, %c0_i32_0 : i32, i32
  }
  func.func @transform_3(%arg0: i32) -> (i32, i32) {
    %c0_i32 = arith.constant 0 : i32
    %c0_i32_0 = arith.constant 0 : i32
    %c0_i32_1 = arith.constant 0 : i32
    return %c0_i32, %c0_i32_0 : i32, i32
  }
  func.func @transform_4(%arg0: i32) -> (i32, i32, i32) {
    %c0_i32 = arith.constant 0 : i32
    %c0_i32_0 = arith.constant 0 : i32
    %c0_i32_1 = arith.constant 0 : i32
    return %arg0, %c0_i32, %c0_i32_0 : i32, i32, i32
  }
  func.func @transform_5(%arg0: i32) -> (i32, i32, i32) {
    %c0_i32 = arith.constant 0 : i32
    %c0_i32_0 = arith.constant 0 : i32
    %c0_i32_1 = arith.constant 0 : i32
    return %arg0, %c0_i32, %c0_i32_0 : i32, i32, i32
  }
  func.func @transform_6(%arg0: i32) -> (i32, i32, i32) {
    %c0_i32 = arith.constant 0 : i32
    %c0_i32_0 = arith.constant 0 : i32
    %c0_i32_1 = arith.constant 0 : i32
    return %arg0, %c0_i32, %c0_i32_0 : i32, i32, i32
  }
  func.func @transform_7(%arg0: i32) -> (i32, i32, i32) {
    %c0_i32 = arith.constant 0 : i32
    %c0_i32_0 = arith.constant 0 : i32
    %c0_i32_1 = arith.constant 0 : i32
    return %arg0, %c0_i32, %c0_i32_0 : i32, i32, i32
  }
  func.func @transform_8(%arg0: i32) -> (i32, i32, i32) {
    %c0_i32 = arith.constant 0 : i32
    %c0_i32_0 = arith.constant 0 : i32
    %c0_i32_1 = arith.constant 0 : i32
    return %arg0, %c0_i32, %c0_i32_0 : i32, i32, i32
  }
  func.func @transform_9(%arg0: i32) -> (i32, i32, i32) {
    %c0_i32 = arith.constant 0 : i32
    %c0_i32_0 = arith.constant 0 : i32
    %c0_i32_1 = arith.constant 0 : i32
    return %arg0, %c0_i32, %c0_i32_0 : i32, i32, i32
  }
  func.func @transform_10(%arg0: i32) -> (i32, i32, i32) {
    %c0_i32 = arith.constant 0 : i32
    %c0_i32_0 = arith.constant 0 : i32
    %c0_i32_1 = arith.constant 0 : i32
    return %arg0, %c0_i32, %c0_i32_0 : i32, i32, i32
  }
  func.func @transform_11(%arg0: i32) -> (i32, i32, i32) {
    %c0_i32 = arith.constant 0 : i32
    %c0_i32_0 = arith.constant 0 : i32
    %c0_i32_1 = arith.constant 0 : i32
    return %arg0, %c0_i32, %c0_i32_0 : i32, i32, i32
  }
  func.func @transform_12(%arg0: i32) -> (i32, i32) {
    %c0_i32 = arith.constant 0 : i32
    %c0_i32_0 = arith.constant 0 : i32
    %c0_i32_1 = arith.constant 0 : i32
    return %c0_i32, %c0_i32_0 : i32, i32
  }
}

</mosaic_0001>

<llo_original>
// kernel: tpu_custom_call.1
$region0: #{tpu_custom_call.1}
  #allocation0 [shape = 'u32[]', space=smem, size = 0x4, offset = 0x4, fixed_abs, tag = 'smem constant byte address 0x4 - core index']
  #allocation1 [shape = 'u32[144,128]{1,0:T(1,128)}', space=vmem, size = 0x12000, scoped, tag = 'internal scratch']
  #allocation2 [shape = 'f32[16,32]{1,0:T(8,128)}', space=vmem, size = 0x2000, scoped, tag = 'scratch operand']
  %s0 = inlined_call_operand.vmem [shape: bf16[16,32], index: 0, kind: input, shape index: {}]
  %s1 = inlined_call_operand.vmem [shape: f32[8,8], index: 1, kind: input, shape index: {}]
  %s2 = inlined_call_operand.vmem [shape: f32[1,32], index: 2, kind: input, shape index: {}]
  %s3 = inlined_call_operand.vmem [shape: f32[1,32], index: 3, kind: input, shape index: {}]
  %s4 = inlined_call_operand.vmem [shape: f32[2,9,32], index: 4, kind: input, shape index: {}]
  %s5 = inlined_call_operand.vmem [shape: f32[2,1,128], index: 5, kind: input, shape index: {}]
  %s6 = inlined_call_operand.vmem [shape: bf16[2,32,32], index: 6, kind: input, shape index: {}]
  %s7 = inlined_call_operand.vmem [shape: bf16[2,32,32], index: 7, kind: input, shape index: {}]
  %s8 = inlined_call_operand.vmem [shape: bf16[2,32,32], index: 8, kind: input, shape index: {}]
  %s9 = inlined_call_operand.vmem [shape: bf16[2,32,32], index: 9, kind: input, shape index: {}]
  %s10 = inlined_call_operand.vmem [shape: bf16[2,32,128], index: 10, kind: input, shape index: {}]
  %s11 = inlined_call_operand.vmem [shape: bf16[2,128,32], index: 11, kind: input, shape index: {}]
  %s12 = inlined_call_operand.hbm [shape: f32[2,32], index: 12, kind: output, shape index: {}]
  %s13 = sld [smem:[#allocation0]]
  $region89: #{tpu_custom_call.1} parent=0
    _
  %s15 = ssub.s32 1, %s13
  %s16 = scalar_select 0, %s15, %s13
  $region1: #{tpu_custom_call.1} parent=0
    #allocation3 [shape = 'u8[1024]{0}', space=vmem, size = 0x400, scoped, tag = 'output window, operand 0, single buffered']
    #allocation4 [shape = 's32[2]{0}', space=sflag, size = 0x8, scoped, tag = 'scoped memory for tpu_custom_call.1']
    %17 = vsyncpa [#allocation4], 0
    loop: start=0, step=1, limit=4
    $region2: #{tpu_custom_call.1} parent=1 // loop_pre_header
      _
    $region3: #{tpu_custom_call.1} parent=1 // loop_header
      %s19 = sphi 0, %s23
      %p20 = scmp.ge.s32.totalorder %s19, 4
      %s27 = sphi 0, %s27
      %s29 = sphi 0, %s27
      %s30 = sphi 0, %s29
      %s44 = sphi 0, %s30
      %s48 = sphi 0, %s48
      %s50 = sphi 0, %s48
      %s51 = sphi 0, %s50
      %s65 = sphi 0, %s51
      %s69 = sphi 0, %s69
      %s71 = sphi 0, %s69
      %s72 = sphi 0, %s71
      %s86 = sphi 0, %s72
      %s90 = sphi 0, %s90
      %s92 = sphi 0, %s90
      %s93 = sphi 0, %s92
      %s107 = sphi 0, %s93
      %s113 = sphi 0, %s115
      %s116 = sphi 0, %s113
      %s117 = sphi 0, %s116
      %s133 = sphi 0, %s117
      %s139 = sphi 0, %s141
      %s142 = sphi 0, %s139
      %s143 = sphi 0, %s142
      %s159 = sphi 0, %s143
      %s165 = sphi 0, %s167
      %s168 = sphi 0, %s165
      %s169 = sphi 0, %s168
      %s185 = sphi 0, %s169
      %s191 = sphi 0, %s193
      %s194 = sphi 0, %s191
      %s195 = sphi 0, %s194
      %s211 = sphi 0, %s195
      %s217 = sphi 0, %s219
      %s220 = sphi 0, %s217
      %s221 = sphi 0, %s220
      %s237 = sphi 0, %s221
      %s243 = sphi 0, %s245
      %s246 = sphi 0, %s243
      %s247 = sphi 0, %s246
      %s263 = sphi 0, %s247
      %s269 = sphi 0, %s271
      %s272 = sphi 0, %s269
      %s273 = sphi 0, %s272
      %s289 = sphi 0, %s273
      %s295 = sphi 0, %s297
      %s298 = sphi 0, %s295
      %s299 = sphi 0, %s298
      %s315 = sphi 0, %s299
      %s319 = sphi 0, %s319
      %s321 = sphi 0, %s319
      %s322 = sphi 0, %s321
      %s336 = sphi 0, %s322
    $region4: #{tpu_custom_call.1} parent=1 // loop_header_branch
      %22 = sbr.rel (%p20) target = $region8
    $region5: #{tpu_custom_call.1} parent=1 // loop_body
      %s24 = ssub.s32 %s19, 1
      %s25 = ssub.s32 %s19, 2
      %s26 = sadd.s32 %s19, 1
      %s28 = sadd.s32 %s27, 1
      %p31 = scmp.eq.s32.totalorder %s19, 1
      %p32 = scmp.ne.s32.totalorder %s27, %s29
      %p33 = scmp.eq.s32.totalorder %s19, 0
      %p34 = por %p32, %p33
      %p35 = scmp.ne.s32.totalorder %s27, %s29
      %p36 = scmp.eq.s32.totalorder %s24, 1
      %p37 = por %p35, %p36
      %p38 = scmp.ne.s32.totalorder %s29, %s30
      %p39 = scmp.eq.s32.totalorder %s24, 0
      %p40 = por %p38, %p39
      %p41 = scmp.ne.s32.totalorder %s29, %s30
      %p42 = scmp.eq.s32.totalorder %s25, 1
      %p43 = por %p41, %p42
      %p45 = scmp.ne.s32.totalorder %s30, %s44
      %p46 = scmp.eq.s32.totalorder %s25, 0
      %p47 = por %p45, %p46
      %s49 = sadd.s32 %s48, 1
      %p52 = scmp.eq.s32.totalorder %s19, 1
      %p53 = scmp.ne.s32.totalorder %s48, %s50
      %p54 = scmp.eq.s32.totalorder %s19, 0
      %p55 = por %p53, %p54
      %p56 = scmp.ne.s32.totalorder %s48, %s50
      %p57 = scmp.eq.s32.totalorder %s24, 1
      %p58 = por %p56, %p57
      %p59 = scmp.ne.s32.totalorder %s50, %s51
      %p60 = scmp.eq.s32.totalorder %s24, 0
      %p61 = por %p59, %p60
      %p62 = scmp.ne.s32.totalorder %s50, %s51
      %p63 = scmp.eq.s32.totalorder %s25, 1
      %p64 = por %p62, %p63
      %p66 = scmp.ne.s32.totalorder %s51, %s65
      %p67 = scmp.eq.s32.totalorder %s25, 0
      %p68 = por %p66, %p67
      %s70 = sadd.s32 %s69, 1
      %p73 = scmp.eq.s32.totalorder %s19, 1
      %p74 = scmp.ne.s32.totalorder %s69, %s71
      %p75 = scmp.eq.s32.totalorder %s19, 0
      %p76 = por %p74, %p75
      %p77 = scmp.ne.s32.totalorder %s69, %s71
      %p78 = scmp.eq.s32.totalorder %s24, 1
      %p79 = por %p77, %p78
      %p80 = scmp.ne.s32.totalorder %s71, %s72
      %p81 = scmp.eq.s32.totalorder %s24, 0
      %p82 = por %p80, %p81
      %p83 = scmp.ne.s32.totalorder %s71, %s72
      %p84 = scmp.eq.s32.totalorder %s25, 1
      %p85 = por %p83, %p84
      %p87 = scmp.ne.s32.totalorder %s72, %s86
      %p88 = scmp.eq.s32.totalorder %s25, 0
      %p89 = por %p87, %p88
      %s91 = sadd.s32 %s90, 1
      %p94 = scmp.eq.s32.totalorder %s19, 1
      %p95 = scmp.ne.s32.totalorder %s90, %s92
      %p96 = scmp.eq.s32.totalorder %s19, 0
      %p97 = por %p95, %p96
      %p98 = scmp.ne.s32.totalorder %s90, %s92
      %p99 = scmp.eq.s32.totalorder %s24, 1
      %p100 = por %p98, %p99
      %p101 = scmp.ne.s32.totalorder %s92, %s93
      %p102 = scmp.eq.s32.totalorder %s24, 0
      %p103 = por %p101, %p102
      %p104 = scmp.ne.s32.totalorder %s92, %s93
      %p105 = scmp.eq.s32.totalorder %s25, 1
      %p106 = por %p104, %p105
      %p108 = scmp.ne.s32.totalorder %s93, %s107
      %p109 = scmp.eq.s32.totalorder %s25, 0
      %p110 = por %p108, %p109
      %s111 = ssub.s32 %s19, %s26
      %p112 = scmp.eq.s32.totalorder %s111, 0
      %s114 = sadd.s32 %s113, 1
      %s115 = scalar_select %p112, %s113, %s114
      %p118 = pneg %p112
      %p119 = scmp.eq.s32.totalorder %s19, 1
      %p120 = por %p118, %p119
      %p121 = scmp.ne.s32.totalorder %s113, %s116
      %p122 = scmp.eq.s32.totalorder %s19, 0
      %p123 = por %p121, %p122
      %p124 = scmp.ne.s32.totalorder %s113, %s116
      %p125 = scmp.eq.s32.totalorder %s24, 1
      %p126 = por %p124, %p125
      %p127 = scmp.ne.s32.totalorder %s116, %s117
      %p128 = scmp.eq.s32.totalorder %s24, 0
      %p129 = por %p127, %p128
      %p130 = scmp.ne.s32.totalorder %s116, %s117
      %p131 = scmp.eq.s32.totalorder %s25, 1
      %p132 = por %p130, %p131
      %p134 = scmp.ne.s32.totalorder %s117, %s133
      %p135 = scmp.eq.s32.totalorder %s25, 0
      %p136 = por %p134, %p135
      %s137 = ssub.s32 %s19, %s26
      %p138 = scmp.eq.s32.totalorder %s137, 0
      %s140 = sadd.s32 %s139, 1
      %s141 = scalar_select %p138, %s139, %s140
      %p144 = pneg %p138
      %p145 = scmp.eq.s32.totalorder %s19, 1
      %p146 = por %p144, %p145
      %p147 = scmp.ne.s32.totalorder %s139, %s142
      %p148 = scmp.eq.s32.totalorder %s19, 0
      %p149 = por %p147, %p148
      %p150 = scmp.ne.s32.totalorder %s139, %s142
      %p151 = scmp.eq.s32.totalorder %s24, 1
      %p152 = por %p150, %p151
      %p153 = scmp.ne.s32.totalorder %s142, %s143
      %p154 = scmp.eq.s32.totalorder %s24, 0
      %p155 = por %p153, %p154
      %p156 = scmp.ne.s32.totalorder %s142, %s143
      %p157 = scmp.eq.s32.totalorder %s25, 1
      %p158 = por %p156, %p157
      %p160 = scmp.ne.s32.totalorder %s143, %s159
      %p161 = scmp.eq.s32.totalorder %s25, 0
      %p162 = por %p160, %p161
      %s163 = ssub.s32 %s19, %s26
      %p164 = scmp.eq.s32.totalorder %s163, 0
      %s166 = sadd.s32 %s165, 1
      %s167 = scalar_select %p164, %s165, %s166
      %p170 = pneg %p164
      %p171 = scmp.eq.s32.totalorder %s19, 1
      %p172 = por %p170, %p171
      %p173 = scmp.ne.s32.totalorder %s165, %s168
      %p174 = scmp.eq.s32.totalorder %s19, 0
      %p175 = por %p173, %p174
      %p176 = scmp.ne.s32.totalorder %s165, %s168
      %p177 = scmp.eq.s32.totalorder %s24, 1
      %p178 = por %p176, %p177
      %p179 = scmp.ne.s32.totalorder %s168, %s169
      %p180 = scmp.eq.s32.totalorder %s24, 0
      %p181 = por %p179, %p180
      %p182 = scmp.ne.s32.totalorder %s168, %s169
      %p183 = scmp.eq.s32.totalorder %s25, 1
      %p184 = por %p182, %p183
      %p186 = scmp.ne.s32.totalorder %s169, %s185
      %p187 = scmp.eq.s32.totalorder %s25, 0
      %p188 = por %p186, %p187
      %s189 = ssub.s32 %s19, %s26
      %p190 = scmp.eq.s32.totalorder %s189, 0
      %s192 = sadd.s32 %s191, 1
      %s193 = scalar_select %p190, %s191, %s192
      %p196 = pneg %p190
      %p197 = scmp.eq.s32.totalorder %s19, 1
      %p198 = por %p196, %p197
      %p199 = scmp.ne.s32.totalorder %s191, %s194
      %p200 = scmp.eq.s32.totalorder %s19, 0
      %p201 = por %p199, %p200
      %p202 = scmp.ne.s32.totalorder %s191, %s194
      %p203 = scmp.eq.s32.totalorder %s24, 1
      %p204 = por %p202, %p203
      %p205 = scmp.ne.s32.totalorder %s194, %s195
      %p206 = scmp.eq.s32.totalorder %s24, 0
      %p207 = por %p205, %p206
      %p208 = scmp.ne.s32.totalorder %s194, %s195
      %p209 = scmp.eq.s32.totalorder %s25, 1
      %p210 = por %p208, %p209
      %p212 = scmp.ne.s32.totalorder %s195, %s211
      %p213 = scmp.eq.s32.totalorder %s25, 0
      %p214 = por %p212, %p213
      %s215 = ssub.s32 %s19, %s26
      %p216 = scmp.eq.s32.totalorder %s215, 0
      %s218 = sadd.s32 %s217, 1
      %s219 = scalar_select %p216, %s217, %s218
      %p222 = pneg %p216
      %p223 = scmp.eq.s32.totalorder %s19, 1
      %p224 = por %p222, %p223
      %p225 = scmp.ne.s32.totalorder %s217, %s220
      %p226 = scmp.eq.s32.totalorder %s19, 0
      %p227 = por %p225, %p226
      %p228 = scmp.ne.s32.totalorder %s217, %s220
      %p229 = scmp.eq.s32.totalorder %s24, 1
      %p230 = por %p228, %p229
      %p231 = scmp.ne.s32.totalorder %s220, %s221
      %p232 = scmp.eq.s32.totalorder %s24, 0
      %p233 = por %p231, %p232
      %p234 = scmp.ne.s32.totalorder %s220, %s221
      %p235 = scmp.eq.s32.totalorder %s25, 1
      %p236 = por %p234, %p235
      %p238 = scmp.ne.s32.totalorder %s221, %s237
      %p239 = scmp.eq.s32.totalorder %s25, 0
      %p240 = por %p238, %p239
      %s241 = ssub.s32 %s19, %s26
      %p242 = scmp.eq.s32.totalorder %s241, 0
      %s244 = sadd.s32 %s243, 1
      %s245 = scalar_select %p242, %s243, %s244
      %p248 = pneg %p242
      %p249 = scmp.eq.s32.totalorder %s19, 1
      %p250 = por %p248, %p249
      %p251 = scmp.ne.s32.totalorder %s243, %s246
      %p252 = scmp.eq.s32.totalorder %s19, 0
      %p253 = por %p251, %p252
      %p254 = scmp.ne.s32.totalorder %s243, %s246
      %p255 = scmp.eq.s32.totalorder %s24, 1
      %p256 = por %p254, %p255
      %p257 = scmp.ne.s32.totalorder %s246, %s247
      %p258 = scmp.eq.s32.totalorder %s24, 0
      %p259 = por %p257, %p258
      %p260 = scmp.ne.s32.totalorder %s246, %s247
      %p261 = scmp.eq.s32.totalorder %s25, 1
      %p262 = por %p260, %p261
      %p264 = scmp.ne.s32.totalorder %s247, %s263
      %p265 = scmp.eq.s32.totalorder %s25, 0
      %p266 = por %p264, %p265
      %s267 = ssub.s32 %s19, %s26
      %p268 = scmp.eq.s32.totalorder %s267, 0
      %s270 = sadd.s32 %s269, 1
      %s271 = scalar_select %p268, %s269, %s270
      %p274 = pneg %p268
      %p275 = scmp.eq.s32.totalorder %s19, 1
      %p276 = por %p274, %p275
      %p277 = scmp.ne.s32.totalorder %s269, %s272
      %p278 = scmp.eq.s32.totalorder %s19, 0
      %p279 = por %p277, %p278
      %p280 = scmp.ne.s32.totalorder %s269, %s272
      %p281 = scmp.eq.s32.totalorder %s24, 1
      %p282 = por %p280, %p281
      %p283 = scmp.ne.s32.totalorder %s272, %s273
      %p284 = scmp.eq.s32.totalorder %s24, 0
      %p285 = por %p283, %p284
      %p286 = scmp.ne.s32.totalorder %s272, %s273
      %p287 = scmp.eq.s32.totalorder %s25, 1
      %p288 = por %p286, %p287
      %p290 = scmp.ne.s32.totalorder %s273, %s289
      %p291 = scmp.eq.s32.totalorder %s25, 0
      %p292 = por %p290, %p291
      %s293 = ssub.s32 %s19, %s26
      %p294 = scmp.eq.s32.totalorder %s293, 0
      %s296 = sadd.s32 %s295, 1
      %s297 = scalar_select %p294, %s295, %s296
      %p300 = pneg %p294
      %p301 = scmp.eq.s32.totalorder %s19, 1
      %p302 = por %p300, %p301
      %p303 = scmp.ne.s32.totalorder %s295, %s298
      %p304 = scmp.eq.s32.totalorder %s19, 0
      %p305 = por %p303, %p304
      %p306 = scmp.ne.s32.totalorder %s295, %s298
      %p307 = scmp.eq.s32.totalorder %s24, 1
      %p308 = por %p306, %p307
      %p309 = scmp.ne.s32.totalorder %s298, %s299
      %p310 = scmp.eq.s32.totalorder %s24, 0
      %p311 = por %p309, %p310
      %p312 = scmp.ne.s32.totalorder %s298, %s299
      %p313 = scmp.eq.s32.totalorder %s25, 1
      %p314 = por %p312, %p313
      %p316 = scmp.ne.s32.totalorder %s299, %s315
      %p317 = scmp.eq.s32.totalorder %s25, 0
      %p318 = por %p316, %p317
      %s320 = sadd.s32 %s319, 1
      %p323 = scmp.eq.s32.totalorder %s19, 1
      %p324 = scmp.ne.s32.totalorder %s319, %s321
      %p325 = scmp.eq.s32.totalorder %s19, 0
      %p326 = por %p324, %p325
      %p327 = scmp.ne.s32.totalorder %s319, %s321
      %p328 = scmp.eq.s32.totalorder %s24, 1
      %p329 = por %p327, %p328
      %p330 = scmp.ne.s32.totalorder %s321, %s322
      %p331 = scmp.eq.s32.totalorder %s24, 0
      %p332 = por %p330, %p331
      %p333 = scmp.ne.s32.totalorder %s321, %s322
      %p334 = scmp.eq.s32.totalorder %s25, 1
      %p335 = por %p333, %p334
      %p337 = scmp.ne.s32.totalorder %s322, %s336
      %p338 = scmp.eq.s32.totalorder %s25, 0
      %p339 = por %p337, %p338
      %p340 = scmp.le.s32.totalorder 1, %s19
      %p341 = scmp.lt.s32.totalorder %s19, 3
      %p342 = pnand %p340, %p341
      %p343 = pneg %p342
      // Predicated region
      $region9: #{tpu_custom_call.1} parent=5 // pred_check
        _
      $region10: #{tpu_custom_call.1} parent=5 // pred_check_branch
        %345 = sbr.rel (%p342) target = $region12
      $region11: #{tpu_custom_call.1} parent=5 // pred_region
        %s346 = ssub.s32 %s19, 1
        // Predicated region
        $region13: #{tpu_custom_call.1} parent=11 // pred_check
          %p347 = pneg %p40
        $region14: #{tpu_custom_call.1} parent=11 // pred_check_branch
          %349 = sbr.rel (%p347) target = $region16
        $region15: #{tpu_custom_call.1} parent=11 // pred_region
          _
        $region16: #{tpu_custom_call.1} parent=11 // pred_fallthru
          _
        // Predicated region
        $region17: #{tpu_custom_call.1} parent=11 // pred_check
          %p350 = pneg %p61
        $region18: #{tpu_custom_call.1} parent=11 // pred_check_branch
          %352 = sbr.rel (%p350) target = $region20
        $region19: #{tpu_custom_call.1} parent=11 // pred_region
          _
        $region20: #{tpu_custom_call.1} parent=11 // pred_fallthru
          _
        // Predicated region
        $region21: #{tpu_custom_call.1} parent=11 // pred_check
          %p353 = pneg %p82
        $region22: #{tpu_custom_call.1} parent=11 // pred_check_branch
          %355 = sbr.rel (%p353) target = $region24
        $region23: #{tpu_custom_call.1} parent=11 // pred_region
          _
        $region24: #{tpu_custom_call.1} parent=11 // pred_fallthru
          _
        // Predicated region
        $region25: #{tpu_custom_call.1} parent=11 // pred_check
          %p356 = pneg %p103
        $region26: #{tpu_custom_call.1} parent=11 // pred_check_branch
          %358 = sbr.rel (%p356) target = $region28
        $region27: #{tpu_custom_call.1} parent=11 // pred_region
          _
        $region28: #{tpu_custom_call.1} parent=11 // pred_fallthru
          _
      $region12: #{tpu_custom_call.1} parent=5 // pred_fallthru
        _
      %p359 = scmp.lt.s32.totalorder %s19, 2
      // Predicated region
      $region29: #{tpu_custom_call.1} parent=5 // pred_check
        %p360 = pneg %p359
      $region30: #{tpu_custom_call.1} parent=5 // pred_check_branch
        %362 = sbr.rel (%p360) target = $region32
      $region31: #{tpu_custom_call.1} parent=5 // pred_region
        // Predicated region
        $region33: #{tpu_custom_call.1} parent=31 // pred_check
          %p363 = pneg %p123
        $region34: #{tpu_custom_call.1} parent=31 // pred_check_branch
          %365 = sbr.rel (%p363) target = $region36
        $region35: #{tpu_custom_call.1} parent=31 // pred_region
          %p366 = scmp.lt.s32.totalorder %s19, 1
          %s367 = scalar_select %p366, %s19, 1
          %s368 = smul.addr %s367, 2
          %s369 = smul.addr %s368, 8
          %s370 = scalar_lea.vmem %s4, %s369
        $region36: #{tpu_custom_call.1} parent=31 // pred_fallthru
          _
        // Predicated region
        $region37: #{tpu_custom_call.1} parent=31 // pred_check
          %p371 = pneg %p149
        $region38: #{tpu_custom_call.1} parent=31 // pred_check_branch
          %373 = sbr.rel (%p371) target = $region40
        $region39: #{tpu_custom_call.1} parent=31 // pred_region
          %p374 = scmp.lt.s32.totalorder %s19, 1
          %s375 = scalar_select %p374, %s19, 1
          %s376 = scalar_lea.vmem %s5, %s375
        $region40: #{tpu_custom_call.1} parent=31 // pred_fallthru
          _
        // Predicated region
        $region41: #{tpu_custom_call.1} parent=31 // pred_check
          %p377 = pneg %p175
        $region42: #{tpu_custom_call.1} parent=31 // pred_check_branch
          %379 = sbr.rel (%p377) target = $region44
        $region43: #{tpu_custom_call.1} parent=31 // pred_region
          %p380 = scmp.lt.s32.totalorder %s19, 1
          %s381 = scalar_select %p380, %s19, 1
          %s382 = smul.addr %s381, 4
          %s383 = smul.addr %s382, 4
          %s384 = scalar_lea.vmem %s6, %s383
        $region44: #{tpu_custom_call.1} parent=31 // pred_fallthru
          _
        // Predicated region
        $region45: #{tpu_custom_call.1} parent=31 // pred_check
          %p385 = pneg %p201
        $region46: #{tpu_custom_call.1} parent=31 // pred_check_branch
          %387 = sbr.rel (%p385) target = $region48
        $region47: #{tpu_custom_call.1} parent=31 // pred_region
          %p388 = scmp.lt.s32.totalorder %s19, 1
          %s389 = scalar_select %p388, %s19, 1
          %s390 = smul.addr %s389, 4
          %s391 = smul.addr %s390, 4
          %s392 = scalar_lea.vmem %s7, %s391
        $region48: #{tpu_custom_call.1} parent=31 // pred_fallthru
          _
        // Predicated region
        $region49: #{tpu_custom_call.1} parent=31 // pred_check
          %p393 = pneg %p227
        $region50: #{tpu_custom_call.1} parent=31 // pred_check_branch
          %395 = sbr.rel (%p393) target = $region52
        $region51: #{tpu_custom_call.1} parent=31 // pred_region
          %p396 = scmp.lt.s32.totalorder %s19, 1
          %s397 = scalar_select %p396, %s19, 1
          %s398 = smul.addr %s397, 4
          %s399 = smul.addr %s398, 4
          %s400 = scalar_lea.vmem %s8, %s399
        $region52: #{tpu_custom_call.1} parent=31 // pred_fallthru
          _
        // Predicated region
        $region53: #{tpu_custom_call.1} parent=31 // pred_check
          %p401 = pneg %p253
        $region54: #{tpu_custom_call.1} parent=31 // pred_check_branch
          %403 = sbr.rel (%p401) target = $region56
        $region55: #{tpu_custom_call.1} parent=31 // pred_region
          %p404 = scmp.lt.s32.totalorder %s19, 1
          %s405 = scalar_select %p404, %s19, 1
          %s406 = smul.addr %s405, 4
          %s407 = smul.addr %s406, 4
          %s408 = scalar_lea.vmem %s9, %s407
        $region56: #{tpu_custom_call.1} parent=31 // pred_fallthru
          _
        // Predicated region
        $region57: #{tpu_custom_call.1} parent=31 // pred_check
          %p409 = pneg %p279
        $region58: #{tpu_custom_call.1} parent=31 // pred_check_branch
          %411 = sbr.rel (%p409) target = $region60
        $region59: #{tpu_custom_call.1} parent=31 // pred_region
          %p412 = scmp.lt.s32.totalorder %s19, 1
          %s413 = scalar_select %p412, %s19, 1
          %s414 = smul.addr %s413, 4
          %s415 = smul.addr %s414, 4
          %s416 = scalar_lea.vmem %s10, %s415
        $region60: #{tpu_custom_call.1} parent=31 // pred_fallthru
          _
        // Predicated region
        $region61: #{tpu_custom_call.1} parent=31 // pred_check
          %p417 = pneg %p305
        $region62: #{tpu_custom_call.1} parent=31 // pred_check_branch
          %419 = sbr.rel (%p417) target = $region64
        $region63: #{tpu_custom_call.1} parent=31 // pred_region
          %p420 = scmp.lt.s32.totalorder %s19, 1
          %s421 = scalar_select %p420, %s19, 1
          %s422 = smul.addr %s421, 16
          %s423 = smul.addr %s422, 4
          %s424 = scalar_lea.vmem %s11, %s423
        $region64: #{tpu_custom_call.1} parent=31 // pred_fallthru
          _
      $region32: #{tpu_custom_call.1} parent=5 // pred_fallthru
        _
      %p425 = scmp.le.s32.totalorder 1, %s19
      %p426 = scmp.lt.s32.totalorder %s19, 3
      %p427 = pnand %p425, %p426
      %p428 = pneg %p427
      // Predicated region
      $region65: #{tpu_custom_call.1} parent=5 // pred_check
        _
      $region66: #{tpu_custom_call.1} parent=5 // pred_check_branch
        %430 = sbr.rel (%p427) target = $region68
      $region67: #{tpu_custom_call.1} parent=5 // pred_region
        %s431 = ssub.s32 %s19, 1
        %p432 = pneg %p40
        %p433 = pneg %p37
        %p434 = pneg %p61
        %p435 = pneg %p58
        %p436 = pneg %p82
        %p437 = pneg %p79
        %p438 = pneg %p103
        %p439 = pneg %p100
        %p440 = scmp.lt.s32.totalorder %s24, 1
        %s441 = scalar_select %p440, %s24, 1
        %s442 = smul.addr %s441, 2
        %s443 = smul.addr %s442, 8
        %s444 = scalar_lea.vmem %s4, %s443
        %p445 = pneg %p129
        %p446 = pneg %p126
        %p447 = scmp.lt.s32.totalorder %s24, 1
        %s448 = scalar_select %p447, %s24, 1
        %s449 = scalar_lea.vmem %s5, %s448
        %p450 = pneg %p155
        %p451 = pneg %p152
        %p452 = scmp.lt.s32.totalorder %s24, 1
        %s453 = scalar_select %p452, %s24, 1
        %s454 = smul.addr %s453, 4
        %s455 = smul.addr %s454, 4
        %s456 = scalar_lea.vmem %s6, %s455
        %p457 = pneg %p181
        %p458 = pneg %p178
        %p459 = scmp.lt.s32.totalorder %s24, 1
        %s460 = scalar_select %p459, %s24, 1
        %s461 = smul.addr %s460, 4
        %s462 = smul.addr %s461, 4
        %s463 = scalar_lea.vmem %s7, %s462
        %p464 = pneg %p207
        %p465 = pneg %p204
        %p466 = scmp.lt.s32.totalorder %s24, 1
        %s467 = scalar_select %p466, %s24, 1
        %s468 = smul.addr %s467, 4
        %s469 = smul.addr %s468, 4
        %s470 = scalar_lea.vmem %s8, %s469
        %p471 = pneg %p233
        %p472 = pneg %p230
        %p473 = scmp.lt.s32.totalorder %s24, 1
        %s474 = scalar_select %p473, %s24, 1
        %s475 = smul.addr %s474, 4
        %s476 = smul.addr %s475, 4
        %s477 = scalar_lea.vmem %s9, %s476
        %p478 = pneg %p259
        %p479 = pneg %p256
        %p480 = scmp.lt.s32.totalorder %s24, 1
        %s481 = scalar_select %p480, %s24, 1
        %s482 = smul.addr %s481, 4
        %s483 = smul.addr %s482, 4
        %s484 = scalar_lea.vmem %s10, %s483
        %p485 = pneg %p285
        %p486 = pneg %p282
        %p487 = scmp.lt.s32.totalorder %s24, 1
        %s488 = scalar_select %p487, %s24, 1
        %s489 = smul.addr %s488, 16
        %s490 = smul.addr %s489, 4
        %s491 = scalar_lea.vmem %s11, %s490
        %p492 = pneg %p311
        %p493 = pneg %p308
        %p494 = pneg %p332
        %p495 = pneg %p329
        %p496 = scmp.lt.s32.totalorder %s24, 1
        %s497 = scalar_select %p496, %s24, 1
        %s498 = smul.addr %s497, 2
        %s499 = smul.addr %s498, 8
        %s500 = scalar_lea.vmem %s4, %s499
        %p501 = scmp.lt.s32.totalorder %s24, 1
        %s502 = scalar_select %p501, %s24, 1
        %s503 = scalar_lea.vmem %s5, %s502
        %p504 = scmp.lt.s32.totalorder %s24, 1
        %s505 = scalar_select %p504, %s24, 1
        %s506 = smul.addr %s505, 4
        %s507 = smul.addr %s506, 4
        %s508 = scalar_lea.vmem %s6, %s507
        %p509 = scmp.lt.s32.totalorder %s24, 1
        %s510 = scalar_select %p509, %s24, 1
        %s511 = smul.addr %s510, 4
        %s512 = smul.addr %s511, 4
        %s513 = scalar_lea.vmem %s7, %s512
        %p514 = scmp.lt.s32.totalorder %s24, 1
        %s515 = scalar_select %p514, %s24, 1
        %s516 = smul.addr %s515, 4
        %s517 = smul.addr %s516, 4
        %s518 = scalar_lea.vmem %s8, %s517
        %p519 = scmp.lt.s32.totalorder %s24, 1
        %s520 = scalar_select %p519, %s24, 1
        %s521 = smul.addr %s520, 4
        %s522 = smul.addr %s521, 4
        %s523 = scalar_lea.vmem %s9, %s522
        %p524 = scmp.lt.s32.totalorder %s24, 1
        %s525 = scalar_select %p524, %s24, 1
        %s526 = smul.addr %s525, 4
        %s527 = smul.addr %s526, 4
        %s528 = scalar_lea.vmem %s10, %s527
        %p529 = scmp.lt.s32.totalorder %s24, 1
        %s530 = scalar_select %p529, %s24, 1
        %s531 = smul.addr %s530, 16
        %s532 = smul.addr %s531, 4
        %s533 = scalar_lea.vmem %s11, %s532
        %p535 = scmp.eq.s32.totalorder %s24, 0
        // Predicated region
        $region69: #{tpu_custom_call.1} parent=67 // pred_check
          %p536 = pneg %p535
        $region70: #{tpu_custom_call.1} parent=67 // pred_check_branch
          %538 = sbr.rel (%p536) target = $region72
        $region71: #{tpu_custom_call.1} parent=67 // pred_region
          %v539 = vld [vmem:[%s0] sm:$0xf]
          %v540 = vld [vmem:[%s0 + $0x4] sm:$0xf]
          %v541 = vunpack.c.l.bf16 %v539
          %v542 = vunpack.c.l.bf16 %v540
          %vm543 = vcmask 261120
          %544 = vst.msk [vmem:[#allocation2] sm:$0xff] %vm543, %v541
          %545 = vst.msk [vmem:[#allocation2 + $0x8] sm:$0xff] %vm543, %v542
        $region72: #{tpu_custom_call.1} parent=67 // pred_fallthru
          _
        %v546 = vld [vmem:[#allocation2] sm:$0xff]
        %v547 = vld [vmem:[#allocation2 + $0x8] sm:$0xff]
        %v548 = vld [vmem:[%s500] sm:$0x1]
        %v549 = vld [vmem:[%s500 + $0x1] sm:$0x1]
        %v550 = vld [vmem:[%s500 + $0x2] sm:$0x1]
        %v551 = vld [vmem:[%s500 + $0x3] sm:$0x1]
        %v552 = vld [vmem:[%s500 + $0x4] sm:$0x1]
        %v553 = vld [vmem:[%s500 + $0x5] sm:$0x1]
        %v554 = vld [vmem:[%s500 + $0x6] sm:$0x1]
        %v555 = vld [vmem:[%s500 + $0x7] sm:$0x1]
        %v556 = vld [vmem:[%s500 + $0x8] sm:$0x1]
        %vm557 = vcmask 261120
        %v558 = vsel %vm557, %v546, 0.0
        %559 = vadd.xlane.f32.xlu0 %v558
        %v560 = vpop.xlane.xlu0 %559
        %v561 = vsel %vm557, %v547, 0.0
        %562 = vadd.xlane.f32.xlu0 %v561
        %v563 = vpop.xlane.xlu0 %562
        %v564 = vrcp.pop 32.0
        %v565 = vmul.f32 %v560, %v564
        %v566 = vmul.f32 %v563, %v564
        %v567 = vsub.f32 %v546, %v565
        %v568 = vsub.f32 %v547, %v566
        %v569 = vmul.f32 %v567, %v567
        %v570 = vmul.f32 %v568, %v568
        %v571 = vsel %vm557, %v569, 0.0
        %572 = vadd.xlane.f32.xlu0 %v571
        %v573 = vpop.xlane.xlu0 %572
        %v574 = vsel %vm557, %v570, 0.0
        %575 = vadd.xlane.f32.xlu0 %v574
        %v576 = vpop.xlane.xlu0 %575
        %v577 = vmul.f32 %v573, %v564
        %v578 = vmul.f32 %v576, %v564
        %v579 = vadd.f32 %v577, 1e-05
        %v580 = vadd.f32 %v578, 1e-05
        %v581 = vrsqrt.pop %v579
        %v582 = vrsqrt.pop %v580
        %v583 = vmul.f32 %v567, %v581
        %v584 = vmul.f32 %v568, %v582
        %v585 = vlaneseq
        %v586 = vshrl.u32 %v585, 7
        %v587 = vsub.s32 0, %v586
        %v588 = vrot.slane %v548, %v587
        %v589 = vmul.f32 %v583, %v588
        %v590 = vmul.f32 %v584, %v588
        %v591 = vlaneseq
        %v592 = vshrl.u32 %v591, 7
        %v593 = vsub.s32 0, %v592
        %v594 = vrot.slane %v549, %v593
        %v595 = vadd.f32 %v589, %v594
        %v596 = vadd.f32 %v590, %v594
        %v597 = vpack.c.bf16 %v596, %v595
        %v598 = vld [vmem:[%s508] sm:$0xf]
        %v599 = vld [vmem:[%s508 + $0x4] sm:$0xf]
        %v600 = vld [vmem:[%s508 + $0x8] sm:$0xf]
        %v601 = vld [vmem:[%s508 + $0xc] sm:$0xf]
        %v602 = vlaneseq
        %v603 = vshrl.u32 %v602, 7
        %v604 = vsub.s32 0, %v603
        %v605 = vrot.slane %v552, %v604
        %v610 = vunpack.c.l.b16 %v598
        %v611 = vunpack.c.l.b16 %v599
        %v612 = vunpack.c.l.b16 %v600
        %v613 = vunpack.c.l.b16 %v601
        %v614 = vpack.c.b16 %v611, %v610
        %v615 = vpack.c.b16 %v613, %v612
        %v619 = vsel %vm557, %v597, 0
        %621 = vmatprep.subr.bf16.mxu0 0
        %622 = vmatpush1.bf16.msra.mxu0 %v614
        %623 = vmatprep.subr.bf16.mxu0 0
        %624 = vmatpush1.bf16.msra.mxu0 %v615
        %625 = vmatprep.subr.bf16.mxu0 0
        %626 = vmatpush1.bf16.msra.mxu0 0
        %627 = vmatprep.subr.bf16.mxu0 0
        %628 = vmatpush1.bf16.msra.mxu0 0
        %629 = vmatprep.subr.bf16.mxu0 0
        %630 = vmatpush1.bf16.msra.mxu0 0
        %631 = vmatprep.subr.bf16.mxu0 0
        %632 = vmatpush1.bf16.msra.mxu0 0
        %633 = vmatprep.subr.bf16.mxu0 0
        %634 = vmatpush1.bf16.msra.mxu0 0
        %635 = vmatprep.subr.bf16.mxu0 0
        %636 = vmatpush1.bf16.msra.mxu0 0
        %637 = vmatprep.subr.bf16.mxu0 0
        %638 = vmatpush1.bf16.msra.mxu0 0
        %639 = vmatprep.subr.bf16.mxu0 0
        %640 = vmatpush1.bf16.msra.mxu0 0
        %641 = vmatprep.subr.bf16.mxu0 0
        %642 = vmatpush1.bf16.msra.mxu0 0
        %643 = vmatprep.subr.bf16.mxu0 0
        %644 = vmatpush1.bf16.msra.mxu0 0
        %645 = vmatprep.subr.bf16.mxu0 0
        %646 = vmatpush1.bf16.msra.mxu0 0
        %647 = vmatprep.subr.bf16.mxu0 0
        %648 = vmatpush1.bf16.msra.mxu0 0
        %649 = vmatprep.subr.bf16.mxu0 0
        %650 = vmatpush1.bf16.msra.mxu0 0
        %651 = vmatprep.subr.bf16.mxu0 0
        %652 = vmatpush1.bf16.msra.mxu0 0
        %653 = vmatprep.mubr.bf16.mxu0 0
        %654 = vmatmul.mubr.bf16.gmra.mrb[0].mxu0 %v619
        %v655 = vpop.f32.mrb[0].mxu0
        %v656 = vadd.f32 %v605, %v655
        %v657 = vpop.f32.mrb[0].mxu0
        %v658 = vpop.f32.mrb[0].mxu0
        %v659 = vadd.f32 %v605, %v658
        %v660 = vpop.f32.mrb[0].mxu0
        %661 = vdwg.mxu0
        %v662 = vmul.f32 %v656, 0.35355338
        %v663 = vmul.f32 %v659, 0.35355338
        %v664 = vld [vmem:[%s513] sm:$0xf]
        %v665 = vld [vmem:[%s513 + $0x4] sm:$0xf]
        %v666 = vld [vmem:[%s513 + $0x8] sm:$0xf]
        %v667 = vld [vmem:[%s513 + $0xc] sm:$0xf]
        %v668 = vlaneseq
        %v669 = vshrl.u32 %v668, 7
        %v670 = vsub.s32 0, %v669
        %v671 = vrot.slane %v553, %v670
        %v676 = vunpack.c.l.b16 %v664
        %v677 = vunpack.c.l.b16 %v665
        %v678 = vunpack.c.l.b16 %v666
        %v679 = vunpack.c.l.b16 %v667
        %v680 = vpack.c.b16 %v677, %v676
        %v681 = vpack.c.b16 %v679, %v678
        %684 = vmatprep.subr.bf16.mxu0 0
        %685 = vmatpush1.bf16.msra.mxu0 %v680
        %686 = vmatprep.subr.bf16.mxu0 0
        %687 = vmatpush1.bf16.msra.mxu0 %v681
        %688 = vmatprep.subr.bf16.mxu0 0
        %689 = vmatpush1.bf16.msra.mxu0 0
        %690 = vmatprep.subr.bf16.mxu0 0
        %691 = vmatpush1.bf16.msra.mxu0 0
        %692 = vmatprep.subr.bf16.mxu0 0
        %693 = vmatpush1.bf16.msra.mxu0 0
        %694 = vmatprep.subr.bf16.mxu0 0
        %695 = vmatpush1.bf16.msra.mxu0 0
        %696 = vmatprep.subr.bf16.mxu0 0
        %697 = vmatpush1.bf16.msra.mxu0 0
        %698 = vmatprep.subr.bf16.mxu0 0
        %699 = vmatpush1.bf16.msra.mxu0 0
        %700 = vmatprep.subr.bf16.mxu0 0
        %701 = vmatpush1.bf16.msra.mxu0 0
        %702 = vmatprep.subr.bf16.mxu0 0
        %703 = vmatpush1.bf16.msra.mxu0 0
        %704 = vmatprep.subr.bf16.mxu0 0
        %705 = vmatpush1.bf16.msra.mxu0 0
        %706 = vmatprep.subr.bf16.mxu0 0
        %707 = vmatpush1.bf16.msra.mxu0 0
        %708 = vmatprep.subr.bf16.mxu0 0
        %709 = vmatpush1.bf16.msra.mxu0 0
        %710 = vmatprep.subr.bf16.mxu0 0
        %711 = vmatpush1.bf16.msra.mxu0 0
        %712 = vmatprep.subr.bf16.mxu0 0
        %713 = vmatpush1.bf16.msra.mxu0 0
        %714 = vmatprep.subr.bf16.mxu0 0
        %715 = vmatpush1.bf16.msra.mxu0 0
        %716 = vmatprep.mubr.bf16.mxu0 0
        %717 = vmatmul.mubr.bf16.gmra.mrb[0].mxu0 %v619
        %v718 = vpop.f32.mrb[0].mxu0
        %v719 = vadd.f32 %v671, %v718
        %v720 = vpop.f32.mrb[0].mxu0
        %v721 = vpop.f32.mrb[0].mxu0
        %v722 = vadd.f32 %v671, %v721
        %v723 = vpop.f32.mrb[0].mxu0
        %724 = vdwg.mxu0
        %v725 = vld [vmem:[%s518] sm:$0xf]
        %v726 = vld [vmem:[%s518 + $0x4] sm:$0xf]
        %v727 = vld [vmem:[%s518 + $0x8] sm:$0xf]
        %v728 = vld [vmem:[%s518 + $0xc] sm:$0xf]
        %v729 = vlaneseq
        %v730 = vshrl.u32 %v729, 7
        %v731 = vsub.s32 0, %v730
        %v732 = vrot.slane %v554, %v731
        %v737 = vunpack.c.l.b16 %v725
        %v738 = vunpack.c.l.b16 %v726
        %v739 = vunpack.c.l.b16 %v727
        %v740 = vunpack.c.l.b16 %v728
        %v741 = vpack.c.b16 %v738, %v737
        %v742 = vpack.c.b16 %v740, %v739
        %745 = vmatprep.subr.bf16.mxu0 0
        %746 = vmatpush1.bf16.msra.mxu0 %v741
        %747 = vmatprep.subr.bf16.mxu0 0
        %748 = vmatpush1.bf16.msra.mxu0 %v742
        %749 = vmatprep.subr.bf16.mxu0 0
        %750 = vmatpush1.bf16.msra.mxu0 0
        %751 = vmatprep.subr.bf16.mxu0 0
        %752 = vmatpush1.bf16.msra.mxu0 0
        %753 = vmatprep.subr.bf16.mxu0 0
        %754 = vmatpush1.bf16.msra.mxu0 0
        %755 = vmatprep.subr.bf16.mxu0 0
        %756 = vmatpush1.bf16.msra.mxu0 0
        %757 = vmatprep.subr.bf16.mxu0 0
        %758 = vmatpush1.bf16.msra.mxu0 0
        %759 = vmatprep.subr.bf16.mxu0 0
        %760 = vmatpush1.bf16.msra.mxu0 0
        %761 = vmatprep.subr.bf16.mxu0 0
        %762 = vmatpush1.bf16.msra.mxu0 0
        %763 = vmatprep.subr.bf16.mxu0 0
        %764 = vmatpush1.bf16.msra.mxu0 0
        %765 = vmatprep.subr.bf16.mxu0 0
        %766 = vmatpush1.bf16.msra.mxu0 0
        %767 = vmatprep.subr.bf16.mxu0 0
        %768 = vmatpush1.bf16.msra.mxu0 0
        %769 = vmatprep.subr.bf16.mxu0 0
        %770 = vmatpush1.bf16.msra.mxu0 0
        %771 = vmatprep.subr.bf16.mxu0 0
        %772 = vmatpush1.bf16.msra.mxu0 0
        %773 = vmatprep.subr.bf16.mxu0 0
        %774 = vmatpush1.bf16.msra.mxu0 0
        %775 = vmatprep.subr.bf16.mxu0 0
        %776 = vmatpush1.bf16.msra.mxu0 0
        %777 = vmatprep.mubr.bf16.mxu0 0
        %778 = vmatmul.mubr.bf16.gmra.mrb[0].mxu0 %v619
        %v779 = vpop.f32.mrb[0].mxu0
        %v780 = vadd.f32 %v732, %v779
        %v781 = vpop.f32.mrb[0].mxu0
        %v782 = vpop.f32.mrb[0].mxu0
        %v783 = vadd.f32 %v732, %v782
        %v784 = vpop.f32.mrb[0].mxu0
        %785 = vdwg.mxu0
        %v786 = vld [vmem:[%s1] sm:$0xff]
        %788 = vrot.lane.b32.xlu0 %v662, 120
        %v789 = vpop.permute.xlu0 %788
        %791 = vrot.lane.b32.xlu0 %v662, 112
        %v792 = vpop.permute.xlu0 %791
        %794 = vrot.lane.b32.xlu0 %v662, 104
        %v795 = vpop.permute.xlu0 %794
        %v797 = vcombine.low %v662, %v792
        %v798 = vcombine.high %v662, %v792
        %v800 = vunpack.c.l.s4 1983009808
        %v801 = vunpack.c.0.s8 %v800
        %v802 = vlaneseq
        %v803 = vshrl.u32 %v802, 7
        %v804 = vsub.s32 %v801, %v803
        %v805 = vrot.slane %v797, %v804
        %v807 = vunpack.c.l.s4 1983009808
        %v808 = vunpack.c.0.s8 %v807
        %v809 = vlaneseq
        %v810 = vshrl.u32 %v809, 7
        %v811 = vsub.s32 %v808, %v810
        %v812 = vrot.slane %v798, %v811
        %v813 = vcombine.low %v789, %v795
        %v814 = vcombine.high %v789, %v795
        %v816 = vunpack.c.l.s4 1983009808
        %v817 = vunpack.c.0.s8 %v816
        %v818 = vlaneseq
        %v819 = vshrl.u32 %v818, 7
        %v820 = vsub.s32 %v817, %v819
        %v821 = vrot.slane %v813, %v820
        %v823 = vunpack.c.l.s4 1983009808
        %v824 = vunpack.c.0.s8 %v823
        %v825 = vlaneseq
        %v826 = vshrl.u32 %v825, 7
        %v827 = vsub.s32 %v824, %v826
        %v828 = vrot.slane %v814, %v827
        %v829 = vcombine.low %v805, %v821
        %v830 = vcombine.high %v805, %v821
        %v832 = vunpack.c.l.s4 1934713408
        %v833 = vunpack.c.0.s8 %v832
        %v834 = vlaneseq
        %v835 = vshrl.u32 %v834, 7
        %v836 = vsub.s32 %v833, %v835
        %v837 = vrot.slane %v829, %v836
        %v839 = vunpack.c.l.s4 1934713408
        %v840 = vunpack.c.0.s8 %v839
        %v841 = vlaneseq
        %v842 = vshrl.u32 %v841, 7
        %v843 = vsub.s32 %v840, %v842
        %v844 = vrot.slane %v830, %v843
        %v845 = vcombine.low %v812, %v828
        %v846 = vcombine.high %v812, %v828
        %v848 = vunpack.c.l.s4 1934713408
        %v849 = vunpack.c.0.s8 %v848
        %v850 = vlaneseq
        %v851 = vshrl.u32 %v850, 7
        %v852 = vsub.s32 %v849, %v851
        %v853 = vrot.slane %v845, %v852
        %v855 = vunpack.c.l.s4 1934713408
        %v856 = vunpack.c.0.s8 %v855
        %v857 = vlaneseq
        %v858 = vshrl.u32 %v857, 7
        %v859 = vsub.s32 %v856, %v858
        %v860 = vrot.slane %v846, %v859
        %v861 = vcombine.high %v837, 0.0
        %v862 = vcombine.high %v844, 0.0
        %v863 = vcombine.high %v853, 0.0
        %v864 = vcombine.high %v860, 0.0
        %v865 = vcombine.low %v837, %v844
        %v867 = vunpack.c.l.s4 1983009808
        %v868 = vunpack.c.0.s8 %v867
        %v869 = vlaneseq
        %v870 = vshrl.u32 %v869, 7
        %v871 = vsub.s32 %v868, %v870
        %v872 = vrot.slane %v865, %v871
        %v873 = vcombine.low %v861, %v862
        %v875 = vunpack.c.l.s4 1983009808
        %v876 = vunpack.c.0.s8 %v875
        %v877 = vlaneseq
        %v878 = vshrl.u32 %v877, 7
        %v879 = vsub.s32 %v876, %v878
        %v880 = vrot.slane %v873, %v879
        %v881 = vcombine.low %v853, %v860
        %v883 = vunpack.c.l.s4 1983009808
        %v884 = vunpack.c.0.s8 %v883
        %v885 = vlaneseq
        %v886 = vshrl.u32 %v885, 7
        %v887 = vsub.s32 %v884, %v886
        %v888 = vrot.slane %v881, %v887
        %v889 = vcombine.low %v863, %v864
        %v891 = vunpack.c.l.s4 1983009808
        %v892 = vunpack.c.0.s8 %v891
        %v893 = vlaneseq
        %v894 = vshrl.u32 %v893, 7
        %v895 = vsub.s32 %v892, %v894
        %v896 = vrot.slane %v889, %v895
        %v897 = vcombine.low %v872, %v880
        %v898 = vcombine.high %v872, %v880
        %v900 = vunpack.c.l.s4 1934713408
        %v901 = vunpack.c.0.s8 %v900
        %v902 = vlaneseq
        %v903 = vshrl.u32 %v902, 7
        %v904 = vsub.s32 %v901, %v903
        %v905 = vrot.slane %v897, %v904
        %v907 = vunpack.c.l.s4 1934713408
        %v908 = vunpack.c.0.s8 %v907
        %v909 = vlaneseq
        %v910 = vshrl.u32 %v909, 7
        %v911 = vsub.s32 %v908, %v910
        %v912 = vrot.slane %v898, %v911
        %v913 = vcombine.low %v888, %v896
        %v914 = vcombine.high %v888, %v896
        %v916 = vunpack.c.l.s4 1934713408
        %v917 = vunpack.c.0.s8 %v916
        %v918 = vlaneseq
        %v919 = vshrl.u32 %v918, 7
        %v920 = vsub.s32 %v917, %v919
        %v921 = vrot.slane %v913, %v920
        %v923 = vunpack.c.l.s4 1934713408
        %v924 = vunpack.c.0.s8 %v923
        %v925 = vlaneseq
        %v926 = vshrl.u32 %v925, 7
        %v927 = vsub.s32 %v924, %v926
        %v928 = vrot.slane %v914, %v927
        %v929 = vcombine.low %v905, %v921
        %v930 = vcombine.high %v905, %v921
        %v931 = vcombine.low %v912, %v928
        %v932 = vcombine.high %v912, %v928
        %v933 = vpack.c.bf16 %v929, %v929
        %v934 = vpack.c.bf16 %v930, %v930
        %v935 = vpack.c.bf16 %v931, %v931
        %v936 = vpack.c.bf16 %v932, %v932
        %938 = vrot.lane.b32.xlu0 %v719, 120
        %v939 = vpop.permute.xlu0 %938
        %941 = vrot.lane.b32.xlu0 %v719, 112
        %v942 = vpop.permute.xlu0 %941
        %944 = vrot.lane.b32.xlu0 %v719, 104
        %v945 = vpop.permute.xlu0 %944
        %v947 = vcombine.low %v719, %v942
        %v948 = vcombine.high %v719, %v942
        %v950 = vunpack.c.l.s4 1983009808
        %v951 = vunpack.c.0.s8 %v950
        %v952 = vlaneseq
        %v953 = vshrl.u32 %v952, 7
        %v954 = vsub.s32 %v951, %v953
        %v955 = vrot.slane %v947, %v954
        %v957 = vunpack.c.l.s4 1983009808
        %v958 = vunpack.c.0.s8 %v957
        %v959 = vlaneseq
        %v960 = vshrl.u32 %v959, 7
        %v961 = vsub.s32 %v958, %v960
        %v962 = vrot.slane %v948, %v961
        %v963 = vcombine.low %v939, %v945
        %v964 = vcombine.high %v939, %v945
        %v966 = vunpack.c.l.s4 1983009808
        %v967 = vunpack.c.0.s8 %v966
        %v968 = vlaneseq
        %v969 = vshrl.u32 %v968, 7
        %v970 = vsub.s32 %v967, %v969
        %v971 = vrot.slane %v963, %v970
        %v973 = vunpack.c.l.s4 1983009808
        %v974 = vunpack.c.0.s8 %v973
        %v975 = vlaneseq
        %v976 = vshrl.u32 %v975, 7
        %v977 = vsub.s32 %v974, %v976
        %v978 = vrot.slane %v964, %v977
        %v979 = vcombine.low %v955, %v971
        %v980 = vcombine.high %v955, %v971
        %v982 = vunpack.c.l.s4 1934713408
        %v983 = vunpack.c.0.s8 %v982
        %v984 = vlaneseq
        %v985 = vshrl.u32 %v984, 7
        %v986 = vsub.s32 %v983, %v985
        %v987 = vrot.slane %v979, %v986
        %v989 = vunpack.c.l.s4 1934713408
        %v990 = vunpack.c.0.s8 %v989
        %v991 = vlaneseq
        %v992 = vshrl.u32 %v991, 7
        %v993 = vsub.s32 %v990, %v992
        %v994 = vrot.slane %v980, %v993
        %v995 = vcombine.low %v962, %v978
        %v996 = vcombine.high %v962, %v978
        %v998 = vunpack.c.l.s4 1934713408
        %v999 = vunpack.c.0.s8 %v998
        %v1000 = vlaneseq
        %v1001 = vshrl.u32 %v1000, 7
        %v1002 = vsub.s32 %v999, %v1001
        %v1003 = vrot.slane %v995, %v1002
        %v1005 = vunpack.c.l.s4 1934713408
        %v1006 = vunpack.c.0.s8 %v1005
        %v1007 = vlaneseq
        %v1008 = vshrl.u32 %v1007, 7
        %v1009 = vsub.s32 %v1006, %v1008
        %v1010 = vrot.slane %v996, %v1009
        %v1011 = vcombine.high %v987, 0.0
        %v1012 = vcombine.high %v994, 0.0
        %v1013 = vcombine.high %v1003, 0.0
        %v1014 = vcombine.high %v1010, 0.0
        %v1015 = vcombine.low %v987, %v994
        %v1017 = vunpack.c.l.s4 1983009808
        %v1018 = vunpack.c.0.s8 %v1017
        %v1019 = vlaneseq
        %v1020 = vshrl.u32 %v1019, 7
        %v1021 = vsub.s32 %v1018, %v1020
        %v1022 = vrot.slane %v1015, %v1021
        %v1023 = vcombine.low %v1011, %v1012
        %v1025 = vunpack.c.l.s4 1983009808
        %v1026 = vunpack.c.0.s8 %v1025
        %v1027 = vlaneseq
        %v1028 = vshrl.u32 %v1027, 7
        %v1029 = vsub.s32 %v1026, %v1028
        %v1030 = vrot.slane %v1023, %v1029
        %v1031 = vcombine.low %v1003, %v1010
        %v1033 = vunpack.c.l.s4 1983009808
        %v1034 = vunpack.c.0.s8 %v1033
        %v1035 = vlaneseq
        %v1036 = vshrl.u32 %v1035, 7
        %v1037 = vsub.s32 %v1034, %v1036
        %v1038 = vrot.slane %v1031, %v1037
        %v1039 = vcombine.low %v1013, %v1014
        %v1041 = vunpack.c.l.s4 1983009808
        %v1042 = vunpack.c.0.s8 %v1041
        %v1043 = vlaneseq
        %v1044 = vshrl.u32 %v1043, 7
        %v1045 = vsub.s32 %v1042, %v1044
        %v1046 = vrot.slane %v1039, %v1045
        %v1047 = vcombine.low %v1022, %v1030
        %v1048 = vcombine.high %v1022, %v1030
        %v1050 = vunpack.c.l.s4 1934713408
        %v1051 = vunpack.c.0.s8 %v1050
        %v1052 = vlaneseq
        %v1053 = vshrl.u32 %v1052, 7
        %v1054 = vsub.s32 %v1051, %v1053
        %v1055 = vrot.slane %v1047, %v1054
        %v1057 = vunpack.c.l.s4 1934713408
        %v1058 = vunpack.c.0.s8 %v1057
        %v1059 = vlaneseq
        %v1060 = vshrl.u32 %v1059, 7
        %v1061 = vsub.s32 %v1058, %v1060
        %v1062 = vrot.slane %v1048, %v1061
        %v1063 = vcombine.low %v1038, %v1046
        %v1064 = vcombine.high %v1038, %v1046
        %v1066 = vunpack.c.l.s4 1934713408
        %v1067 = vunpack.c.0.s8 %v1066
        %v1068 = vlaneseq
        %v1069 = vshrl.u32 %v1068, 7
        %v1070 = vsub.s32 %v1067, %v1069
        %v1071 = vrot.slane %v1063, %v1070
        %v1073 = vunpack.c.l.s4 1934713408
        %v1074 = vunpack.c.0.s8 %v1073
        %v1075 = vlaneseq
        %v1076 = vshrl.u32 %v1075, 7
        %v1077 = vsub.s32 %v1074, %v1076
        %v1078 = vrot.slane %v1064, %v1077
        %v1079 = vcombine.low %v1055, %v1071
        %v1080 = vcombine.high %v1055, %v1071
        %v1081 = vcombine.low %v1062, %v1078
        %v1082 = vcombine.high %v1062, %v1078
        %v1083 = vpack.c.bf16 %v1079, %v1079
        %v1084 = vpack.c.bf16 %v1080, %v1080
        %v1085 = vpack.c.bf16 %v1081, %v1081
        %v1086 = vpack.c.bf16 %v1082, %v1082
        %1088 = vrot.lane.b32.xlu0 %v780, 120
        %v1089 = vpop.permute.xlu0 %1088
        %1091 = vrot.lane.b32.xlu0 %v780, 112
        %v1092 = vpop.permute.xlu0 %1091
        %1094 = vrot.lane.b32.xlu0 %v780, 104
        %v1095 = vpop.permute.xlu0 %1094
        %v1097 = vcombine.low %v780, %v1092
        %v1098 = vcombine.high %v780, %v1092
        %v1100 = vunpack.c.l.s4 1983009808
        %v1101 = vunpack.c.0.s8 %v1100
        %v1102 = vlaneseq
        %v1103 = vshrl.u32 %v1102, 7
        %v1104 = vsub.s32 %v1101, %v1103
        %v1105 = vrot.slane %v1097, %v1104
        %v1107 = vunpack.c.l.s4 1983009808
        %v1108 = vunpack.c.0.s8 %v1107
        %v1109 = vlaneseq
        %v1110 = vshrl.u32 %v1109, 7
        %v1111 = vsub.s32 %v1108, %v1110
        %v1112 = vrot.slane %v1098, %v1111
        %v1113 = vcombine.low %v1089, %v1095
        %v1114 = vcombine.high %v1089, %v1095
        %v1116 = vunpack.c.l.s4 1983009808
        %v1117 = vunpack.c.0.s8 %v1116
        %v1118 = vlaneseq
        %v1119 = vshrl.u32 %v1118, 7
        %v1120 = vsub.s32 %v1117, %v1119
        %v1121 = vrot.slane %v1113, %v1120
        %v1123 = vunpack.c.l.s4 1983009808
        %v1124 = vunpack.c.0.s8 %v1123
        %v1125 = vlaneseq
        %v1126 = vshrl.u32 %v1125, 7
        %v1127 = vsub.s32 %v1124, %v1126
        %v1128 = vrot.slane %v1114, %v1127
        %v1129 = vcombine.low %v1105, %v1121
        %v1130 = vcombine.high %v1105, %v1121
        %v1132 = vunpack.c.l.s4 1934713408
        %v1133 = vunpack.c.0.s8 %v1132
        %v1134 = vlaneseq
        %v1135 = vshrl.u32 %v1134, 7
        %v1136 = vsub.s32 %v1133, %v1135
        %v1137 = vrot.slane %v1129, %v1136
        %v1139 = vunpack.c.l.s4 1934713408
        %v1140 = vunpack.c.0.s8 %v1139
        %v1141 = vlaneseq
        %v1142 = vshrl.u32 %v1141, 7
        %v1143 = vsub.s32 %v1140, %v1142
        %v1144 = vrot.slane %v1130, %v1143
        %v1145 = vcombine.low %v1112, %v1128
        %v1146 = vcombine.high %v1112, %v1128
        %v1148 = vunpack.c.l.s4 1934713408
        %v1149 = vunpack.c.0.s8 %v1148
        %v1150 = vlaneseq
        %v1151 = vshrl.u32 %v1150, 7
        %v1152 = vsub.s32 %v1149, %v1151
        %v1153 = vrot.slane %v1145, %v1152
        %v1155 = vunpack.c.l.s4 1934713408
        %v1156 = vunpack.c.0.s8 %v1155
        %v1157 = vlaneseq
        %v1158 = vshrl.u32 %v1157, 7
        %v1159 = vsub.s32 %v1156, %v1158
        %v1160 = vrot.slane %v1146, %v1159
        %v1161 = vcombine.high %v1137, 0.0
        %v1162 = vcombine.high %v1144, 0.0
        %v1163 = vcombine.high %v1153, 0.0
        %v1164 = vcombine.high %v1160, 0.0
        %v1165 = vcombine.low %v1137, %v1144
        %v1167 = vunpack.c.l.s4 1983009808
        %v1168 = vunpack.c.0.s8 %v1167
        %v1169 = vlaneseq
        %v1170 = vshrl.u32 %v1169, 7
        %v1171 = vsub.s32 %v1168, %v1170
        %v1172 = vrot.slane %v1165, %v1171
        %v1173 = vcombine.low %v1161, %v1162
        %v1175 = vunpack.c.l.s4 1983009808
        %v1176 = vunpack.c.0.s8 %v1175
        %v1177 = vlaneseq
        %v1178 = vshrl.u32 %v1177, 7
        %v1179 = vsub.s32 %v1176, %v1178
        %v1180 = vrot.slane %v1173, %v1179
        %v1181 = vcombine.low %v1153, %v1160
        %v1183 = vunpack.c.l.s4 1983009808
        %v1184 = vunpack.c.0.s8 %v1183
        %v1185 = vlaneseq
        %v1186 = vshrl.u32 %v1185, 7
        %v1187 = vsub.s32 %v1184, %v1186
        %v1188 = vrot.slane %v1181, %v1187
        %v1189 = vcombine.low %v1163, %v1164
        %v1191 = vunpack.c.l.s4 1983009808
        %v1192 = vunpack.c.0.s8 %v1191
        %v1193 = vlaneseq
        %v1194 = vshrl.u32 %v1193, 7
        %v1195 = vsub.s32 %v1192, %v1194
        %v1196 = vrot.slane %v1189, %v1195
        %v1197 = vcombine.low %v1172, %v1180
        %v1198 = vcombine.high %v1172, %v1180
        %v1200 = vunpack.c.l.s4 1934713408
        %v1201 = vunpack.c.0.s8 %v1200
        %v1202 = vlaneseq
        %v1203 = vshrl.u32 %v1202, 7
        %v1204 = vsub.s32 %v1201, %v1203
        %v1205 = vrot.slane %v1197, %v1204
        %v1207 = vunpack.c.l.s4 1934713408
        %v1208 = vunpack.c.0.s8 %v1207
        %v1209 = vlaneseq
        %v1210 = vshrl.u32 %v1209, 7
        %v1211 = vsub.s32 %v1208, %v1210
        %v1212 = vrot.slane %v1198, %v1211
        %v1213 = vcombine.low %v1188, %v1196
        %v1214 = vcombine.high %v1188, %v1196
        %v1216 = vunpack.c.l.s4 1934713408
        %v1217 = vunpack.c.0.s8 %v1216
        %v1218 = vlaneseq
        %v1219 = vshrl.u32 %v1218, 7
        %v1220 = vsub.s32 %v1217, %v1219
        %v1221 = vrot.slane %v1213, %v1220
        %v1223 = vunpack.c.l.s4 1934713408
        %v1224 = vunpack.c.0.s8 %v1223
        %v1225 = vlaneseq
        %v1226 = vshrl.u32 %v1225, 7
        %v1227 = vsub.s32 %v1224, %v1226
        %v1228 = vrot.slane %v1214, %v1227
        %v1229 = vcombine.low %v1205, %v1221
        %v1230 = vcombine.high %v1205, %v1221
        %v1231 = vcombine.low %v1212, %v1228
        %v1232 = vcombine.high %v1212, %v1228
        %v1233 = vpack.c.bf16 %v1229, %v1229
        %v1234 = vpack.c.bf16 %v1230, %v1230
        %v1235 = vpack.c.bf16 %v1231, %v1231
        %v1236 = vpack.c.bf16 %v1232, %v1232
        %vm1237 = vcmask 64512
        %v1239 = vsel %vm1237, %v933, 0
        %v1242 = vsel %vm1237, %v1083, 0
        %1244 = vmatprep.subr.bf16.mxu0 0
        %1245 = vmatpush1.bf16.xpose.msra.mxu0 %v1242
        %1246 = vmatprep.subr.bf16.mxu0 0
        %1247 = vmatpush1.bf16.xpose.msra.mxu0 0
        %1248 = vmatprep.subr.bf16.mxu0 0
        %1249 = vmatpush1.bf16.xpose.msra.mxu0 0
        %1250 = vmatprep.subr.bf16.mxu0 0
        %1251 = vmatpush1.bf16.xpose.msra.mxu0 0
        %1252 = vmatprep.subr.bf16.mxu0 0
        %1253 = vmatpush1.bf16.xpose.msra.mxu0 0
        %1254 = vmatprep.subr.bf16.mxu0 0
        %1255 = vmatpush1.bf16.xpose.msra.mxu0 0
        %1256 = vmatprep.subr.bf16.mxu0 0
        %1257 = vmatpush1.bf16.xpose.msra.mxu0 0
        %1258 = vmatprep.subr.bf16.mxu0 0
        %1259 = vmatpush1.bf16.xpose.msra.mxu0 0
        %1260 = vmatprep.subr.bf16.mxu0 0
        %1261 = vmatpush1.bf16.xpose.msra.mxu0 0
        %1262 = vmatprep.subr.bf16.mxu0 0
        %1263 = vmatpush1.bf16.xpose.msra.mxu0 0
        %1264 = vmatprep.subr.bf16.mxu0 0
        %1265 = vmatpush1.bf16.xpose.msra.mxu0 0
        %1266 = vmatprep.subr.bf16.mxu0 0
        %1267 = vmatpush1.bf16.xpose.msra.mxu0 0
        %1268 = vmatprep.subr.bf16.mxu0 0
        %1269 = vmatpush1.bf16.xpose.msra.mxu0 0
        %1270 = vmatprep.subr.bf16.mxu0 0
        %1271 = vmatpush1.bf16.xpose.msra.mxu0 0
        %1272 = vmatprep.subr.bf16.mxu0 0
        %1273 = vmatpush1.bf16.xpose.msra.mxu0 0
        %1274 = vmatprep.subr.bf16.mxu0 0
        %1275 = vmatpush1.bf16.xpose.msra.mxu0 0
        %1276 = vmatprep.mubr.bf16.mxu0 0
        %1277 = vmatmul.mubr.bf16.gmra.mrb[0].mxu0 %v1239
        %v1278 = vpop.f32.mrb[0].mxu0
        %v1279 = vadd.f32 %v786, %v1278
        %v1280 = vpop.f32.mrb[0].mxu0
        %v1281 = vpop.f32.mrb[0].mxu0
        %v1282 = vpop.f32.mrb[0].mxu0
        %1283 = vdwg.mxu0
        %v1285 = vsel %vm1237, %v934, 0
        %v1288 = vsel %vm1237, %v1084, 0
        %1290 = vmatprep.subr.bf16.mxu0 0
        %1291 = vmatpush1.bf16.xpose.msra.mxu0 %v1288
        %1292 = vmatprep.subr.bf16.mxu0 0
        %1293 = vmatpush1.bf16.xpose.msra.mxu0 0
        %1294 = vmatprep.subr.bf16.mxu0 0
        %1295 = vmatpush1.bf16.xpose.msra.mxu0 0
        %1296 = vmatprep.subr.bf16.mxu0 0
        %1297 = vmatpush1.bf16.xpose.msra.mxu0 0
        %1298 = vmatprep.subr.bf16.mxu0 0
        %1299 = vmatpush1.bf16.xpose.msra.mxu0 0
        %1300 = vmatprep.subr.bf16.mxu0 0
        %1301 = vmatpush1.bf16.xpose.msra.mxu0 0
        %1302 = vmatprep.subr.bf16.mxu0 0
        %1303 = vmatpush1.bf16.xpose.msra.mxu0 0
        %1304 = vmatprep.subr.bf16.mxu0 0
        %1305 = vmatpush1.bf16.xpose.msra.mxu0 0
        %1306 = vmatprep.subr.bf16.mxu0 0
        %1307 = vmatpush1.bf16.xpose.msra.mxu0 0
        %1308 = vmatprep.subr.bf16.mxu0 0
        %1309 = vmatpush1.bf16.xpose.msra.mxu0 0
        %1310 = vmatprep.subr.bf16.mxu0 0
        %1311 = vmatpush1.bf16.xpose.msra.mxu0 0
        %1312 = vmatprep.subr.bf16.mxu0 0
        %1313 = vmatpush1.bf16.xpose.msra.mxu0 0
        %1314 = vmatprep.subr.bf16.mxu0 0
        %1315 = vmatpush1.bf16.xpose.msra.mxu0 0
        %1316 = vmatprep.subr.bf16.mxu0 0
        %1317 = vmatpush1.bf16.xpose.msra.mxu0 0
        %1318 = vmatprep.subr.bf16.mxu0 0
        %1319 = vmatpush1.bf16.xpose.msra.mxu0 0
        %1320 = vmatprep.subr.bf16.mxu0 0
        %1321 = vmatpush1.bf16.xpose.msra.mxu0 0
        %1322 = vmatprep.mubr.bf16.mxu0 0
        %1323 = vmatmul.mubr.bf16.gmra.mrb[0].mxu0 %v1285
        %v1324 = vpop.f32.mrb[0].mxu0
        %v1325 = vadd.f32 %v786, %v1324
        %v1326 = vpop.f32.mrb[0].mxu0
        %v1327 = vpop.f32.mrb[0].mxu0
        %v1328 = vpop.f32.mrb[0].mxu0
        %1329 = vdwg.mxu0
        %v1331 = vsel %vm1237, %v935, 0
        %v1334 = vsel %vm1237, %v1085, 0
        %1336 = vmatprep.subr.bf16.mxu0 0
        %1337 = vmatpush1.bf16.xpose.msra.mxu0 %v1334
        %1338 = vmatprep.subr.bf16.mxu0 0
        %1339 = vmatpush1.bf16.xpose.msra.mxu0 0
        %1340 = vmatprep.subr.bf16.mxu0 0
        %1341 = vmatpush1.bf16.xpose.msra.mxu0 0
        %1342 = vmatprep.subr.bf16.mxu0 0
        %1343 = vmatpush1.bf16.xpose.msra.mxu0 0
        %1344 = vmatprep.subr.bf16.mxu0 0
        %1345 = vmatpush1.bf16.xpose.msra.mxu0 0
        %1346 = vmatprep.subr.bf16.mxu0 0
        %1347 = vmatpush1.bf16.xpose.msra.mxu0 0
        %1348 = vmatprep.subr.bf16.mxu0 0
        %1349 = vmatpush1.bf16.xpose.msra.mxu0 0
        %1350 = vmatprep.subr.bf16.mxu0 0
        %1351 = vmatpush1.bf16.xpose.msra.mxu0 0
        %1352 = vmatprep.subr.bf16.mxu0 0
        %1353 = vmatpush1.bf16.xpose.msra.mxu0 0
        %1354 = vmatprep.subr.bf16.mxu0 0
        %1355 = vmatpush1.bf16.xpose.msra.mxu0 0
        %1356 = vmatprep.subr.bf16.mxu0 0
        %1357 = vmatpush1.bf16.xpose.msra.mxu0 0
        %1358 = vmatprep.subr.bf16.mxu0 0
        %1359 = vmatpush1.bf16.xpose.msra.mxu0 0
        %1360 = vmatprep.subr.bf16.mxu0 0
        %1361 = vmatpush1.bf16.xpose.msra.mxu0 0
        %1362 = vmatprep.subr.bf16.mxu0 0
        %1363 = vmatpush1.bf16.xpose.msra.mxu0 0
        %1364 = vmatprep.subr.bf16.mxu0 0
        %1365 = vmatpush1.bf16.xpose.msra.mxu0 0
        %1366 = vmatprep.subr.bf16.mxu0 0
        %1367 = vmatpush1.bf16.xpose.msra.mxu0 0
        %1368 = vmatprep.mubr.bf16.mxu0 0
        %1369 = vmatmul.mubr.bf16.gmra.mrb[0].mxu0 %v1331
        %v1370 = vpop.f32.mrb[0].mxu0
        %v1371 = vadd.f32 %v786, %v1370
        %v1372 = vpop.f32.mrb[0].mxu0
        %v1373 = vpop.f32.mrb[0].mxu0
        %v1374 = vpop.f32.mrb[0].mxu0
        %1375 = vdwg.mxu0
        %v1377 = vsel %vm1237, %v936, 0
        %v1380 = vsel %vm1237, %v1086, 0
        %1382 = vmatprep.subr.bf16.mxu0 0
        %1383 = vmatpush1.bf16.xpose.msra.mxu0 %v1380
        %1384 = vmatprep.subr.bf16.mxu0 0
        %1385 = vmatpush1.bf16.xpose.msra.mxu0 0
        %1386 = vmatprep.subr.bf16.mxu0 0
        %1387 = vmatpush1.bf16.xpose.msra.mxu0 0
        %1388 = vmatprep.subr.bf16.mxu0 0
        %1389 = vmatpush1.bf16.xpose.msra.mxu0 0
        %1390 = vmatprep.subr.bf16.mxu0 0
        %1391 = vmatpush1.bf16.xpose.msra.mxu0 0
        %1392 = vmatprep.subr.bf16.mxu0 0
        %1393 = vmatpush1.bf16.xpose.msra.mxu0 0
        %1394 = vmatprep.subr.bf16.mxu0 0
        %1395 = vmatpush1.bf16.xpose.msra.mxu0 0
        %1396 = vmatprep.subr.bf16.mxu0 0
        %1397 = vmatpush1.bf16.xpose.msra.mxu0 0
        %1398 = vmatprep.subr.bf16.mxu0 0
        %1399 = vmatpush1.bf16.xpose.msra.mxu0 0
        %1400 = vmatprep.subr.bf16.mxu0 0
        %1401 = vmatpush1.bf16.xpose.msra.mxu0 0
        %1402 = vmatprep.subr.bf16.mxu0 0
        %1403 = vmatpush1.bf16.xpose.msra.mxu0 0
        %1404 = vmatprep.subr.bf16.mxu0 0
        %1405 = vmatpush1.bf16.xpose.msra.mxu0 0
        %1406 = vmatprep.subr.bf16.mxu0 0
        %1407 = vmatpush1.bf16.xpose.msra.mxu0 0
        %1408 = vmatprep.subr.bf16.mxu0 0
        %1409 = vmatpush1.bf16.xpose.msra.mxu0 0
        %1410 = vmatprep.subr.bf16.mxu0 0
        %1411 = vmatpush1.bf16.xpose.msra.mxu0 0
        %1412 = vmatprep.subr.bf16.mxu0 0
        %1413 = vmatpush1.bf16.xpose.msra.mxu0 0
        %1414 = vmatprep.mubr.bf16.mxu0 0
        %1415 = vmatmul.mubr.bf16.gmra.mrb[0].mxu0 %v1377
        %v1416 = vpop.f32.mrb[0].mxu0
        %v1417 = vadd.f32 %v786, %v1416
        %v1418 = vpop.f32.mrb[0].mxu0
        %v1419 = vpop.f32.mrb[0].mxu0
        %v1420 = vpop.f32.mrb[0].mxu0
        %1421 = vdwg.mxu0
        %v1422 = vsel %vm1237, %v1279, -inf
        %1423 = vmax.xlane.f32.xlu0 %v1422
        %v1424 = vpop.xlane.xlu0 %1423
        %v1425 = vsel %vm1237, %v1325, -inf
        %1426 = vmax.xlane.f32.xlu0 %v1425
        %v1427 = vpop.xlane.xlu0 %1426
        %v1428 = vsel %vm1237, %v1371, -inf
        %1429 = vmax.xlane.f32.xlu0 %v1428
        %v1430 = vpop.xlane.xlu0 %1429
        %v1431 = vsel %vm1237, %v1417, -inf
        %1432 = vmax.xlane.f32.xlu0 %v1431
        %v1433 = vpop.xlane.xlu0 %1432
        %v1434 = vsub.f32 %v1279, %v1424
        %v1435 = vsub.f32 %v1325, %v1427
        %v1436 = vsub.f32 %v1371, %v1430
        %v1437 = vsub.f32 %v1417, %v1433
        %v1438 = vmul.f32 %v1434, 1.442695
        %v1439 = vpow.pop %v1438
        %v1440 = vmul.f32 %v1435, 1.442695
        %v1441 = vpow.pop %v1440
        %v1442 = vmul.f32 %v1436, 1.442695
        %v1443 = vpow.pop %v1442
        %v1444 = vmul.f32 %v1437, 1.442695
        %v1445 = vpow.pop %v1444
        %v1446 = vsel %vm1237, %v1439, 0.0
        %1447 = vadd.xlane.f32.xlu0 %v1446
        %v1448 = vpop.xlane.xlu0 %1447
        %v1449 = vsel %vm1237, %v1441, 0.0
        %1450 = vadd.xlane.f32.xlu0 %v1449
        %v1451 = vpop.xlane.xlu0 %1450
        %v1452 = vsel %vm1237, %v1443, 0.0
        %1453 = vadd.xlane.f32.xlu0 %v1452
        %v1454 = vpop.xlane.xlu0 %1453
        %v1455 = vsel %vm1237, %v1445, 0.0
        %1456 = vadd.xlane.f32.xlu0 %v1455
        %v1457 = vpop.xlane.xlu0 %1456
        %v1458 = vrcp.pop %v1448
        %v1459 = vrcp.pop %v1451
        %v1460 = vrcp.pop %v1454
        %v1461 = vrcp.pop %v1457
        %v1462 = vmul.f32 %v1439, %v1458
        %v1463 = vmul.f32 %v1441, %v1459
        %v1464 = vmul.f32 %v1443, %v1460
        %v1465 = vmul.f32 %v1445, %v1461
        %v1466 = vpack.c.bf16 %v1462, %v1462
        %v1467 = vpack.c.bf16 %v1463, %v1463
        %v1468 = vpack.c.bf16 %v1464, %v1464
        %v1469 = vpack.c.bf16 %v1465, %v1465
        %v1471 = vsel %vm1237, %v1466, 0
        %vm1473 = vcmask 1043456
        %v1475 = vsel %vm1473, %v1233, 0
        %1477 = vmatprep.subr.bf16.mxu0 0
        %1478 = vmatpush1.bf16.msra.mxu0 %v1475
        %1479 = vmatprep.subr.bf16.mxu0 0
        %1480 = vmatpush1.bf16.msra.mxu0 0
        %1481 = vmatprep.subr.bf16.mxu0 0
        %1482 = vmatpush1.bf16.msra.mxu0 0
        %1483 = vmatprep.subr.bf16.mxu0 0
        %1484 = vmatpush1.bf16.msra.mxu0 0
        %1485 = vmatprep.subr.bf16.mxu0 0
        %1486 = vmatpush1.bf16.msra.mxu0 0
        %1487 = vmatprep.subr.bf16.mxu0 0
        %1488 = vmatpush1.bf16.msra.mxu0 0
        %1489 = vmatprep.subr.bf16.mxu0 0
        %1490 = vmatpush1.bf16.msra.mxu0 0
        %1491 = vmatprep.subr.bf16.mxu0 0
        %1492 = vmatpush1.bf16.msra.mxu0 0
        %1493 = vmatprep.subr.bf16.mxu0 0
        %1494 = vmatpush1.bf16.msra.mxu0 0
        %1495 = vmatprep.subr.bf16.mxu0 0
        %1496 = vmatpush1.bf16.msra.mxu0 0
        %1497 = vmatprep.subr.bf16.mxu0 0
        %1498 = vmatpush1.bf16.msra.mxu0 0
        %1499 = vmatprep.subr.bf16.mxu0 0
        %1500 = vmatpush1.bf16.msra.mxu0 0
        %1501 = vmatprep.subr.bf16.mxu0 0
        %1502 = vmatpush1.bf16.msra.mxu0 0
        %1503 = vmatprep.subr.bf16.mxu0 0
        %1504 = vmatpush1.bf16.msra.mxu0 0
        %1505 = vmatprep.subr.bf16.mxu0 0
        %1506 = vmatpush1.bf16.msra.mxu0 0
        %1507 = vmatprep.subr.bf16.mxu0 0
        %1508 = vmatpush1.bf16.msra.mxu0 0
        %1509 = vmatprep.mubr.bf16.mxu0 0
        %1510 = vmatmul.mubr.bf16.gmra.mrb[0].mxu0 %v1471
        %v1511 = vpop.f32.mrb[0].mxu0
        %v1512 = vadd.f32 0.0, %v1511
        %v1513 = vpop.f32.mrb[0].mxu0
        %v1514 = vpop.f32.mrb[0].mxu0
        %v1515 = vpop.f32.mrb[0].mxu0
        %1516 = vdwg.mxu0
        %v1518 = vsel %vm1237, %v1467, 0
        %v1521 = vsel %vm1473, %v1234, 0
        %1523 = vmatprep.subr.bf16.mxu0 0
        %1524 = vmatpush1.bf16.msra.mxu0 %v1521
        %1525 = vmatprep.subr.bf16.mxu0 0
        %1526 = vmatpush1.bf16.msra.mxu0 0
        %1527 = vmatprep.subr.bf16.mxu0 0
        %1528 = vmatpush1.bf16.msra.mxu0 0
        %1529 = vmatprep.subr.bf16.mxu0 0
        %1530 = vmatpush1.bf16.msra.mxu0 0
        %1531 = vmatprep.subr.bf16.mxu0 0
        %1532 = vmatpush1.bf16.msra.mxu0 0
        %1533 = vmatprep.subr.bf16.mxu0 0
        %1534 = vmatpush1.bf16.msra.mxu0 0
        %1535 = vmatprep.subr.bf16.mxu0 0
        %1536 = vmatpush1.bf16.msra.mxu0 0
        %1537 = vmatprep.subr.bf16.mxu0 0
        %1538 = vmatpush1.bf16.msra.mxu0 0
        %1539 = vmatprep.subr.bf16.mxu0 0
        %1540 = vmatpush1.bf16.msra.mxu0 0
        %1541 = vmatprep.subr.bf16.mxu0 0
        %1542 = vmatpush1.bf16.msra.mxu0 0
        %1543 = vmatprep.subr.bf16.mxu0 0
        %1544 = vmatpush1.bf16.msra.mxu0 0
        %1545 = vmatprep.subr.bf16.mxu0 0
        %1546 = vmatpush1.bf16.msra.mxu0 0
        %1547 = vmatprep.subr.bf16.mxu0 0
        %1548 = vmatpush1.bf16.msra.mxu0 0
        %1549 = vmatprep.subr.bf16.mxu0 0
        %1550 = vmatpush1.bf16.msra.mxu0 0
        %1551 = vmatprep.subr.bf16.mxu0 0
        %1552 = vmatpush1.bf16.msra.mxu0 0
        %1553 = vmatprep.subr.bf16.mxu0 0
        %1554 = vmatpush1.bf16.msra.mxu0 0
        %1555 = vmatprep.mubr.bf16.mxu0 0
        %1556 = vmatmul.mubr.bf16.gmra.mrb[0].mxu0 %v1518
        %v1557 = vpop.f32.mrb[0].mxu0
        %v1558 = vadd.f32 0.0, %v1557
        %v1559 = vpop.f32.mrb[0].mxu0
        %v1560 = vpop.f32.mrb[0].mxu0
        %v1561 = vpop.f32.mrb[0].mxu0
        %1562 = vdwg.mxu0
        %v1564 = vsel %vm1237, %v1468, 0
        %v1567 = vsel %vm1473, %v1235, 0
        %1569 = vmatprep.subr.bf16.mxu0 0
        %1570 = vmatpush1.bf16.msra.mxu0 %v1567
        %1571 = vmatprep.subr.bf16.mxu0 0
        %1572 = vmatpush1.bf16.msra.mxu0 0
        %1573 = vmatprep.subr.bf16.mxu0 0
        %1574 = vmatpush1.bf16.msra.mxu0 0
        %1575 = vmatprep.subr.bf16.mxu0 0
        %1576 = vmatpush1.bf16.msra.mxu0 0
        %1577 = vmatprep.subr.bf16.mxu0 0
        %1578 = vmatpush1.bf16.msra.mxu0 0
        %1579 = vmatprep.subr.bf16.mxu0 0
        %1580 = vmatpush1.bf16.msra.mxu0 0
        %1581 = vmatprep.subr.bf16.mxu0 0
        %1582 = vmatpush1.bf16.msra.mxu0 0
        %1583 = vmatprep.subr.bf16.mxu0 0
        %1584 = vmatpush1.bf16.msra.mxu0 0
        %1585 = vmatprep.subr.bf16.mxu0 0
        %1586 = vmatpush1.bf16.msra.mxu0 0
        %1587 = vmatprep.subr.bf16.mxu0 0
        %1588 = vmatpush1.bf16.msra.mxu0 0
        %1589 = vmatprep.subr.bf16.mxu0 0
        %1590 = vmatpush1.bf16.msra.mxu0 0
        %1591 = vmatprep.subr.bf16.mxu0 0
        %1592 = vmatpush1.bf16.msra.mxu0 0
        %1593 = vmatprep.subr.bf16.mxu0 0
        %1594 = vmatpush1.bf16.msra.mxu0 0
        %1595 = vmatprep.subr.bf16.mxu0 0
        %1596 = vmatpush1.bf16.msra.mxu0 0
        %1597 = vmatprep.subr.bf16.mxu0 0
        %1598 = vmatpush1.bf16.msra.mxu0 0
        %1599 = vmatprep.subr.bf16.mxu0 0
        %1600 = vmatpush1.bf16.msra.mxu0 0
        %1601 = vmatprep.mubr.bf16.mxu0 0
        %1602 = vmatmul.mubr.bf16.gmra.mrb[0].mxu0 %v1564
        %v1603 = vpop.f32.mrb[0].mxu0
        %v1604 = vadd.f32 0.0, %v1603
        %v1605 = vpop.f32.mrb[0].mxu0
        %v1606 = vpop.f32.mrb[0].mxu0
        %v1607 = vpop.f32.mrb[0].mxu0
        %1608 = vdwg.mxu0
        %v1610 = vsel %vm1237, %v1469, 0
        %v1613 = vsel %vm1473, %v1236, 0
        %1615 = vmatprep.subr.bf16.mxu0 0
        %1616 = vmatpush1.bf16.msra.mxu0 %v1613
        %1617 = vmatprep.subr.bf16.mxu0 0
        %1618 = vmatpush1.bf16.msra.mxu0 0
        %1619 = vmatprep.subr.bf16.mxu0 0
        %1620 = vmatpush1.bf16.msra.mxu0 0
        %1621 = vmatprep.subr.bf16.mxu0 0
        %1622 = vmatpush1.bf16.msra.mxu0 0
        %1623 = vmatprep.subr.bf16.mxu0 0
        %1624 = vmatpush1.bf16.msra.mxu0 0
        %1625 = vmatprep.subr.bf16.mxu0 0
        %1626 = vmatpush1.bf16.msra.mxu0 0
        %1627 = vmatprep.subr.bf16.mxu0 0
        %1628 = vmatpush1.bf16.msra.mxu0 0
        %1629 = vmatprep.subr.bf16.mxu0 0
        %1630 = vmatpush1.bf16.msra.mxu0 0
        %1631 = vmatprep.subr.bf16.mxu0 0
        %1632 = vmatpush1.bf16.msra.mxu0 0
        %1633 = vmatprep.subr.bf16.mxu0 0
        %1634 = vmatpush1.bf16.msra.mxu0 0
        %1635 = vmatprep.subr.bf16.mxu0 0
        %1636 = vmatpush1.bf16.msra.mxu0 0
        %1637 = vmatprep.subr.bf16.mxu0 0
        %1638 = vmatpush1.bf16.msra.mxu0 0
        %1639 = vmatprep.subr.bf16.mxu0 0
        %1640 = vmatpush1.bf16.msra.mxu0 0
        %1641 = vmatprep.subr.bf16.mxu0 0
        %1642 = vmatpush1.bf16.msra.mxu0 0
        %1643 = vmatprep.subr.bf16.mxu0 0
        %1644 = vmatpush1.bf16.msra.mxu0 0
        %1645 = vmatprep.subr.bf16.mxu0 0
        %1646 = vmatpush1.bf16.msra.mxu0 0
        %1647 = vmatprep.mubr.bf16.mxu0 0
        %1648 = vmatmul.mubr.bf16.gmra.mrb[0].mxu0 %v1610
        %v1649 = vpop.f32.mrb[0].mxu0
        %v1650 = vadd.f32 0.0, %v1649
        %v1651 = vpop.f32.mrb[0].mxu0
        %v1652 = vpop.f32.mrb[0].mxu0
        %v1653 = vpop.f32.mrb[0].mxu0
        %1654 = vdwg.mxu0
        %v1655 = vcombine.low %v1512, %v1604
        %v1656 = vcombine.high %v1512, %v1604
        %v1658 = vunpack.c.l.s4 1983009808
        %v1659 = vunpack.c.0.s8 %v1658
        %v1660 = vlaneseq
        %v1661 = vshrl.u32 %v1660, 7
        %v1662 = vsub.s32 %v1659, %v1661
        %v1663 = vrot.slane %v1655, %v1662
        %v1665 = vunpack.c.l.s4 1983009808
        %v1666 = vunpack.c.0.s8 %v1665
        %v1667 = vlaneseq
        %v1668 = vshrl.u32 %v1667, 7
        %v1669 = vsub.s32 %v1666, %v1668
        %v1670 = vrot.slane %v1656, %v1669
        %v1671 = vcombine.low %v1558, %v1650
        %v1672 = vcombine.high %v1558, %v1650
        %v1674 = vunpack.c.l.s4 1983009808
        %v1675 = vunpack.c.0.s8 %v1674
        %v1676 = vlaneseq
        %v1677 = vshrl.u32 %v1676, 7
        %v1678 = vsub.s32 %v1675, %v1677
        %v1679 = vrot.slane %v1671, %v1678
        %v1681 = vunpack.c.l.s4 1983009808
        %v1682 = vunpack.c.0.s8 %v1681
        %v1683 = vlaneseq
        %v1684 = vshrl.u32 %v1683, 7
        %v1685 = vsub.s32 %v1682, %v1684
        %v1686 = vrot.slane %v1672, %v1685
        %v1687 = vcombine.low %v1663, %v1679
        %v1688 = vcombine.high %v1663, %v1679
        %v1690 = vunpack.c.l.s4 1934713408
        %v1691 = vunpack.c.0.s8 %v1690
        %v1692 = vlaneseq
        %v1693 = vshrl.u32 %v1692, 7
        %v1694 = vsub.s32 %v1691, %v1693
        %v1695 = vrot.slane %v1687, %v1694
        %v1697 = vunpack.c.l.s4 1934713408
        %v1698 = vunpack.c.0.s8 %v1697
        %v1699 = vlaneseq
        %v1700 = vshrl.u32 %v1699, 7
        %v1701 = vsub.s32 %v1698, %v1700
        %v1702 = vrot.slane %v1688, %v1701
        %v1703 = vcombine.low %v1670, %v1686
        %v1704 = vcombine.high %v1670, %v1686
        %v1706 = vunpack.c.l.s4 1934713408
        %v1707 = vunpack.c.0.s8 %v1706
        %v1708 = vlaneseq
        %v1709 = vshrl.u32 %v1708, 7
        %v1710 = vsub.s32 %v1707, %v1709
        %v1711 = vrot.slane %v1703, %v1710
        %v1713 = vunpack.c.l.s4 1934713408
        %v1714 = vunpack.c.0.s8 %v1713
        %v1715 = vlaneseq
        %v1716 = vshrl.u32 %v1715, 7
        %v1717 = vsub.s32 %v1714, %v1716
        %v1718 = vrot.slane %v1704, %v1717
        %v1719 = vcombine.high %v1695, 0.0
        %v1720 = vcombine.high %v1702, 0.0
        %v1721 = vcombine.high %v1711, 0.0
        %v1722 = vcombine.high %v1718, 0.0
        %v1723 = vcombine.low %v1695, %v1702
        %v1725 = vunpack.c.l.s4 1983009808
        %v1726 = vunpack.c.0.s8 %v1725
        %v1727 = vlaneseq
        %v1728 = vshrl.u32 %v1727, 7
        %v1729 = vsub.s32 %v1726, %v1728
        %v1730 = vrot.slane %v1723, %v1729
        %v1731 = vcombine.low %v1719, %v1720
        %v1733 = vunpack.c.l.s4 1983009808
        %v1734 = vunpack.c.0.s8 %v1733
        %v1735 = vlaneseq
        %v1736 = vshrl.u32 %v1735, 7
        %v1737 = vsub.s32 %v1734, %v1736
        %v1738 = vrot.slane %v1731, %v1737
        %v1739 = vcombine.low %v1711, %v1718
        %v1741 = vunpack.c.l.s4 1983009808
        %v1742 = vunpack.c.0.s8 %v1741
        %v1743 = vlaneseq
        %v1744 = vshrl.u32 %v1743, 7
        %v1745 = vsub.s32 %v1742, %v1744
        %v1746 = vrot.slane %v1739, %v1745
        %v1747 = vcombine.low %v1721, %v1722
        %v1749 = vunpack.c.l.s4 1983009808
        %v1750 = vunpack.c.0.s8 %v1749
        %v1751 = vlaneseq
        %v1752 = vshrl.u32 %v1751, 7
        %v1753 = vsub.s32 %v1750, %v1752
        %v1754 = vrot.slane %v1747, %v1753
        %v1755 = vcombine.low %v1730, %v1738
        %v1756 = vcombine.high %v1730, %v1738
        %v1758 = vunpack.c.l.s4 1934713408
        %v1759 = vunpack.c.0.s8 %v1758
        %v1760 = vlaneseq
        %v1761 = vshrl.u32 %v1760, 7
        %v1762 = vsub.s32 %v1759, %v1761
        %v1763 = vrot.slane %v1755, %v1762
        %v1765 = vunpack.c.l.s4 1934713408
        %v1766 = vunpack.c.0.s8 %v1765
        %v1767 = vlaneseq
        %v1768 = vshrl.u32 %v1767, 7
        %v1769 = vsub.s32 %v1766, %v1768
        %v1770 = vrot.slane %v1756, %v1769
        %v1771 = vcombine.low %v1746, %v1754
        %v1772 = vcombine.high %v1746, %v1754
        %v1774 = vunpack.c.l.s4 1934713408
        %v1775 = vunpack.c.0.s8 %v1774
        %v1776 = vlaneseq
        %v1777 = vshrl.u32 %v1776, 7
        %v1778 = vsub.s32 %v1775, %v1777
        %v1779 = vrot.slane %v1771, %v1778
        %v1781 = vunpack.c.l.s4 1934713408
        %v1782 = vunpack.c.0.s8 %v1781
        %v1783 = vlaneseq
        %v1784 = vshrl.u32 %v1783, 7
        %v1785 = vsub.s32 %v1782, %v1784
        %v1786 = vrot.slane %v1772, %v1785
        %v1787 = vcombine.low %v1763, %v1779
        %v1788 = vcombine.high %v1763, %v1779
        %v1789 = vcombine.low %v1770, %v1786
        %v1790 = vcombine.high %v1770, %v1786
        %1792 = vrot.lane.b32.xlu0 %v1788, 8
        %v1793 = vpop.permute.xlu0 %1792
        %1796 = vrot.lane.b32.xlu0 %v1789, 16
        %v1797 = vpop.permute.xlu0 %1796
        %1800 = vrot.lane.b32.xlu0 %v1790, 24
        %v1801 = vpop.permute.xlu0 %1800
        %v1803 = vsel %vm1237, %v1787, %v1793
        %vm1804 = vcmask 130048
        %v1805 = vsel %vm1804, %v1803, %v1797
        %vm1806 = vcmask 195584
        %v1807 = vsel %vm1806, %v1805, %v1801
        %1809 = vrot.lane.b32.xlu0 %v663, 120
        %v1810 = vpop.permute.xlu0 %1809
        %1812 = vrot.lane.b32.xlu0 %v663, 112
        %v1813 = vpop.permute.xlu0 %1812
        %1815 = vrot.lane.b32.xlu0 %v663, 104
        %v1816 = vpop.permute.xlu0 %1815
        %v1818 = vcombine.low %v663, %v1813
        %v1819 = vcombine.high %v663, %v1813
        %v1821 = vunpack.c.l.s4 1983009808
        %v1822 = vunpack.c.0.s8 %v1821
        %v1823 = vlaneseq
        %v1824 = vshrl.u32 %v1823, 7
        %v1825 = vsub.s32 %v1822, %v1824
        %v1826 = vrot.slane %v1818, %v1825
        %v1828 = vunpack.c.l.s4 1983009808
        %v1829 = vunpack.c.0.s8 %v1828
        %v1830 = vlaneseq
        %v1831 = vshrl.u32 %v1830, 7
        %v1832 = vsub.s32 %v1829, %v1831
        %v1833 = vrot.slane %v1819, %v1832
        %v1834 = vcombine.low %v1810, %v1816
        %v1835 = vcombine.high %v1810, %v1816
        %v1837 = vunpack.c.l.s4 1983009808
        %v1838 = vunpack.c.0.s8 %v1837
        %v1839 = vlaneseq
        %v1840 = vshrl.u32 %v1839, 7
        %v1841 = vsub.s32 %v1838, %v1840
        %v1842 = vrot.slane %v1834, %v1841
        %v1844 = vunpack.c.l.s4 1983009808
        %v1845 = vunpack.c.0.s8 %v1844
        %v1846 = vlaneseq
        %v1847 = vshrl.u32 %v1846, 7
        %v1848 = vsub.s32 %v1845, %v1847
        %v1849 = vrot.slane %v1835, %v1848
        %v1850 = vcombine.low %v1826, %v1842
        %v1851 = vcombine.high %v1826, %v1842
        %v1853 = vunpack.c.l.s4 1934713408
        %v1854 = vunpack.c.0.s8 %v1853
        %v1855 = vlaneseq
        %v1856 = vshrl.u32 %v1855, 7
        %v1857 = vsub.s32 %v1854, %v1856
        %v1858 = vrot.slane %v1850, %v1857
        %v1860 = vunpack.c.l.s4 1934713408
        %v1861 = vunpack.c.0.s8 %v1860
        %v1862 = vlaneseq
        %v1863 = vshrl.u32 %v1862, 7
        %v1864 = vsub.s32 %v1861, %v1863
        %v1865 = vrot.slane %v1851, %v1864
        %v1866 = vcombine.low %v1833, %v1849
        %v1867 = vcombine.high %v1833, %v1849
        %v1869 = vunpack.c.l.s4 1934713408
        %v1870 = vunpack.c.0.s8 %v1869
        %v1871 = vlaneseq
        %v1872 = vshrl.u32 %v1871, 7
        %v1873 = vsub.s32 %v1870, %v1872
        %v1874 = vrot.slane %v1866, %v1873
        %v1876 = vunpack.c.l.s4 1934713408
        %v1877 = vunpack.c.0.s8 %v1876
        %v1878 = vlaneseq
        %v1879 = vshrl.u32 %v1878, 7
        %v1880 = vsub.s32 %v1877, %v1879
        %v1881 = vrot.slane %v1867, %v1880
        %v1882 = vcombine.high %v1858, 0.0
        %v1883 = vcombine.high %v1865, 0.0
        %v1884 = vcombine.high %v1874, 0.0
        %v1885 = vcombine.high %v1881, 0.0
        %v1886 = vcombine.low %v1858, %v1865
        %v1888 = vunpack.c.l.s4 1983009808
        %v1889 = vunpack.c.0.s8 %v1888
        %v1890 = vlaneseq
        %v1891 = vshrl.u32 %v1890, 7
        %v1892 = vsub.s32 %v1889, %v1891
        %v1893 = vrot.slane %v1886, %v1892
        %v1894 = vcombine.low %v1882, %v1883
        %v1896 = vunpack.c.l.s4 1983009808
        %v1897 = vunpack.c.0.s8 %v1896
        %v1898 = vlaneseq
        %v1899 = vshrl.u32 %v1898, 7
        %v1900 = vsub.s32 %v1897, %v1899
        %v1901 = vrot.slane %v1894, %v1900
        %v1902 = vcombine.low %v1874, %v1881
        %v1904 = vunpack.c.l.s4 1983009808
        %v1905 = vunpack.c.0.s8 %v1904
        %v1906 = vlaneseq
        %v1907 = vshrl.u32 %v1906, 7
        %v1908 = vsub.s32 %v1905, %v1907
        %v1909 = vrot.slane %v1902, %v1908
        %v1910 = vcombine.low %v1884, %v1885
        %v1912 = vunpack.c.l.s4 1983009808
        %v1913 = vunpack.c.0.s8 %v1912
        %v1914 = vlaneseq
        %v1915 = vshrl.u32 %v1914, 7
        %v1916 = vsub.s32 %v1913, %v1915
        %v1917 = vrot.slane %v1910, %v1916
        %v1918 = vcombine.low %v1893, %v1901
        %v1919 = vcombine.high %v1893, %v1901
        %v1921 = vunpack.c.l.s4 1934713408
        %v1922 = vunpack.c.0.s8 %v1921
        %v1923 = vlaneseq
        %v1924 = vshrl.u32 %v1923, 7
        %v1925 = vsub.s32 %v1922, %v1924
        %v1926 = vrot.slane %v1918, %v1925
        %v1928 = vunpack.c.l.s4 1934713408
        %v1929 = vunpack.c.0.s8 %v1928
        %v1930 = vlaneseq
        %v1931 = vshrl.u32 %v1930, 7
        %v1932 = vsub.s32 %v1929, %v1931
        %v1933 = vrot.slane %v1919, %v1932
        %v1934 = vcombine.low %v1909, %v1917
        %v1935 = vcombine.high %v1909, %v1917
        %v1937 = vunpack.c.l.s4 1934713408
        %v1938 = vunpack.c.0.s8 %v1937
        %v1939 = vlaneseq
        %v1940 = vshrl.u32 %v1939, 7
        %v1941 = vsub.s32 %v1938, %v1940
        %v1942 = vrot.slane %v1934, %v1941
        %v1944 = vunpack.c.l.s4 1934713408
        %v1945 = vunpack.c.0.s8 %v1944
        %v1946 = vlaneseq
        %v1947 = vshrl.u32 %v1946, 7
        %v1948 = vsub.s32 %v1945, %v1947
        %v1949 = vrot.slane %v1935, %v1948
        %v1950 = vcombine.low %v1926, %v1942
        %v1951 = vcombine.high %v1926, %v1942
        %v1952 = vcombine.low %v1933, %v1949
        %v1953 = vcombine.high %v1933, %v1949
        %v1954 = vpack.c.bf16 %v1950, %v1950
        %v1955 = vpack.c.bf16 %v1951, %v1951
        %v1956 = vpack.c.bf16 %v1952, %v1952
        %v1957 = vpack.c.bf16 %v1953, %v1953
        %1959 = vrot.lane.b32.xlu0 %v722, 120
        %v1960 = vpop.permute.xlu0 %1959
        %1962 = vrot.lane.b32.xlu0 %v722, 112
        %v1963 = vpop.permute.xlu0 %1962
        %1965 = vrot.lane.b32.xlu0 %v722, 104
        %v1966 = vpop.permute.xlu0 %1965
        %v1968 = vcombine.low %v722, %v1963
        %v1969 = vcombine.high %v722, %v1963
        %v1971 = vunpack.c.l.s4 1983009808
        %v1972 = vunpack.c.0.s8 %v1971
        %v1973 = vlaneseq
        %v1974 = vshrl.u32 %v1973, 7
        %v1975 = vsub.s32 %v1972, %v1974
        %v1976 = vrot.slane %v1968, %v1975
        %v1978 = vunpack.c.l.s4 1983009808
        %v1979 = vunpack.c.0.s8 %v1978
        %v1980 = vlaneseq
        %v1981 = vshrl.u32 %v1980, 7
        %v1982 = vsub.s32 %v1979, %v1981
        %v1983 = vrot.slane %v1969, %v1982
        %v1984 = vcombine.low %v1960, %v1966
        %v1985 = vcombine.high %v1960, %v1966
        %v1987 = vunpack.c.l.s4 1983009808
        %v1988 = vunpack.c.0.s8 %v1987
        %v1989 = vlaneseq
        %v1990 = vshrl.u32 %v1989, 7
        %v1991 = vsub.s32 %v1988, %v1990
        %v1992 = vrot.slane %v1984, %v1991
        %v1994 = vunpack.c.l.s4 1983009808
        %v1995 = vunpack.c.0.s8 %v1994
        %v1996 = vlaneseq
        %v1997 = vshrl.u32 %v1996, 7
        %v1998 = vsub.s32 %v1995, %v1997
        %v1999 = vrot.slane %v1985, %v1998
        %v2000 = vcombine.low %v1976, %v1992
        %v2001 = vcombine.high %v1976, %v1992
        %v2003 = vunpack.c.l.s4 1934713408
        %v2004 = vunpack.c.0.s8 %v2003
        %v2005 = vlaneseq
        %v2006 = vshrl.u32 %v2005, 7
        %v2007 = vsub.s32 %v2004, %v2006
        %v2008 = vrot.slane %v2000, %v2007
        %v2010 = vunpack.c.l.s4 1934713408
        %v2011 = vunpack.c.0.s8 %v2010
        %v2012 = vlaneseq
        %v2013 = vshrl.u32 %v2012, 7
        %v2014 = vsub.s32 %v2011, %v2013
        %v2015 = vrot.slane %v2001, %v2014
        %v2016 = vcombine.low %v1983, %v1999
        %v2017 = vcombine.high %v1983, %v1999
        %v2019 = vunpack.c.l.s4 1934713408
        %v2020 = vunpack.c.0.s8 %v2019
        %v2021 = vlaneseq
        %v2022 = vshrl.u32 %v2021, 7
        %v2023 = vsub.s32 %v2020, %v2022
        %v2024 = vrot.slane %v2016, %v2023
        %v2026 = vunpack.c.l.s4 1934713408
        %v2027 = vunpack.c.0.s8 %v2026
        %v2028 = vlaneseq
        %v2029 = vshrl.u32 %v2028, 7
        %v2030 = vsub.s32 %v2027, %v2029
        %v2031 = vrot.slane %v2017, %v2030
        %v2032 = vcombine.high %v2008, 0.0
        %v2033 = vcombine.high %v2015, 0.0
        %v2034 = vcombine.high %v2024, 0.0
        %v2035 = vcombine.high %v2031, 0.0
        %v2036 = vcombine.low %v2008, %v2015
        %v2038 = vunpack.c.l.s4 1983009808
        %v2039 = vunpack.c.0.s8 %v2038
        %v2040 = vlaneseq
        %v2041 = vshrl.u32 %v2040, 7
        %v2042 = vsub.s32 %v2039, %v2041
        %v2043 = vrot.slane %v2036, %v2042
        %v2044 = vcombine.low %v2032, %v2033
        %v2046 = vunpack.c.l.s4 1983009808
        %v2047 = vunpack.c.0.s8 %v2046
        %v2048 = vlaneseq
        %v2049 = vshrl.u32 %v2048, 7
        %v2050 = vsub.s32 %v2047, %v2049
        %v2051 = vrot.slane %v2044, %v2050
        %v2052 = vcombine.low %v2024, %v2031
        %v2054 = vunpack.c.l.s4 1983009808
        %v2055 = vunpack.c.0.s8 %v2054
        %v2056 = vlaneseq
        %v2057 = vshrl.u32 %v2056, 7
        %v2058 = vsub.s32 %v2055, %v2057
        %v2059 = vrot.slane %v2052, %v2058
        %v2060 = vcombine.low %v2034, %v2035
        %v2062 = vunpack.c.l.s4 1983009808
        %v2063 = vunpack.c.0.s8 %v2062
        %v2064 = vlaneseq
        %v2065 = vshrl.u32 %v2064, 7
        %v2066 = vsub.s32 %v2063, %v2065
        %v2067 = vrot.slane %v2060, %v2066
        %v2068 = vcombine.low %v2043, %v2051
        %v2069 = vcombine.high %v2043, %v2051
        %v2071 = vunpack.c.l.s4 1934713408
        %v2072 = vunpack.c.0.s8 %v2071
        %v2073 = vlaneseq
        %v2074 = vshrl.u32 %v2073, 7
        %v2075 = vsub.s32 %v2072, %v2074
        %v2076 = vrot.slane %v2068, %v2075
        %v2078 = vunpack.c.l.s4 1934713408
        %v2079 = vunpack.c.0.s8 %v2078
        %v2080 = vlaneseq
        %v2081 = vshrl.u32 %v2080, 7
        %v2082 = vsub.s32 %v2079, %v2081
        %v2083 = vrot.slane %v2069, %v2082
        %v2084 = vcombine.low %v2059, %v2067
        %v2085 = vcombine.high %v2059, %v2067
        %v2087 = vunpack.c.l.s4 1934713408
        %v2088 = vunpack.c.0.s8 %v2087
        %v2089 = vlaneseq
        %v2090 = vshrl.u32 %v2089, 7
        %v2091 = vsub.s32 %v2088, %v2090
        %v2092 = vrot.slane %v2084, %v2091
        %v2094 = vunpack.c.l.s4 1934713408
        %v2095 = vunpack.c.0.s8 %v2094
        %v2096 = vlaneseq
        %v2097 = vshrl.u32 %v2096, 7
        %v2098 = vsub.s32 %v2095, %v2097
        %v2099 = vrot.slane %v2085, %v2098
        %v2100 = vcombine.low %v2076, %v2092
        %v2101 = vcombine.high %v2076, %v2092
        %v2102 = vcombine.low %v2083, %v2099
        %v2103 = vcombine.high %v2083, %v2099
        %v2104 = vpack.c.bf16 %v2100, %v2100
        %v2105 = vpack.c.bf16 %v2101, %v2101
        %v2106 = vpack.c.bf16 %v2102, %v2102
        %v2107 = vpack.c.bf16 %v2103, %v2103
        %2109 = vrot.lane.b32.xlu0 %v783, 120
        %v2110 = vpop.permute.xlu0 %2109
        %2112 = vrot.lane.b32.xlu0 %v783, 112
        %v2113 = vpop.permute.xlu0 %2112
        %2115 = vrot.lane.b32.xlu0 %v783, 104
        %v2116 = vpop.permute.xlu0 %2115
        %v2118 = vcombine.low %v783, %v2113
        %v2119 = vcombine.high %v783, %v2113
        %v2121 = vunpack.c.l.s4 1983009808
        %v2122 = vunpack.c.0.s8 %v2121
        %v2123 = vlaneseq
        %v2124 = vshrl.u32 %v2123, 7
        %v2125 = vsub.s32 %v2122, %v2124
        %v2126 = vrot.slane %v2118, %v2125
        %v2128 = vunpack.c.l.s4 1983009808
        %v2129 = vunpack.c.0.s8 %v2128
        %v2130 = vlaneseq
        %v2131 = vshrl.u32 %v2130, 7
        %v2132 = vsub.s32 %v2129, %v2131
        %v2133 = vrot.slane %v2119, %v2132
        %v2134 = vcombine.low %v2110, %v2116
        %v2135 = vcombine.high %v2110, %v2116
        %v2137 = vunpack.c.l.s4 1983009808
        %v2138 = vunpack.c.0.s8 %v2137
        %v2139 = vlaneseq
        %v2140 = vshrl.u32 %v2139, 7
        %v2141 = vsub.s32 %v2138, %v2140
        %v2142 = vrot.slane %v2134, %v2141
        %v2144 = vunpack.c.l.s4 1983009808
        %v2145 = vunpack.c.0.s8 %v2144
        %v2146 = vlaneseq
        %v2147 = vshrl.u32 %v2146, 7
        %v2148 = vsub.s32 %v2145, %v2147
        %v2149 = vrot.slane %v2135, %v2148
        %v2150 = vcombine.low %v2126, %v2142
        %v2151 = vcombine.high %v2126, %v2142
        %v2153 = vunpack.c.l.s4 1934713408
        %v2154 = vunpack.c.0.s8 %v2153
        %v2155 = vlaneseq
        %v2156 = vshrl.u32 %v2155, 7
        %v2157 = vsub.s32 %v2154, %v2156
        %v2158 = vrot.slane %v2150, %v2157
        %v2160 = vunpack.c.l.s4 1934713408
        %v2161 = vunpack.c.0.s8 %v2160
        %v2162 = vlaneseq
        %v2163 = vshrl.u32 %v2162, 7
        %v2164 = vsub.s32 %v2161, %v2163
        %v2165 = vrot.slane %v2151, %v2164
        %v2166 = vcombine.low %v2133, %v2149
        %v2167 = vcombine.high %v2133, %v2149
        %v2169 = vunpack.c.l.s4 1934713408
        %v2170 = vunpack.c.0.s8 %v2169
        %v2171 = vlaneseq
        %v2172 = vshrl.u32 %v2171, 7
        %v2173 = vsub.s32 %v2170, %v2172
        %v2174 = vrot.slane %v2166, %v2173
        %v2176 = vunpack.c.l.s4 1934713408
        %v2177 = vunpack.c.0.s8 %v2176
        %v2178 = vlaneseq
        %v2179 = vshrl.u32 %v2178, 7
        %v2180 = vsub.s32 %v2177, %v2179
        %v2181 = vrot.slane %v2167, %v2180
        %v2182 = vcombine.high %v2158, 0.0
        %v2183 = vcombine.high %v2165, 0.0
        %v2184 = vcombine.high %v2174, 0.0
        %v2185 = vcombine.high %v2181, 0.0
        %v2186 = vcombine.low %v2158, %v2165
        %v2188 = vunpack.c.l.s4 1983009808
        %v2189 = vunpack.c.0.s8 %v2188
        %v2190 = vlaneseq
        %v2191 = vshrl.u32 %v2190, 7
        %v2192 = vsub.s32 %v2189, %v2191
        %v2193 = vrot.slane %v2186, %v2192
        %v2194 = vcombine.low %v2182, %v2183
        %v2196 = vunpack.c.l.s4 1983009808
        %v2197 = vunpack.c.0.s8 %v2196
        %v2198 = vlaneseq
        %v2199 = vshrl.u32 %v2198, 7
        %v2200 = vsub.s32 %v2197, %v2199
        %v2201 = vrot.slane %v2194, %v2200
        %v2202 = vcombine.low %v2174, %v2181
        %v2204 = vunpack.c.l.s4 1983009808
        %v2205 = vunpack.c.0.s8 %v2204
        %v2206 = vlaneseq
        %v2207 = vshrl.u32 %v2206, 7
        %v2208 = vsub.s32 %v2205, %v2207
        %v2209 = vrot.slane %v2202, %v2208
        %v2210 = vcombine.low %v2184, %v2185
        %v2212 = vunpack.c.l.s4 1983009808
        %v2213 = vunpack.c.0.s8 %v2212
        %v2214 = vlaneseq
        %v2215 = vshrl.u32 %v2214, 7
        %v2216 = vsub.s32 %v2213, %v2215
        %v2217 = vrot.slane %v2210, %v2216
        %v2218 = vcombine.low %v2193, %v2201
        %v2219 = vcombine.high %v2193, %v2201
        %v2221 = vunpack.c.l.s4 1934713408
        %v2222 = vunpack.c.0.s8 %v2221
        %v2223 = vlaneseq
        %v2224 = vshrl.u32 %v2223, 7
        %v2225 = vsub.s32 %v2222, %v2224
        %v2226 = vrot.slane %v2218, %v2225
        %v2228 = vunpack.c.l.s4 1934713408
        %v2229 = vunpack.c.0.s8 %v2228
        %v2230 = vlaneseq
        %v2231 = vshrl.u32 %v2230, 7
        %v2232 = vsub.s32 %v2229, %v2231
        %v2233 = vrot.slane %v2219, %v2232
        %v2234 = vcombine.low %v2209, %v2217
        %v2235 = vcombine.high %v2209, %v2217
        %v2237 = vunpack.c.l.s4 1934713408
        %v2238 = vunpack.c.0.s8 %v2237
        %v2239 = vlaneseq
        %v2240 = vshrl.u32 %v2239, 7
        %v2241 = vsub.s32 %v2238, %v2240
        %v2242 = vrot.slane %v2234, %v2241
        %v2244 = vunpack.c.l.s4 1934713408
        %v2245 = vunpack.c.0.s8 %v2244
        %v2246 = vlaneseq
        %v2247 = vshrl.u32 %v2246, 7
        %v2248 = vsub.s32 %v2245, %v2247
        %v2249 = vrot.slane %v2235, %v2248
        %v2250 = vcombine.low %v2226, %v2242
        %v2251 = vcombine.high %v2226, %v2242
        %v2252 = vcombine.low %v2233, %v2249
        %v2253 = vcombine.high %v2233, %v2249
        %v2254 = vpack.c.bf16 %v2250, %v2250
        %v2255 = vpack.c.bf16 %v2251, %v2251
        %v2256 = vpack.c.bf16 %v2252, %v2252
        %v2257 = vpack.c.bf16 %v2253, %v2253
        %v2259 = vsel %vm1237, %v1954, 0
        %v2262 = vsel %vm1237, %v2104, 0
        %2264 = vmatprep.subr.bf16.mxu0 0
        %2265 = vmatpush1.bf16.xpose.msra.mxu0 %v2262
        %2266 = vmatprep.subr.bf16.mxu0 0
        %2267 = vmatpush1.bf16.xpose.msra.mxu0 0
        %2268 = vmatprep.subr.bf16.mxu0 0
        %2269 = vmatpush1.bf16.xpose.msra.mxu0 0
        %2270 = vmatprep.subr.bf16.mxu0 0
        %2271 = vmatpush1.bf16.xpose.msra.mxu0 0
        %2272 = vmatprep.subr.bf16.mxu0 0
        %2273 = vmatpush1.bf16.xpose.msra.mxu0 0
        %2274 = vmatprep.subr.bf16.mxu0 0
        %2275 = vmatpush1.bf16.xpose.msra.mxu0 0
        %2276 = vmatprep.subr.bf16.mxu0 0
        %2277 = vmatpush1.bf16.xpose.msra.mxu0 0
        %2278 = vmatprep.subr.bf16.mxu0 0
        %2279 = vmatpush1.bf16.xpose.msra.mxu0 0
        %2280 = vmatprep.subr.bf16.mxu0 0
        %2281 = vmatpush1.bf16.xpose.msra.mxu0 0
        %2282 = vmatprep.subr.bf16.mxu0 0
        %2283 = vmatpush1.bf16.xpose.msra.mxu0 0
        %2284 = vmatprep.subr.bf16.mxu0 0
        %2285 = vmatpush1.bf16.xpose.msra.mxu0 0
        %2286 = vmatprep.subr.bf16.mxu0 0
        %2287 = vmatpush1.bf16.xpose.msra.mxu0 0
        %2288 = vmatprep.subr.bf16.mxu0 0
        %2289 = vmatpush1.bf16.xpose.msra.mxu0 0
        %2290 = vmatprep.subr.bf16.mxu0 0
        %2291 = vmatpush1.bf16.xpose.msra.mxu0 0
        %2292 = vmatprep.subr.bf16.mxu0 0
        %2293 = vmatpush1.bf16.xpose.msra.mxu0 0
        %2294 = vmatprep.subr.bf16.mxu0 0
        %2295 = vmatpush1.bf16.xpose.msra.mxu0 0
        %2296 = vmatprep.mubr.bf16.mxu0 0
        %2297 = vmatmul.mubr.bf16.gmra.mrb[0].mxu0 %v2259
        %v2298 = vpop.f32.mrb[0].mxu0
        %v2299 = vadd.f32 %v786, %v2298
        %v2300 = vpop.f32.mrb[0].mxu0
        %v2301 = vpop.f32.mrb[0].mxu0
        %v2302 = vpop.f32.mrb[0].mxu0
        %2303 = vdwg.mxu0
        %v2305 = vsel %vm1237, %v1955, 0
        %v2308 = vsel %vm1237, %v2105, 0
        %2310 = vmatprep.subr.bf16.mxu0 0
        %2311 = vmatpush1.bf16.xpose.msra.mxu0 %v2308
        %2312 = vmatprep.subr.bf16.mxu0 0
        %2313 = vmatpush1.bf16.xpose.msra.mxu0 0
        %2314 = vmatprep.subr.bf16.mxu0 0
        %2315 = vmatpush1.bf16.xpose.msra.mxu0 0
        %2316 = vmatprep.subr.bf16.mxu0 0
        %2317 = vmatpush1.bf16.xpose.msra.mxu0 0
        %2318 = vmatprep.subr.bf16.mxu0 0
        %2319 = vmatpush1.bf16.xpose.msra.mxu0 0
        %2320 = vmatprep.subr.bf16.mxu0 0
        %2321 = vmatpush1.bf16.xpose.msra.mxu0 0
        %2322 = vmatprep.subr.bf16.mxu0 0
        %2323 = vmatpush1.bf16.xpose.msra.mxu0 0
        %2324 = vmatprep.subr.bf16.mxu0 0
        %2325 = vmatpush1.bf16.xpose.msra.mxu0 0
        %2326 = vmatprep.subr.bf16.mxu0 0
        %2327 = vmatpush1.bf16.xpose.msra.mxu0 0
        %2328 = vmatprep.subr.bf16.mxu0 0
        %2329 = vmatpush1.bf16.xpose.msra.mxu0 0
        %2330 = vmatprep.subr.bf16.mxu0 0
        %2331 = vmatpush1.bf16.xpose.msra.mxu0 0
        %2332 = vmatprep.subr.bf16.mxu0 0
        %2333 = vmatpush1.bf16.xpose.msra.mxu0 0
        %2334 = vmatprep.subr.bf16.mxu0 0
        %2335 = vmatpush1.bf16.xpose.msra.mxu0 0
        %2336 = vmatprep.subr.bf16.mxu0 0
        %2337 = vmatpush1.bf16.xpose.msra.mxu0 0
        %2338 = vmatprep.subr.bf16.mxu0 0
        %2339 = vmatpush1.bf16.xpose.msra.mxu0 0
        %2340 = vmatprep.subr.bf16.mxu0 0
        %2341 = vmatpush1.bf16.xpose.msra.mxu0 0
        %2342 = vmatprep.mubr.bf16.mxu0 0
        %2343 = vmatmul.mubr.bf16.gmra.mrb[0].mxu0 %v2305
        %v2344 = vpop.f32.mrb[0].mxu0
        %v2345 = vadd.f32 %v786, %v2344
        %v2346 = vpop.f32.mrb[0].mxu0
        %v2347 = vpop.f32.mrb[0].mxu0
        %v2348 = vpop.f32.mrb[0].mxu0
        %2349 = vdwg.mxu0
        %v2351 = vsel %vm1237, %v1956, 0
        %v2354 = vsel %vm1237, %v2106, 0
        %2356 = vmatprep.subr.bf16.mxu0 0
        %2357 = vmatpush1.bf16.xpose.msra.mxu0 %v2354
        %2358 = vmatprep.subr.bf16.mxu0 0
        %2359 = vmatpush1.bf16.xpose.msra.mxu0 0
        %2360 = vmatprep.subr.bf16.mxu0 0
        %2361 = vmatpush1.bf16.xpose.msra.mxu0 0
        %2362 = vmatprep.subr.bf16.mxu0 0
        %2363 = vmatpush1.bf16.xpose.msra.mxu0 0
        %2364 = vmatprep.subr.bf16.mxu0 0
        %2365 = vmatpush1.bf16.xpose.msra.mxu0 0
        %2366 = vmatprep.subr.bf16.mxu0 0
        %2367 = vmatpush1.bf16.xpose.msra.mxu0 0
        %2368 = vmatprep.subr.bf16.mxu0 0
        %2369 = vmatpush1.bf16.xpose.msra.mxu0 0
        %2370 = vmatprep.subr.bf16.mxu0 0
        %2371 = vmatpush1.bf16.xpose.msra.mxu0 0
        %2372 = vmatprep.subr.bf16.mxu0 0
        %2373 = vmatpush1.bf16.xpose.msra.mxu0 0
        %2374 = vmatprep.subr.bf16.mxu0 0
        %2375 = vmatpush1.bf16.xpose.msra.mxu0 0
        %2376 = vmatprep.subr.bf16.mxu0 0
        %2377 = vmatpush1.bf16.xpose.msra.mxu0 0
        %2378 = vmatprep.subr.bf16.mxu0 0
        %2379 = vmatpush1.bf16.xpose.msra.mxu0 0
        %2380 = vmatprep.subr.bf16.mxu0 0
        %2381 = vmatpush1.bf16.xpose.msra.mxu0 0
        %2382 = vmatprep.subr.bf16.mxu0 0
        %2383 = vmatpush1.bf16.xpose.msra.mxu0 0
        %2384 = vmatprep.subr.bf16.mxu0 0
        %2385 = vmatpush1.bf16.xpose.msra.mxu0 0
        %2386 = vmatprep.subr.bf16.mxu0 0
        %2387 = vmatpush1.bf16.xpose.msra.mxu0 0
        %2388 = vmatprep.mubr.bf16.mxu0 0
        %2389 = vmatmul.mubr.bf16.gmra.mrb[0].mxu0 %v2351
        %v2390 = vpop.f32.mrb[0].mxu0
        %v2391 = vadd.f32 %v786, %v2390
        %v2392 = vpop.f32.mrb[0].mxu0
        %v2393 = vpop.f32.mrb[0].mxu0
        %v2394 = vpop.f32.mrb[0].mxu0
        %2395 = vdwg.mxu0
        %v2397 = vsel %vm1237, %v1957, 0
        %v2400 = vsel %vm1237, %v2107, 0
        %2402 = vmatprep.subr.bf16.mxu0 0
        %2403 = vmatpush1.bf16.xpose.msra.mxu0 %v2400
        %2404 = vmatprep.subr.bf16.mxu0 0
        %2405 = vmatpush1.bf16.xpose.msra.mxu0 0
        %2406 = vmatprep.subr.bf16.mxu0 0
        %2407 = vmatpush1.bf16.xpose.msra.mxu0 0
        %2408 = vmatprep.subr.bf16.mxu0 0
        %2409 = vmatpush1.bf16.xpose.msra.mxu0 0
        %2410 = vmatprep.subr.bf16.mxu0 0
        %2411 = vmatpush1.bf16.xpose.msra.mxu0 0
        %2412 = vmatprep.subr.bf16.mxu0 0
        %2413 = vmatpush1.bf16.xpose.msra.mxu0 0
        %2414 = vmatprep.subr.bf16.mxu0 0
        %2415 = vmatpush1.bf16.xpose.msra.mxu0 0
        %2416 = vmatprep.subr.bf16.mxu0 0
        %2417 = vmatpush1.bf16.xpose.msra.mxu0 0
        %2418 = vmatprep.subr.bf16.mxu0 0
        %2419 = vmatpush1.bf16.xpose.msra.mxu0 0
        %2420 = vmatprep.subr.bf16.mxu0 0
        %2421 = vmatpush1.bf16.xpose.msra.mxu0 0
        %2422 = vmatprep.subr.bf16.mxu0 0
        %2423 = vmatpush1.bf16.xpose.msra.mxu0 0
        %2424 = vmatprep.subr.bf16.mxu0 0
        %2425 = vmatpush1.bf16.xpose.msra.mxu0 0
        %2426 = vmatprep.subr.bf16.mxu0 0
        %2427 = vmatpush1.bf16.xpose.msra.mxu0 0
        %2428 = vmatprep.subr.bf16.mxu0 0
        %2429 = vmatpush1.bf16.xpose.msra.mxu0 0
        %2430 = vmatprep.subr.bf16.mxu0 0
        %2431 = vmatpush1.bf16.xpose.msra.mxu0 0
        %2432 = vmatprep.subr.bf16.mxu0 0
        %2433 = vmatpush1.bf16.xpose.msra.mxu0 0
        %2434 = vmatprep.mubr.bf16.mxu0 0
        %2435 = vmatmul.mubr.bf16.gmra.mrb[0].mxu0 %v2397
        %v2436 = vpop.f32.mrb[0].mxu0
        %v2437 = vadd.f32 %v786, %v2436
        %v2438 = vpop.f32.mrb[0].mxu0
        %v2439 = vpop.f32.mrb[0].mxu0
        %v2440 = vpop.f32.mrb[0].mxu0
        %2441 = vdwg.mxu0
        %v2442 = vsel %vm1237, %v2299, -inf
        %2443 = vmax.xlane.f32.xlu0 %v2442
        %v2444 = vpop.xlane.xlu0 %2443
        %v2445 = vsel %vm1237, %v2345, -inf
        %2446 = vmax.xlane.f32.xlu0 %v2445
        %v2447 = vpop.xlane.xlu0 %2446
        %v2448 = vsel %vm1237, %v2391, -inf
        %2449 = vmax.xlane.f32.xlu0 %v2448
        %v2450 = vpop.xlane.xlu0 %2449
        %v2451 = vsel %vm1237, %v2437, -inf
        %2452 = vmax.xlane.f32.xlu0 %v2451
        %v2453 = vpop.xlane.xlu0 %2452
        %v2454 = vsub.f32 %v2299, %v2444
        %v2455 = vsub.f32 %v2345, %v2447
        %v2456 = vsub.f32 %v2391, %v2450
        %v2457 = vsub.f32 %v2437, %v2453
        %v2458 = vmul.f32 %v2454, 1.442695
        %v2459 = vpow.pop %v2458
        %v2460 = vmul.f32 %v2455, 1.442695
        %v2461 = vpow.pop %v2460
        %v2462 = vmul.f32 %v2456, 1.442695
        %v2463 = vpow.pop %v2462
        %v2464 = vmul.f32 %v2457, 1.442695
        %v2465 = vpow.pop %v2464
        %v2466 = vsel %vm1237, %v2459, 0.0
        %2467 = vadd.xlane.f32.xlu0 %v2466
        %v2468 = vpop.xlane.xlu0 %2467
        %v2469 = vsel %vm1237, %v2461, 0.0
        %2470 = vadd.xlane.f32.xlu0 %v2469
        %v2471 = vpop.xlane.xlu0 %2470
        %v2472 = vsel %vm1237, %v2463, 0.0
        %2473 = vadd.xlane.f32.xlu0 %v2472
        %v2474 = vpop.xlane.xlu0 %2473
        %v2475 = vsel %vm1237, %v2465, 0.0
        %2476 = vadd.xlane.f32.xlu0 %v2475
        %v2477 = vpop.xlane.xlu0 %2476
        %v2478 = vrcp.pop %v2468
        %v2479 = vrcp.pop %v2471
        %v2480 = vrcp.pop %v2474
        %v2481 = vrcp.pop %v2477
        %v2482 = vmul.f32 %v2459, %v2478
        %v2483 = vmul.f32 %v2461, %v2479
        %v2484 = vmul.f32 %v2463, %v2480
        %v2485 = vmul.f32 %v2465, %v2481
        %v2486 = vpack.c.bf16 %v2482, %v2482
        %v2487 = vpack.c.bf16 %v2483, %v2483
        %v2488 = vpack.c.bf16 %v2484, %v2484
        %v2489 = vpack.c.bf16 %v2485, %v2485
        %v2491 = vsel %vm1237, %v2486, 0
        %v2494 = vsel %vm1473, %v2254, 0
        %2496 = vmatprep.subr.bf16.mxu0 0
        %2497 = vmatpush1.bf16.msra.mxu0 %v2494
        %2498 = vmatprep.subr.bf16.mxu0 0
        %2499 = vmatpush1.bf16.msra.mxu0 0
        %2500 = vmatprep.subr.bf16.mxu0 0
        %2501 = vmatpush1.bf16.msra.mxu0 0
        %2502 = vmatprep.subr.bf16.mxu0 0
        %2503 = vmatpush1.bf16.msra.mxu0 0
        %2504 = vmatprep.subr.bf16.mxu0 0
        %2505 = vmatpush1.bf16.msra.mxu0 0
        %2506 = vmatprep.subr.bf16.mxu0 0
        %2507 = vmatpush1.bf16.msra.mxu0 0
        %2508 = vmatprep.subr.bf16.mxu0 0
        %2509 = vmatpush1.bf16.msra.mxu0 0
        %2510 = vmatprep.subr.bf16.mxu0 0
        %2511 = vmatpush1.bf16.msra.mxu0 0
        %2512 = vmatprep.subr.bf16.mxu0 0
        %2513 = vmatpush1.bf16.msra.mxu0 0
        %2514 = vmatprep.subr.bf16.mxu0 0
        %2515 = vmatpush1.bf16.msra.mxu0 0
        %2516 = vmatprep.subr.bf16.mxu0 0
        %2517 = vmatpush1.bf16.msra.mxu0 0
        %2518 = vmatprep.subr.bf16.mxu0 0
        %2519 = vmatpush1.bf16.msra.mxu0 0
        %2520 = vmatprep.subr.bf16.mxu0 0
        %2521 = vmatpush1.bf16.msra.mxu0 0
        %2522 = vmatprep.subr.bf16.mxu0 0
        %2523 = vmatpush1.bf16.msra.mxu0 0
        %2524 = vmatprep.subr.bf16.mxu0 0
        %2525 = vmatpush1.bf16.msra.mxu0 0
        %2526 = vmatprep.subr.bf16.mxu0 0
        %2527 = vmatpush1.bf16.msra.mxu0 0
        %2528 = vmatprep.mubr.bf16.mxu0 0
        %2529 = vmatmul.mubr.bf16.gmra.mrb[0].mxu0 %v2491
        %v2530 = vpop.f32.mrb[0].mxu0
        %v2531 = vadd.f32 0.0, %v2530
        %v2532 = vpop.f32.mrb[0].mxu0
        %v2533 = vpop.f32.mrb[0].mxu0
        %v2534 = vpop.f32.mrb[0].mxu0
        %2535 = vdwg.mxu0
        %v2537 = vsel %vm1237, %v2487, 0
        %v2540 = vsel %vm1473, %v2255, 0
        %2542 = vmatprep.subr.bf16.mxu0 0
        %2543 = vmatpush1.bf16.msra.mxu0 %v2540
        %2544 = vmatprep.subr.bf16.mxu0 0
        %2545 = vmatpush1.bf16.msra.mxu0 0
        %2546 = vmatprep.subr.bf16.mxu0 0
        %2547 = vmatpush1.bf16.msra.mxu0 0
        %2548 = vmatprep.subr.bf16.mxu0 0
        %2549 = vmatpush1.bf16.msra.mxu0 0
        %2550 = vmatprep.subr.bf16.mxu0 0
        %2551 = vmatpush1.bf16.msra.mxu0 0
        %2552 = vmatprep.subr.bf16.mxu0 0
        %2553 = vmatpush1.bf16.msra.mxu0 0
        %2554 = vmatprep.subr.bf16.mxu0 0
        %2555 = vmatpush1.bf16.msra.mxu0 0
        %2556 = vmatprep.subr.bf16.mxu0 0
        %2557 = vmatpush1.bf16.msra.mxu0 0
        %2558 = vmatprep.subr.bf16.mxu0 0
        %2559 = vmatpush1.bf16.msra.mxu0 0
        %2560 = vmatprep.subr.bf16.mxu0 0
        %2561 = vmatpush1.bf16.msra.mxu0 0
        %2562 = vmatprep.subr.bf16.mxu0 0
        %2563 = vmatpush1.bf16.msra.mxu0 0
        %2564 = vmatprep.subr.bf16.mxu0 0
        %2565 = vmatpush1.bf16.msra.mxu0 0
        %2566 = vmatprep.subr.bf16.mxu0 0
        %2567 = vmatpush1.bf16.msra.mxu0 0
        %2568 = vmatprep.subr.bf16.mxu0 0
        %2569 = vmatpush1.bf16.msra.mxu0 0
        %2570 = vmatprep.subr.bf16.mxu0 0
        %2571 = vmatpush1.bf16.msra.mxu0 0
        %2572 = vmatprep.subr.bf16.mxu0 0
        %2573 = vmatpush1.bf16.msra.mxu0 0
        %2574 = vmatprep.mubr.bf16.mxu0 0
        %2575 = vmatmul.mubr.bf16.gmra.mrb[0].mxu0 %v2537
        %v2576 = vpop.f32.mrb[0].mxu0
        %v2577 = vadd.f32 0.0, %v2576
        %v2578 = vpop.f32.mrb[0].mxu0
        %v2579 = vpop.f32.mrb[0].mxu0
        %v2580 = vpop.f32.mrb[0].mxu0
        %2581 = vdwg.mxu0
        %v2583 = vsel %vm1237, %v2488, 0
        %v2586 = vsel %vm1473, %v2256, 0
        %2588 = vmatprep.subr.bf16.mxu0 0
        %2589 = vmatpush1.bf16.msra.mxu0 %v2586
        %2590 = vmatprep.subr.bf16.mxu0 0
        %2591 = vmatpush1.bf16.msra.mxu0 0
        %2592 = vmatprep.subr.bf16.mxu0 0
        %2593 = vmatpush1.bf16.msra.mxu0 0
        %2594 = vmatprep.subr.bf16.mxu0 0
        %2595 = vmatpush1.bf16.msra.mxu0 0
        %2596 = vmatprep.subr.bf16.mxu0 0
        %2597 = vmatpush1.bf16.msra.mxu0 0
        %2598 = vmatprep.subr.bf16.mxu0 0
        %2599 = vmatpush1.bf16.msra.mxu0 0
        %2600 = vmatprep.subr.bf16.mxu0 0
        %2601 = vmatpush1.bf16.msra.mxu0 0
        %2602 = vmatprep.subr.bf16.mxu0 0
        %2603 = vmatpush1.bf16.msra.mxu0 0
        %2604 = vmatprep.subr.bf16.mxu0 0
        %2605 = vmatpush1.bf16.msra.mxu0 0
        %2606 = vmatprep.subr.bf16.mxu0 0
        %2607 = vmatpush1.bf16.msra.mxu0 0
        %2608 = vmatprep.subr.bf16.mxu0 0
        %2609 = vmatpush1.bf16.msra.mxu0 0
        %2610 = vmatprep.subr.bf16.mxu0 0
        %2611 = vmatpush1.bf16.msra.mxu0 0
        %2612 = vmatprep.subr.bf16.mxu0 0
        %2613 = vmatpush1.bf16.msra.mxu0 0
        %2614 = vmatprep.subr.bf16.mxu0 0
        %2615 = vmatpush1.bf16.msra.mxu0 0
        %2616 = vmatprep.subr.bf16.mxu0 0
        %2617 = vmatpush1.bf16.msra.mxu0 0
        %2618 = vmatprep.subr.bf16.mxu0 0
        %2619 = vmatpush1.bf16.msra.mxu0 0
        %2620 = vmatprep.mubr.bf16.mxu0 0
        %2621 = vmatmul.mubr.bf16.gmra.mrb[0].mxu0 %v2583
        %v2622 = vpop.f32.mrb[0].mxu0
        %v2623 = vadd.f32 0.0, %v2622
        %v2624 = vpop.f32.mrb[0].mxu0
        %v2625 = vpop.f32.mrb[0].mxu0
        %v2626 = vpop.f32.mrb[0].mxu0
        %2627 = vdwg.mxu0
        %v2629 = vsel %vm1237, %v2489, 0
        %v2632 = vsel %vm1473, %v2257, 0
        %2634 = vmatprep.subr.bf16.mxu0 0
        %2635 = vmatpush1.bf16.msra.mxu0 %v2632
        %2636 = vmatprep.subr.bf16.mxu0 0
        %2637 = vmatpush1.bf16.msra.mxu0 0
        %2638 = vmatprep.subr.bf16.mxu0 0
        %2639 = vmatpush1.bf16.msra.mxu0 0
        %2640 = vmatprep.subr.bf16.mxu0 0
        %2641 = vmatpush1.bf16.msra.mxu0 0
        %2642 = vmatprep.subr.bf16.mxu0 0
        %2643 = vmatpush1.bf16.msra.mxu0 0
        %2644 = vmatprep.subr.bf16.mxu0 0
        %2645 = vmatpush1.bf16.msra.mxu0 0
        %2646 = vmatprep.subr.bf16.mxu0 0
        %2647 = vmatpush1.bf16.msra.mxu0 0
        %2648 = vmatprep.subr.bf16.mxu0 0
        %2649 = vmatpush1.bf16.msra.mxu0 0
        %2650 = vmatprep.subr.bf16.mxu0 0
        %2651 = vmatpush1.bf16.msra.mxu0 0
        %2652 = vmatprep.subr.bf16.mxu0 0
        %2653 = vmatpush1.bf16.msra.mxu0 0
        %2654 = vmatprep.subr.bf16.mxu0 0
        %2655 = vmatpush1.bf16.msra.mxu0 0
        %2656 = vmatprep.subr.bf16.mxu0 0
        %2657 = vmatpush1.bf16.msra.mxu0 0
        %2658 = vmatprep.subr.bf16.mxu0 0
        %2659 = vmatpush1.bf16.msra.mxu0 0
        %2660 = vmatprep.subr.bf16.mxu0 0
        %2661 = vmatpush1.bf16.msra.mxu0 0
        %2662 = vmatprep.subr.bf16.mxu0 0
        %2663 = vmatpush1.bf16.msra.mxu0 0
        %2664 = vmatprep.subr.bf16.mxu0 0
        %2665 = vmatpush1.bf16.msra.mxu0 0
        %2666 = vmatprep.mubr.bf16.mxu0 0
        %2667 = vmatmul.mubr.bf16.gmra.mrb[0].mxu0 %v2629
        %v2668 = vpop.f32.mrb[0].mxu0
        %v2669 = vadd.f32 0.0, %v2668
        %v2670 = vpop.f32.mrb[0].mxu0
        %v2671 = vpop.f32.mrb[0].mxu0
        %v2672 = vpop.f32.mrb[0].mxu0
        %2673 = vdwg.mxu0
        %v2674 = vcombine.low %v2531, %v2623
        %v2675 = vcombine.high %v2531, %v2623
        %v2677 = vunpack.c.l.s4 1983009808
        %v2678 = vunpack.c.0.s8 %v2677
        %v2679 = vlaneseq
        %v2680 = vshrl.u32 %v2679, 7
        %v2681 = vsub.s32 %v2678, %v2680
        %v2682 = vrot.slane %v2674, %v2681
        %v2684 = vunpack.c.l.s4 1983009808
        %v2685 = vunpack.c.0.s8 %v2684
        %v2686 = vlaneseq
        %v2687 = vshrl.u32 %v2686, 7
        %v2688 = vsub.s32 %v2685, %v2687
        %v2689 = vrot.slane %v2675, %v2688
        %v2690 = vcombine.low %v2577, %v2669
        %v2691 = vcombine.high %v2577, %v2669
        %v2693 = vunpack.c.l.s4 1983009808
        %v2694 = vunpack.c.0.s8 %v2693
        %v2695 = vlaneseq
        %v2696 = vshrl.u32 %v2695, 7
        %v2697 = vsub.s32 %v2694, %v2696
        %v2698 = vrot.slane %v2690, %v2697
        %v2700 = vunpack.c.l.s4 1983009808
        %v2701 = vunpack.c.0.s8 %v2700
        %v2702 = vlaneseq
        %v2703 = vshrl.u32 %v2702, 7
        %v2704 = vsub.s32 %v2701, %v2703
        %v2705 = vrot.slane %v2691, %v2704
        %v2706 = vcombine.low %v2682, %v2698
        %v2707 = vcombine.high %v2682, %v2698
        %v2709 = vunpack.c.l.s4 1934713408
        %v2710 = vunpack.c.0.s8 %v2709
        %v2711 = vlaneseq
        %v2712 = vshrl.u32 %v2711, 7
        %v2713 = vsub.s32 %v2710, %v2712
        %v2714 = vrot.slane %v2706, %v2713
        %v2716 = vunpack.c.l.s4 1934713408
        %v2717 = vunpack.c.0.s8 %v2716
        %v2718 = vlaneseq
        %v2719 = vshrl.u32 %v2718, 7
        %v2720 = vsub.s32 %v2717, %v2719
        %v2721 = vrot.slane %v2707, %v2720
        %v2722 = vcombine.low %v2689, %v2705
        %v2723 = vcombine.high %v2689, %v2705
        %v2725 = vunpack.c.l.s4 1934713408
        %v2726 = vunpack.c.0.s8 %v2725
        %v2727 = vlaneseq
        %v2728 = vshrl.u32 %v2727, 7
        %v2729 = vsub.s32 %v2726, %v2728
        %v2730 = vrot.slane %v2722, %v2729
        %v2732 = vunpack.c.l.s4 1934713408
        %v2733 = vunpack.c.0.s8 %v2732
        %v2734 = vlaneseq
        %v2735 = vshrl.u32 %v2734, 7
        %v2736 = vsub.s32 %v2733, %v2735
        %v2737 = vrot.slane %v2723, %v2736
        %v2738 = vcombine.high %v2714, 0.0
        %v2739 = vcombine.high %v2721, 0.0
        %v2740 = vcombine.high %v2730, 0.0
        %v2741 = vcombine.high %v2737, 0.0
        %v2742 = vcombine.low %v2714, %v2721
        %v2744 = vunpack.c.l.s4 1983009808
        %v2745 = vunpack.c.0.s8 %v2744
        %v2746 = vlaneseq
        %v2747 = vshrl.u32 %v2746, 7
        %v2748 = vsub.s32 %v2745, %v2747
        %v2749 = vrot.slane %v2742, %v2748
        %v2750 = vcombine.low %v2738, %v2739
        %v2752 = vunpack.c.l.s4 1983009808
        %v2753 = vunpack.c.0.s8 %v2752
        %v2754 = vlaneseq
        %v2755 = vshrl.u32 %v2754, 7
        %v2756 = vsub.s32 %v2753, %v2755
        %v2757 = vrot.slane %v2750, %v2756
        %v2758 = vcombine.low %v2730, %v2737
        %v2760 = vunpack.c.l.s4 1983009808
        %v2761 = vunpack.c.0.s8 %v2760
        %v2762 = vlaneseq
        %v2763 = vshrl.u32 %v2762, 7
        %v2764 = vsub.s32 %v2761, %v2763
        %v2765 = vrot.slane %v2758, %v2764
        %v2766 = vcombine.low %v2740, %v2741
        %v2768 = vunpack.c.l.s4 1983009808
        %v2769 = vunpack.c.0.s8 %v2768
        %v2770 = vlaneseq
        %v2771 = vshrl.u32 %v2770, 7
        %v2772 = vsub.s32 %v2769, %v2771
        %v2773 = vrot.slane %v2766, %v2772
        %v2774 = vcombine.low %v2749, %v2757
        %v2775 = vcombine.high %v2749, %v2757
        %v2777 = vunpack.c.l.s4 1934713408
        %v2778 = vunpack.c.0.s8 %v2777
        %v2779 = vlaneseq
        %v2780 = vshrl.u32 %v2779, 7
        %v2781 = vsub.s32 %v2778, %v2780
        %v2782 = vrot.slane %v2774, %v2781
        %v2784 = vunpack.c.l.s4 1934713408
        %v2785 = vunpack.c.0.s8 %v2784
        %v2786 = vlaneseq
        %v2787 = vshrl.u32 %v2786, 7
        %v2788 = vsub.s32 %v2785, %v2787
        %v2789 = vrot.slane %v2775, %v2788
        %v2790 = vcombine.low %v2765, %v2773
        %v2791 = vcombine.high %v2765, %v2773
        %v2793 = vunpack.c.l.s4 1934713408
        %v2794 = vunpack.c.0.s8 %v2793
        %v2795 = vlaneseq
        %v2796 = vshrl.u32 %v2795, 7
        %v2797 = vsub.s32 %v2794, %v2796
        %v2798 = vrot.slane %v2790, %v2797
        %v2800 = vunpack.c.l.s4 1934713408
        %v2801 = vunpack.c.0.s8 %v2800
        %v2802 = vlaneseq
        %v2803 = vshrl.u32 %v2802, 7
        %v2804 = vsub.s32 %v2801, %v2803
        %v2805 = vrot.slane %v2791, %v2804
        %v2806 = vcombine.low %v2782, %v2798
        %v2807 = vcombine.high %v2782, %v2798
        %v2808 = vcombine.low %v2789, %v2805
        %v2809 = vcombine.high %v2789, %v2805
        %2811 = vrot.lane.b32.xlu0 %v2807, 8
        %v2812 = vpop.permute.xlu0 %2811
        %2815 = vrot.lane.b32.xlu0 %v2808, 16
        %v2816 = vpop.permute.xlu0 %2815
        %2819 = vrot.lane.b32.xlu0 %v2809, 24
        %v2820 = vpop.permute.xlu0 %2819
        %v2822 = vsel %vm1237, %v2806, %v2812
        %v2823 = vsel %vm1804, %v2822, %v2816
        %v2824 = vsel %vm1806, %v2823, %v2820
        %v2825 = vpack.c.bf16 %v2824, %v1807
        %v2826 = vld [vmem:[%s523] sm:$0xf]
        %v2827 = vld [vmem:[%s523 + $0x4] sm:$0xf]
        %v2828 = vld [vmem:[%s523 + $0x8] sm:$0xf]
        %v2829 = vld [vmem:[%s523 + $0xc] sm:$0xf]
        %v2830 = vlaneseq
        %v2831 = vshrl.u32 %v2830, 7
        %v2832 = vsub.s32 0, %v2831
        %v2833 = vrot.slane %v555, %v2832
        %v2838 = vunpack.c.l.b16 %v2826
        %v2839 = vunpack.c.l.b16 %v2827
        %v2840 = vunpack.c.l.b16 %v2828
        %v2841 = vunpack.c.l.b16 %v2829
        %v2842 = vpack.c.b16 %v2839, %v2838
        %v2843 = vpack.c.b16 %v2841, %v2840
        %v2847 = vsel %vm557, %v2825, 0
        %2849 = vmatprep.subr.bf16.mxu0 0
        %2850 = vmatpush1.bf16.msra.mxu0 %v2842
        %2851 = vmatprep.subr.bf16.mxu0 0
        %2852 = vmatpush1.bf16.msra.mxu0 %v2843
        %2853 = vmatprep.subr.bf16.mxu0 0
        %2854 = vmatpush1.bf16.msra.mxu0 0
        %2855 = vmatprep.subr.bf16.mxu0 0
        %2856 = vmatpush1.bf16.msra.mxu0 0
        %2857 = vmatprep.subr.bf16.mxu0 0
        %2858 = vmatpush1.bf16.msra.mxu0 0
        %2859 = vmatprep.subr.bf16.mxu0 0
        %2860 = vmatpush1.bf16.msra.mxu0 0
        %2861 = vmatprep.subr.bf16.mxu0 0
        %2862 = vmatpush1.bf16.msra.mxu0 0
        %2863 = vmatprep.subr.bf16.mxu0 0
        %2864 = vmatpush1.bf16.msra.mxu0 0
        %2865 = vmatprep.subr.bf16.mxu0 0
        %2866 = vmatpush1.bf16.msra.mxu0 0
        %2867 = vmatprep.subr.bf16.mxu0 0
        %2868 = vmatpush1.bf16.msra.mxu0 0
        %2869 = vmatprep.subr.bf16.mxu0 0
        %2870 = vmatpush1.bf16.msra.mxu0 0
        %2871 = vmatprep.subr.bf16.mxu0 0
        %2872 = vmatpush1.bf16.msra.mxu0 0
        %2873 = vmatprep.subr.bf16.mxu0 0
        %2874 = vmatpush1.bf16.msra.mxu0 0
        %2875 = vmatprep.subr.bf16.mxu0 0
        %2876 = vmatpush1.bf16.msra.mxu0 0
        %2877 = vmatprep.subr.bf16.mxu0 0
        %2878 = vmatpush1.bf16.msra.mxu0 0
        %2879 = vmatprep.subr.bf16.mxu0 0
        %2880 = vmatpush1.bf16.msra.mxu0 0
        %2881 = vmatprep.mubr.bf16.mxu0 0
        %2882 = vmatmul.mubr.bf16.gmra.mrb[0].mxu0 %v2847
        %v2883 = vpop.f32.mrb[0].mxu0
        %v2884 = vadd.f32 %v2833, %v2883
        %v2885 = vpop.f32.mrb[0].mxu0
        %v2886 = vpop.f32.mrb[0].mxu0
        %v2887 = vadd.f32 %v2833, %v2886
        %v2888 = vpop.f32.mrb[0].mxu0
        %2889 = vdwg.mxu0
        %v2890 = vadd.f32 %v546, %v2884
        %v2891 = vadd.f32 %v547, %v2887
        %v2892 = vsel %vm557, %v2890, 0.0
        %2893 = vadd.xlane.f32.xlu0 %v2892
        %v2894 = vpop.xlane.xlu0 %2893
        %v2895 = vsel %vm557, %v2891, 0.0
        %2896 = vadd.xlane.f32.xlu0 %v2895
        %v2897 = vpop.xlane.xlu0 %2896
        %v2898 = vmul.f32 %v2894, %v564
        %v2899 = vmul.f32 %v2897, %v564
        %v2900 = vsub.f32 %v2890, %v2898
        %v2901 = vsub.f32 %v2891, %v2899
        %v2902 = vmul.f32 %v2900, %v2900
        %v2903 = vmul.f32 %v2901, %v2901
        %v2904 = vsel %vm557, %v2902, 0.0
        %2905 = vadd.xlane.f32.xlu0 %v2904
        %v2906 = vpop.xlane.xlu0 %2905
        %v2907 = vsel %vm557, %v2903, 0.0
        %2908 = vadd.xlane.f32.xlu0 %v2907
        %v2909 = vpop.xlane.xlu0 %2908
        %v2910 = vmul.f32 %v2906, %v564
        %v2911 = vmul.f32 %v2909, %v564
        %v2912 = vadd.f32 %v2910, 1e-05
        %v2913 = vadd.f32 %v2911, 1e-05
        %v2914 = vrsqrt.pop %v2912
        %v2915 = vrsqrt.pop %v2913
        %v2916 = vmul.f32 %v2900, %v2914
        %v2917 = vmul.f32 %v2901, %v2915
        %v2918 = vlaneseq
        %v2919 = vshrl.u32 %v2918, 7
        %v2920 = vsub.s32 0, %v2919
        %v2921 = vrot.slane %v550, %v2920
        %v2922 = vmul.f32 %v2916, %v2921
        %v2923 = vmul.f32 %v2917, %v2921
        %v2924 = vlaneseq
        %v2925 = vshrl.u32 %v2924, 7
        %v2926 = vsub.s32 0, %v2925
        %v2927 = vrot.slane %v551, %v2926
        %v2928 = vadd.f32 %v2922, %v2927
        %v2929 = vadd.f32 %v2923, %v2927
        %v2930 = vpack.c.bf16 %v2929, %v2928
        %v2931 = vld [vmem:[%s528] sm:$0xf]
        %v2932 = vld [vmem:[%s528 + $0x4] sm:$0xf]
        %v2933 = vld [vmem:[%s528 + $0x8] sm:$0xf]
        %v2934 = vld [vmem:[%s528 + $0xc] sm:$0xf]
        %v2935 = vld [vmem:[%s503] sm:$0x1]
        %v2937 = vlaneseq
        %v2938 = vshrl.u32 %v2937, 7
        %v2939 = vsub.s32 0, %v2938
        %v2940 = vrot.slane %v2935, %v2939
        %v2946 = vunpack.c.l.b16 %v2931
        %v2947 = vunpack.c.l.b16 %v2932
        %v2948 = vunpack.c.l.b16 %v2933
        %v2949 = vunpack.c.l.b16 %v2934
        %v2950 = vpack.c.b16 %v2947, %v2946
        %v2951 = vpack.c.b16 %v2949, %v2948
        %v2955 = vsel %vm557, %v2930, 0
        %2957 = vmatprep.subr.bf16.mxu0 0
        %2958 = vmatpush1.bf16.msra.mxu0 %v2950
        %2959 = vmatprep.subr.bf16.mxu0 0
        %2960 = vmatpush1.bf16.msra.mxu0 %v2951
        %2961 = vmatprep.subr.bf16.mxu0 0
        %2962 = vmatpush1.bf16.msra.mxu0 0
        %2963 = vmatprep.subr.bf16.mxu0 0
        %2964 = vmatpush1.bf16.msra.mxu0 0
        %2965 = vmatprep.subr.bf16.mxu0 0
        %2966 = vmatpush1.bf16.msra.mxu0 0
        %2967 = vmatprep.subr.bf16.mxu0 0
        %2968 = vmatpush1.bf16.msra.mxu0 0
        %2969 = vmatprep.subr.bf16.mxu0 0
        %2970 = vmatpush1.bf16.msra.mxu0 0
        %2971 = vmatprep.subr.bf16.mxu0 0
        %2972 = vmatpush1.bf16.msra.mxu0 0
        %2973 = vmatprep.subr.bf16.mxu0 0
        %2974 = vmatpush1.bf16.msra.mxu0 0
        %2975 = vmatprep.subr.bf16.mxu0 0
        %2976 = vmatpush1.bf16.msra.mxu0 0
        %2977 = vmatprep.subr.bf16.mxu0 0
        %2978 = vmatpush1.bf16.msra.mxu0 0
        %2979 = vmatprep.subr.bf16.mxu0 0
        %2980 = vmatpush1.bf16.msra.mxu0 0
        %2981 = vmatprep.subr.bf16.mxu0 0
        %2982 = vmatpush1.bf16.msra.mxu0 0
        %2983 = vmatprep.subr.bf16.mxu0 0
        %2984 = vmatpush1.bf16.msra.mxu0 0
        %2985 = vmatprep.subr.bf16.mxu0 0
        %2986 = vmatpush1.bf16.msra.mxu0 0
        %2987 = vmatprep.subr.bf16.mxu0 0
        %2988 = vmatpush1.bf16.msra.mxu0 0
        %2989 = vmatprep.mubr.bf16.mxu0 0
        %2990 = vmatmul.mubr.bf16.gmra.mrb[0].mxu0 %v2955
        %v2991 = vpop.f32.mrb[0].mxu0
        %v2992 = vadd.f32 %v2940, %v2991
        %v2993 = vpop.f32.mrb[0].mxu0
        %v2994 = vpop.f32.mrb[0].mxu0
        %v2995 = vadd.f32 %v2940, %v2994
        %v2996 = vpop.f32.mrb[0].mxu0
        %2997 = vdwg.mxu0
        %v2998 = vmul.f32 %v2992, 0.5
        %v2999 = vmul.f32 %v2995, 0.5
        %v3000 = vmul.f32 %v2992, 0.70710677
        %v3001 = vmul.f32 %v2995, 0.70710677
        %v3002 = verf.f32.pop %v3000
        %v3003 = verf.f32.pop %v3001
        %v3004 = vadd.f32 %v3002, 1.0
        %v3005 = vadd.f32 %v3003, 1.0
        %v3006 = vmul.f32 %v2998, %v3004
        %v3007 = vmul.f32 %v2999, %v3005
        %v3008 = vpack.c.bf16 %v3007, %v3006
        %v3009 = vld [vmem:[%s533] sm:$0xf]
        %v3010 = vld [vmem:[%s533 + $0x4] sm:$0xf]
        %v3011 = vld [vmem:[%s533 + $0x8] sm:$0xf]
        %v3012 = vld [vmem:[%s533 + $0xc] sm:$0xf]
        %v3013 = vld [vmem:[%s533 + $0x10] sm:$0xf]
        %v3014 = vld [vmem:[%s533 + $0x14] sm:$0xf]
        %v3015 = vld [vmem:[%s533 + $0x18] sm:$0xf]
        %v3016 = vld [vmem:[%s533 + $0x1c] sm:$0xf]
        %v3017 = vld [vmem:[%s533 + $0x20] sm:$0xf]
        %v3018 = vld [vmem:[%s533 + $0x24] sm:$0xf]
        %v3019 = vld [vmem:[%s533 + $0x28] sm:$0xf]
        %v3020 = vld [vmem:[%s533 + $0x2c] sm:$0xf]
        %v3021 = vld [vmem:[%s533 + $0x30] sm:$0xf]
        %v3022 = vld [vmem:[%s533 + $0x34] sm:$0xf]
        %v3023 = vld [vmem:[%s533 + $0x38] sm:$0xf]
        %v3024 = vld [vmem:[%s533 + $0x3c] sm:$0xf]
        %v3025 = vlaneseq
        %v3026 = vshrl.u32 %v3025, 7
        %v3027 = vsub.s32 0, %v3026
        %v3028 = vrot.slane %v556, %v3027
        %v3045 = vunpack.c.l.b16 %v3009
        %v3046 = vunpack.c.l.b16 %v3010
        %v3047 = vunpack.c.l.b16 %v3011
        %v3048 = vunpack.c.l.b16 %v3012
        %v3049 = vunpack.c.l.b16 %v3013
        %v3050 = vunpack.c.l.b16 %v3014
        %v3051 = vunpack.c.l.b16 %v3015
        %v3052 = vunpack.c.l.b16 %v3016
        %v3053 = vunpack.c.l.b16 %v3017
        %v3054 = vunpack.c.l.b16 %v3018
        %v3055 = vunpack.c.l.b16 %v3019
        %v3056 = vunpack.c.l.b16 %v3020
        %v3057 = vunpack.c.l.b16 %v3021
        %v3058 = vunpack.c.l.b16 %v3022
        %v3059 = vunpack.c.l.b16 %v3023
        %v3060 = vunpack.c.l.b16 %v3024
        %v3061 = vpack.c.b16 %v3046, %v3045
        %v3062 = vpack.c.b16 %v3048, %v3047
        %v3063 = vpack.c.b16 %v3050, %v3049
        %v3064 = vpack.c.b16 %v3052, %v3051
        %v3065 = vpack.c.b16 %v3054, %v3053
        %v3066 = vpack.c.b16 %v3056, %v3055
        %v3067 = vpack.c.b16 %v3058, %v3057
        %v3068 = vpack.c.b16 %v3060, %v3059
        %3077 = vmatprep.subr.bf16.mxu0 0
        %3078 = vmatpush1.bf16.msra.mxu0 %v3061
        %3079 = vmatprep.subr.bf16.mxu0 0
        %3080 = vmatpush1.bf16.msra.mxu0 %v3062
        %3081 = vmatprep.subr.bf16.mxu0 0
        %3082 = vmatpush1.bf16.msra.mxu0 %v3063
        %3083 = vmatprep.subr.bf16.mxu0 0
        %3084 = vmatpush1.bf16.msra.mxu0 %v3064
        %3085 = vmatprep.subr.bf16.mxu0 0
        %3086 = vmatpush1.bf16.msra.mxu0 %v3065
        %3087 = vmatprep.subr.bf16.mxu0 0
        %3088 = vmatpush1.bf16.msra.mxu0 %v3066
        %3089 = vmatprep.subr.bf16.mxu0 0
        %3090 = vmatpush1.bf16.msra.mxu0 %v3067
        %3091 = vmatprep.subr.bf16.mxu0 0
        %3092 = vmatpush1.bf16.msra.mxu0 %v3068
        %3093 = vmatprep.subr.bf16.mxu0 0
        %3094 = vmatpush1.bf16.msra.mxu0 0
        %3095 = vmatprep.subr.bf16.mxu0 0
        %3096 = vmatpush1.bf16.msra.mxu0 0
        %3097 = vmatprep.subr.bf16.mxu0 0
        %3098 = vmatpush1.bf16.msra.mxu0 0
        %3099 = vmatprep.subr.bf16.mxu0 0
        %3100 = vmatpush1.bf16.msra.mxu0 0
        %3101 = vmatprep.subr.bf16.mxu0 0
        %3102 = vmatpush1.bf16.msra.mxu0 0
        %3103 = vmatprep.subr.bf16.mxu0 0
        %3104 = vmatpush1.bf16.msra.mxu0 0
        %3105 = vmatprep.subr.bf16.mxu0 0
        %3106 = vmatpush1.bf16.msra.mxu0 0
        %3107 = vmatprep.subr.bf16.mxu0 0
        %3108 = vmatpush1.bf16.msra.mxu0 0
        %3109 = vmatprep.mubr.bf16.mxu0 0
        %3110 = vmatmul.mubr.bf16.gmra.mrb[0].mxu0 %v3008
        %v3111 = vpop.f32.mrb[0].mxu0
        %v3112 = vadd.f32 %v3028, %v3111
        %v3113 = vpop.f32.mrb[0].mxu0
        %v3114 = vpop.f32.mrb[0].mxu0
        %v3115 = vadd.f32 %v3028, %v3114
        %v3116 = vpop.f32.mrb[0].mxu0
        %3117 = vdwg.mxu0
        %v3118 = vadd.f32 %v2890, %v3112
        %v3119 = vadd.f32 %v2891, %v3115
        %3120 = vst.msk [vmem:[#allocation2] sm:$0xff] %vm557, %v3118
        %3121 = vst.msk [vmem:[#allocation2 + $0x8] sm:$0xff] %vm557, %v3119
        %p3122 = scmp.eq.s32.totalorder %s24, 1
        // Predicated region
        $region73: #{tpu_custom_call.1} parent=67 // pred_check
          %p3123 = pneg %p3122
        $region74: #{tpu_custom_call.1} parent=67 // pred_check_branch
          %3125 = sbr.rel (%p3123) target = $region76
        $region75: #{tpu_custom_call.1} parent=67 // pred_region
          %v3127 = vrot.slane %v3118, 7
          %v3130 = vrot.slane %v3119, 6
          %vm3132 = vcmask 1040384
          %v3133 = vsel %vm3132, %v3127, %v3130
          %v3134 = vld [vmem:[%s2] sm:$0x1]
          %v3135 = vld [vmem:[%s3] sm:$0x1]
          %vm3136 = vcmask 254976
          %v3137 = vsel %vm3136, %v3133, 0.0
          %3138 = vadd.xlane.f32.xlu0 %v3137
          %v3139 = vpop.xlane.xlu0 %3138
          %v3140 = vmul.f32 %v3139, %v564
          %v3141 = vsub.f32 %v3133, %v3140
          %v3142 = vmul.f32 %v3141, %v3141
          %v3143 = vsel %vm3136, %v3142, 0.0
          %3144 = vadd.xlane.f32.xlu0 %v3143
          %v3145 = vpop.xlane.xlu0 %3144
          %v3146 = vmul.f32 %v3145, %v564
          %v3147 = vadd.f32 %v3146, 1e-05
          %v3148 = vrsqrt.pop %v3147
          %v3149 = vmul.f32 %v3141, %v3148
          %v3151 = vlaneseq
          %v3152 = vshrl.u32 %v3151, 7
          %v3153 = vsub.s32 0, %v3152
          %v3154 = vrot.slane %v3134, %v3153
          %v3156 = vmul.f32 %v3149, %v3154
          %v3158 = vlaneseq
          %v3159 = vshrl.u32 %v3158, 7
          %v3160 = vsub.s32 0, %v3159
          %v3161 = vrot.slane %v3135, %v3160
          %v3163 = vadd.f32 %v3156, %v3161
          %3164 = vst.msk [vmem:[#allocation3] sm:$0x3] %vm3136, %v3163
        $region76: #{tpu_custom_call.1} parent=67 // pred_fallthru
          _
        // Predicated region
        $region77: #{tpu_custom_call.1} parent=67 // pred_check
          %p3165 = pneg %p329
        $region78: #{tpu_custom_call.1} parent=67 // pred_check_branch
          %3167 = sbr.rel (%p3165) target = $region80
        $region79: #{tpu_custom_call.1} parent=67 // pred_region
          %s3169 = ssub.s32 32, 32
          %3170 = vsyncadd [#allocation4], %s3169
          %s3172 = sshll.u32 [#allocation3], 4
          %s3173 = int_to_ptr.vmem [resolvable:$true] %s3172
          %3175 = dma.vmem_to_hbm [thread:$0]  %s3173, 32, %s12, [#allocation4]
        $region80: #{tpu_custom_call.1} parent=67 // pred_fallthru
          _
        // Predicated region
        $region81: #{tpu_custom_call.1} parent=67 // pred_check
          %p3176 = pneg %p329
        $region82: #{tpu_custom_call.1} parent=67 // pred_check_branch
          %3178 = sbr.rel (%p3176) target = $region84
        $region83: #{tpu_custom_call.1} parent=67 // pred_region
          %3179 = dma.done [#allocation4], 32
        $region84: #{tpu_custom_call.1} parent=67 // pred_fallthru
          _
      $region68: #{tpu_custom_call.1} parent=5 // pred_fallthru
        _
      %p3180 = scmp.le.s32.totalorder 2, %s19
      // Predicated region
      $region85: #{tpu_custom_call.1} parent=5 // pred_check
        %p3181 = pneg %p3180
      $region86: #{tpu_custom_call.1} parent=5 // pred_check_branch
        %3183 = sbr.rel (%p3181) target = $region88
      $region87: #{tpu_custom_call.1} parent=5 // pred_region
        %s3184 = ssub.s32 %s19, 2
      $region88: #{tpu_custom_call.1} parent=5 // pred_fallthru
        _
    $region6: #{tpu_custom_call.1} parent=1 // loop_footer
      %s23 = sadd.s32 1, %s19
    $region7: #{tpu_custom_call.1} parent=1 // loop_footer_branch
      %18 = sbr.rel target = $region3
    $region8: #{tpu_custom_call.1} parent=1 // loop_exit
      _
    %3185 = vsyncpa [#allocation4], 1
    %s3186 = scalar_lea.sflag [#allocation4], 1
    %3187 = vsyncpa %s3186, 1

</llo_original>
